<compile_context>
chip_gen: v5e
topology: v5e:2x2
jax: 0.10.0
libtpu: 0.0.40
codegen_flags: <defaults>
</compile_context>

<pallas_src>
import functools

import jax
import jax.numpy as jnp
from jax.experimental import pallas as pl
from jax.experimental.pallas import tpu as pltpu

IN_DIM = 100
K_PAD = 128          # layer-1 contraction padded to the 128-lane vreg width
H1 = 256
H2 = 512
OUT_DIM = 128 * 32   # 4096
TN = 2048            # layer-3 output block width (streamed along the OUTER grid axis)
N_BLOCKS = OUT_DIM // TN


def _round_up(x, m):
    return ((x + m - 1) // m) * m


def _use_bf16_tanh():
    """bf16 tanh halves EUP work on v6e/v7x; v5e and older have no bf16 EUP/VPU."""
    try:
        kind = jax.devices()[0].device_kind.lower()
    except Exception:
        return False
    if "tpu" not in kind:
        return False
    return not any(g in kind for g in ("v2", "v3", "v4", "v5"))


def _generator_kernel(x_ref, w1_ref, b1_ref, w2_ref, b2_ref, w3_ref, b3_ref,
                      o_ref, *, bf16_tanh):
    # Layers 1+2 are <10% of the FLOPs: recompute them per N block so every grid
    # step is independent (no scratch carry, no pl.when) and both grid axes can be
    # marked "parallel" for v7x megacore sharding.
    h1 = jnp.dot(x_ref[...], w1_ref[...],
                 preferred_element_type=jnp.float32) + b1_ref[...]
    h1 = jnp.maximum(h1, 0.0).astype(jnp.bfloat16)

    h2 = jnp.dot(h1, w2_ref[...],
                 preferred_element_type=jnp.float32) + b2_ref[...]
    h2 = jnp.maximum(h2, 0.0).astype(jnp.bfloat16)

    # Layer 3: (TM, 512) @ (512, TN) block of w3, f32 accumulation, then Tanh.
    h3 = jnp.dot(h2, w3_ref[...],
                 preferred_element_type=jnp.float32) + b3_ref[...]
    if bf16_tanh:
        o_ref[...] = jnp.tanh(h3.astype(jnp.bfloat16)).astype(jnp.float32)
    else:
        o_ref[...] = jnp.tanh(h3)


def init_params(key):
    """Deterministic synthetic f32 parameters, PyTorch nn.Linear-style init.

    Weights are stored as (in_features, out_features) so y = x @ W + b matches
    PyTorch's y = x @ W_pt.T + b. Biases are (1, out) for clean broadcasting.
    """
    k1, k2, k3, k4, k5, k6 = jax.random.split(key, 6)

    def u(k, shape, fan_in):
        bound = 1.0 / jnp.sqrt(fan_in)
        return jax.random.uniform(k, shape, jnp.float32, -bound, bound)

    w1 = u(k1, (IN_DIM, H1), IN_DIM)
    b1 = u(k2, (1, H1), IN_DIM)
    w2 = u(k3, (H1, H2), H1)
    b2 = u(k4, (1, H2), H1)
    w3 = u(k5, (H2, OUT_DIM), H2)
    b3 = u(k6, (1, OUT_DIM), H2)
    return (w1, b1, w2, b2, w3, b3)


def prepare_params(params):
    """One-time prep: zero-pad w1's K dim 100->128 and cast weights to bf16
    (halves HBM weight traffic; bf16 is the MXU-native path). Biases stay f32."""
    w1, b1, w2, b2, w3, b3 = params
    w1p = jnp.pad(w1, ((0, K_PAD - IN_DIM), (0, 0))).astype(jnp.bfloat16)
    return (w1p, b1, w2.astype(jnp.bfloat16), b2, w3.astype(jnp.bfloat16), b3)


def generator_forward(noise, prepared_params, *, bf16_tanh=False):
    """noise: (B, 100) f32 -> (B, 1, 32, 128) f32, matching the PyTorch module."""
    w1p, b1, w2, b2, w3, b3 = prepared_params
    B = noise.shape[0]

    # Batch tile: multiple of 16 (bf16 sublane tile), capped at 256 so the
    # double-buffered f32 output tiles stay small even on v7x's 64 MiB VMEM.
    TM = min(256, _round_up(max(B, 1), 16))
    B_pad = _round_up(B, TM)

    # Zero-pad batch -> B_pad and K 100 -> 128; cast activations to bf16.
    xp = jnp.pad(noise.astype(jnp.bfloat16),
                 ((0, B_pad - B), (0, K_PAD - IN_DIM)))

    kernel = functools.partial(_generator_kernel, bf16_tanh=bf16_tanh)

    # Constant-index operands keep a single VMEM buffer (no dead double buffer).
    resident = pl.Buffered(1)

    # Grid: layer-3 N blocks OUTER (axis 0), batch tiles INNER (axis 1).  The w3/b3
    # block index depends only on n, so it is unchanged across the inner batch loop
    # and Pallas skips the re-fetch -> w3 is streamed from HBM exactly once.
    grid = (N_BLOCKS, B_pad // TM)

    out_flat = pl.pallas_call(
        kernel,
        out_shape=jax.ShapeDtypeStruct((B_pad, OUT_DIM), jnp.float32),
        grid=grid,
        in_specs=[
            pl.BlockSpec((TM, K_PAD), lambda n, i: (i, 0)),                          # noise tile
            pl.BlockSpec((K_PAD, H1), lambda n, i: (0, 0), pipeline_mode=resident),  # w1
            pl.BlockSpec((1, H1),     lambda n, i: (0, 0), pipeline_mode=resident),  # b1
            pl.BlockSpec((H1, H2),    lambda n, i: (0, 0), pipeline_mode=resident),  # w2
            pl.BlockSpec((1, H2),     lambda n, i: (0, 0), pipeline_mode=resident),  # b2
            pl.BlockSpec((H2, TN),    lambda n, i: (0, n)),                          # w3 N block
            pl.BlockSpec((1, TN),     lambda n, i: (0, n)),                          # b3 N block
        ],
        out_specs=pl.BlockSpec((TM, TN), lambda n, i: (i, n)),   # lane-dense output
        compiler_params=pltpu.CompilerParams(
            dimension_semantics=("parallel", "parallel"),
            vmem_limit_bytes=32 * 1024 * 1024,
        ),
    )(xp, w1p, b1, w2, b2, w3, b3)

    # Equivalent of PyTorch's .view(-1, 1, 32, 128) on row-major (B, 4096).
    return out_flat[:B].reshape(B, 1, 32, 128)


def _reference_forward_path(noise, prepared_params, bf16_tanh):
    """Pure-JAX reference following the exact bf16-weight / f32-accum kernel path."""
    w1p, b1, w2, b2, w3, b3 = prepared_params
    B = noise.shape[0]
    xp = jnp.pad(noise.astype(jnp.bfloat16), ((0, 0), (0, K_PAD - IN_DIM)))
    h1 = jnp.maximum(jnp.dot(xp, w1p, preferred_element_type=jnp.float32) + b1,
                     0.0).astype(jnp.bfloat16)
    h2 = jnp.maximum(jnp.dot(h1, w2, preferred_element_type=jnp.float32) + b2,
                     0.0).astype(jnp.bfloat16)
    h3 = jnp.dot(h2, w3, preferred_element_type=jnp.float32) + b3
    if bf16_tanh:
        h3 = jnp.tanh(h3.astype(jnp.bfloat16)).astype(jnp.float32)
    else:
        h3 = jnp.tanh(h3)
    return h3.reshape(B, 1, 32, 128)


def _reference_forward_f32(noise, params):
    """Pure-f32 reference matching the original PyTorch semantics."""
    w1, b1, w2, b2, w3, b3 = params
    h = jnp.maximum(noise @ w1 + b1, 0.0)
    h = jnp.maximum(h @ w2 + b2, 0.0)
    h = jnp.tanh(h @ w3 + b3)
    return h.reshape(-1, 1, 32, 128)


if __name__ == "__main__":
    key = jax.random.PRNGKey(0)
    pkey, nkey = jax.random.split(key)

    params = init_params(pkey)
    prepared = prepare_params(params)   # pad + bf16 cast done once

    B = 8
    noise = jax.random.normal(nkey, (B, IN_DIM), jnp.float32)

    bf16_tanh = _use_bf16_tanh()
    fwd = jax.jit(functools.partial(generator_forward, bf16_tanh=bf16_tanh))
    out = jax.block_until_ready(fwd(noise, prepared))

    assert out.shape == (B, 1, 32, 128), out.shape

    ref_path = _reference_forward_path(noise, prepared, bf16_tanh)
    assert jnp.allclose(out, ref_path, atol=1e-2, rtol=1e-2), float(
        jnp.max(jnp.abs(out - ref_path)))

    ref_f32 = _reference_forward_f32(noise, params)
    assert jnp.allclose(out, ref_f32, atol=5e-2, rtol=5e-2), float(
        jnp.max(jnp.abs(out - ref_f32)))

    print("KERNEL_OK")
</pallas_src>

<mosaic_0001>
module attributes {stable_mosaic.version = 11 : i64} {
  func.func @_generator_kernel(%arg0: i32, %arg1: i32, %arg2: memref<16x128xbf16, #tpu.memory_space<vmem>>, %arg3: memref<128x256xbf16, #tpu.memory_space<vmem>>, %arg4: memref<1x256xf32, #tpu.memory_space<vmem>>, %arg5: memref<256x512xbf16, #tpu.memory_space<vmem>>, %arg6: memref<1x512xf32, #tpu.memory_space<vmem>>, %arg7: memref<512x2048xbf16, #tpu.memory_space<vmem>>, %arg8: memref<1x2048xf32, #tpu.memory_space<vmem>>, %arg9: memref<16x2048xf32, #tpu.memory_space<vmem>>) attributes {dimension_semantics = [#tpu.dimension_semantics<parallel>, #tpu.dimension_semantics<parallel>], iteration_bounds = array<i64: 2, 1>, scalar_prefetch = 0 : i64, scratch_operands = 0 : i64, tpu.core_type = #tpu.core_type<tc>, window_params = [{transform_indices = @transform_0, window_bounds = array<i64: 16, 128>}, {pipeline_mode = #tpu.pipeline_mode<synchronous>, transform_indices = @transform_1, window_bounds = array<i64: 128, 256>}, {pipeline_mode = #tpu.pipeline_mode<synchronous>, transform_indices = @transform_2, window_bounds = array<i64: 1, 256>}, {pipeline_mode = #tpu.pipeline_mode<synchronous>, transform_indices = @transform_3, window_bounds = array<i64: 256, 512>}, {pipeline_mode = #tpu.pipeline_mode<synchronous>, transform_indices = @transform_4, window_bounds = array<i64: 1, 512>}, {transform_indices = @transform_5, window_bounds = array<i64: 512, 2048>}, {transform_indices = @transform_6, window_bounds = array<i64: 1, 2048>}, {transform_indices = @transform_7, window_bounds = array<i64: 16, 2048>}]} {
    %c0 = arith.constant 0 : index
    %c0_0 = arith.constant 0 : index
    %0 = vector.load %arg2[%c0, %c0_0] : memref<16x128xbf16, #tpu.memory_space<vmem>>, vector<16x128xbf16>
    %c0_1 = arith.constant 0 : index
    %c0_2 = arith.constant 0 : index
    %1 = vector.load %arg3[%c0_1, %c0_2] : memref<128x256xbf16, #tpu.memory_space<vmem>>, vector<128x256xbf16>
    %cst = arith.constant dense<0.000000e+00> : vector<16x256xf32>
    %2 = tpu.matmul %0, %1, %cst {dimension_numbers = #tpu.dot_dimension_numbers<[1], [0], [0], [1], [0, 0, 1, 1], [], []>} : vector<16x128xbf16>, vector<128x256xbf16>, vector<16x256xf32> -> vector<16x256xf32>
    %c0_3 = arith.constant 0 : index
    %c0_4 = arith.constant 0 : index
    %3 = vector.load %arg4[%c0_3, %c0_4] : memref<1x256xf32, #tpu.memory_space<vmem>>, vector<1x256xf32>
    %4 = vector.broadcast %3 : vector<1x256xf32> to vector<16x256xf32>
    %5 = arith.addf %2, %4 : vector<16x256xf32>
    %cst_5 = arith.constant 0.000000e+00 : f32
    %6 = vector.broadcast %cst_5 : f32 to vector<16x256xf32>
    %7 = arith.maximumf %5, %6 : vector<16x256xf32>
    %8 = arith.truncf %7 : vector<16x256xf32> to vector<16x256xbf16>
    %c0_6 = arith.constant 0 : index
    %c0_7 = arith.constant 0 : index
    %9 = vector.load %arg5[%c0_6, %c0_7] : memref<256x512xbf16, #tpu.memory_space<vmem>>, vector<256x512xbf16>
    %cst_8 = arith.constant dense<0.000000e+00> : vector<16x512xf32>
    %10 = tpu.matmul %8, %9, %cst_8 {dimension_numbers = #tpu.dot_dimension_numbers<[1], [0], [0], [1], [0, 0, 1, 1], [], []>} : vector<16x256xbf16>, vector<256x512xbf16>, vector<16x512xf32> -> vector<16x512xf32>
    %c0_9 = arith.constant 0 : index
    %c0_10 = arith.constant 0 : index
    %11 = vector.load %arg6[%c0_9, %c0_10] : memref<1x512xf32, #tpu.memory_space<vmem>>, vector<1x512xf32>
    %12 = vector.broadcast %11 : vector<1x512xf32> to vector<16x512xf32>
    %13 = arith.addf %10, %12 : vector<16x512xf32>
    %cst_11 = arith.constant 0.000000e+00 : f32
    %14 = vector.broadcast %cst_11 : f32 to vector<16x512xf32>
    %15 = arith.maximumf %13, %14 : vector<16x512xf32>
    %16 = arith.truncf %15 : vector<16x512xf32> to vector<16x512xbf16>
    %c0_12 = arith.constant 0 : index
    %c0_13 = arith.constant 0 : index
    %17 = vector.load %arg7[%c0_12, %c0_13] : memref<512x2048xbf16, #tpu.memory_space<vmem>>, vector<512x2048xbf16>
    %cst_14 = arith.constant dense<0.000000e+00> : vector<16x2048xf32>
    %18 = tpu.matmul %16, %17, %cst_14 {dimension_numbers = #tpu.dot_dimension_numbers<[1], [0], [0], [1], [0, 0, 1, 1], [], []>} : vector<16x512xbf16>, vector<512x2048xbf16>, vector<16x2048xf32> -> vector<16x2048xf32>
    %c0_15 = arith.constant 0 : index
    %c0_16 = arith.constant 0 : index
    %19 = vector.load %arg8[%c0_15, %c0_16] : memref<1x2048xf32, #tpu.memory_space<vmem>>, vector<1x2048xf32>
    %20 = vector.broadcast %19 : vector<1x2048xf32> to vector<16x2048xf32>
    %21 = arith.addf %18, %20 : vector<16x2048xf32>
    %22 = math.tanh %21 : vector<16x2048xf32>
    %c0_17 = arith.constant 0 : index
    %c0_18 = arith.constant 0 : index
    %23 = vector.load %arg9[%c0_17, %c0_18] : memref<16x2048xf32, #tpu.memory_space<vmem>>, vector<16x2048xf32>
    tpu.vector_store %arg9[%c0_17, %c0_18], %22 {strides = array<i32>} : memref<16x2048xf32, #tpu.memory_space<vmem>>, vector<16x2048xf32>,
    return
  }
  func.func @transform_0(%arg0: i32, %arg1: i32) -> (i32, i32) {
    %c0_i32 = arith.constant 0 : i32
    %c0_i32_0 = arith.constant 0 : i32
    return %arg1, %c0_i32 : i32, i32
  }
  func.func @transform_1(%arg0: i32, %arg1: i32) -> (i32, i32) {
    %c0_i32 = arith.constant 0 : i32
    %c0_i32_0 = arith.constant 0 : i32
    %c0_i32_1 = arith.constant 0 : i32
    return %c0_i32, %c0_i32_0 : i32, i32
  }
  func.func @transform_2(%arg0: i32, %arg1: i32) -> (i32, i32) {
    %c0_i32 = arith.constant 0 : i32
    %c0_i32_0 = arith.constant 0 : i32
    %c0_i32_1 = arith.constant 0 : i32
    return %c0_i32, %c0_i32_0 : i32, i32
  }
  func.func @transform_3(%arg0: i32, %arg1: i32) -> (i32, i32) {
    %c0_i32 = arith.constant 0 : i32
    %c0_i32_0 = arith.constant 0 : i32
    %c0_i32_1 = arith.constant 0 : i32
    return %c0_i32, %c0_i32_0 : i32, i32
  }
  func.func @transform_4(%arg0: i32, %arg1: i32) -> (i32, i32) {
    %c0_i32 = arith.constant 0 : i32
    %c0_i32_0 = arith.constant 0 : i32
    %c0_i32_1 = arith.constant 0 : i32
    return %c0_i32, %c0_i32_0 : i32, i32
  }
  func.func @transform_5(%arg0: i32, %arg1: i32) -> (i32, i32) {
    %c0_i32 = arith.constant 0 : i32
    %c0_i32_0 = arith.constant 0 : i32
    return %c0_i32, %arg0 : i32, i32
  }
  func.func @transform_6(%arg0: i32, %arg1: i32) -> (i32, i32) {
    %c0_i32 = arith.constant 0 : i32
    %c0_i32_0 = arith.constant 0 : i32
    return %c0_i32, %arg0 : i32, i32
  }
  func.func @transform_7(%arg0: i32, %arg1: i32) -> (i32, i32) {
    %c0_i32 = arith.constant 0 : i32
    return %arg1, %arg0 : i32, i32
  }
}

</mosaic_0001>

<llo_original>
// kernel: generator_forward.1
$region0: #{generator_forward.1}
  #allocation0 [shape = 'u32[]', space=smem, size = 0x4, offset = 0x4, fixed_abs, tag = 'smem constant byte address 0x4 - core index']
  #allocation1 [shape = 'u32[72,128]{1,0:T(1,128)}', space=vmem, size = 0x9000, scoped, tag = 'internal scratch']
  %s0 = inlined_call_operand.vmem [shape: bf16[16,128], index: 0, kind: input, shape index: {}]
  %s1 = inlined_call_operand.hbm [shape: bf16[128,256], index: 1, kind: input, shape index: {}]
  %s2 = inlined_call_operand.hbm [shape: f32[1,256], index: 2, kind: input, shape index: {}]
  %s3 = inlined_call_operand.hbm [shape: bf16[256,512], index: 3, kind: input, shape index: {}]
  %s4 = inlined_call_operand.hbm [shape: f32[1,512], index: 4, kind: input, shape index: {}]
  %s5 = inlined_call_operand.hbm [shape: bf16[512,4096], index: 5, kind: input, shape index: {}]
  %s6 = inlined_call_operand.hbm [shape: f32[1,4096], index: 6, kind: input, shape index: {}]
  %s7 = inlined_call_operand.vmem [shape: f32[16,4096], index: 7, kind: output, shape index: {}]
  %s8 = sld [smem:[#allocation0]]
  $region104: #{generator_forward.1} parent=0
    _
  %s10 = ssub.s32 1, %s8
  %s11 = scalar_select 0, %s10, %s8
  $region1: #{generator_forward.1} parent=0
    #allocation2 [shape = 'u8[65536]{0}', space=vmem, size = 0x10000, scoped, tag = 'input window, operand 1, single buffered']
    #allocation3 [shape = 's32[2]{0}', space=sflag, size = 0x8, scoped, tag = 'scoped memory for generator_forward.1']
    #allocation4 [shape = 'u8[1024]{0}', space=vmem, size = 0x400, scoped, tag = 'input window, operand 2, single buffered']
    #allocation5 [shape = 's32[1]{0}', space=sflag, size = 0x4, scoped, tag = 'scoped memory for generator_forward.1']
    #allocation6 [shape = 'u8[262144]{0}', space=vmem, size = 0x40000, scoped, tag = 'input window, operand 3, single buffered']
    #allocation7 [shape = 'u8[2048]{0}', space=vmem, size = 0x800, scoped, tag = 'input window, operand 4, single buffered']
    #allocation8 [shape = 's32[1]{0}', space=sflag, size = 0x4, scoped, tag = 'scoped memory for generator_forward.1']
    #allocation9 [shape = 'u8[4194304]{0}', space=vmem, size = 0x400000, scoped, tag = 'input window, operand 5']
    #allocation10 [shape = 'u8[16384]{0}', space=vmem, size = 0x4000, scoped, tag = 'input window, operand 6']
    #allocation11 [shape = 'u8[262144]{0}', space=vmem, size = 0x40000, scoped, tag = 'output window, operand 0']
    %12 = vsyncpa [#allocation3], 0
    %13 = vsyncpa [#allocation5], 0
    %14 = vsyncpa [#allocation8], 0
    loop: start=0, step=1, limit=4
    $region2: #{generator_forward.1} parent=1 // loop_pre_header
      _
    $region3: #{generator_forward.1} parent=1 // loop_header
      %s16 = sphi 0, %s20
      %p17 = scmp.ge.s32.totalorder %s16, 4
      %s23 = sphi 0, %s35
      %s24 = sphi 0, %s31
      %s25 = sphi 0, %s23
      %s26 = sphi 0, %s24
      %s27 = sphi 0, %s25
      %s28 = sphi 0, %s26
      %s38 = sphi 0, %s40
      %s41 = sphi 0, %s38
      %s42 = sphi 0, %s41
      %s58 = sphi 0, %s42
      %s62 = sphi 0, %s62
      %s64 = sphi 0, %s62
      %s65 = sphi 0, %s64
      %s79 = sphi 0, %s65
      %s83 = sphi 0, %s83
      %s85 = sphi 0, %s83
      %s86 = sphi 0, %s85
      %s100 = sphi 0, %s86
      %s104 = sphi 0, %s104
      %s106 = sphi 0, %s104
      %s107 = sphi 0, %s106
      %s121 = sphi 0, %s107
      %s125 = sphi 0, %s125
      %s127 = sphi 0, %s125
      %s128 = sphi 0, %s127
      %s142 = sphi 0, %s128
      %s148 = sphi 0, %s150
      %s151 = sphi 0, %s148
      %s152 = sphi 0, %s151
      %s168 = sphi 0, %s152
      %s174 = sphi 0, %s176
      %s177 = sphi 0, %s174
      %s178 = sphi 0, %s177
      %s194 = sphi 0, %s178
      %s202 = sphi 0, %s204
      %s205 = sphi 0, %s202
      %s206 = sphi 0, %s205
      %s222 = sphi 0, %s206
    $region4: #{generator_forward.1} parent=1 // loop_header_branch
      %19 = sbr.rel (%p17) target = $region8
    $region5: #{generator_forward.1} parent=1 // loop_body
      %s21 = ssub.s32 %s16, 1
      %s22 = ssub.s32 %s16, 2
      %s29 = sadd.s32 1, %s24
      %p30 = scmp.ge.s32.totalorder %s29, 1
      %s31 = scalar_select %p30, 0, %s29
      %s32 = sadd.s32 1, %s23
      %s33 = scalar_select %p30, %s32, %s23
      %p34 = scmp.ge.s32.totalorder %s33, 2
      %s35 = scalar_select %p34, 0, %s33
      %s36 = ssub.s32 %s24, %s31
      %p37 = scmp.eq.s32.totalorder %s36, 0
      %s39 = sadd.s32 %s38, 1
      %s40 = scalar_select %p37, %s38, %s39
      %p43 = pneg %p37
      %p44 = scmp.eq.s32.totalorder %s16, 1
      %p45 = por %p43, %p44
      %p46 = scmp.ne.s32.totalorder %s38, %s41
      %p47 = scmp.eq.s32.totalorder %s16, 0
      %p48 = por %p46, %p47
      %p49 = scmp.ne.s32.totalorder %s38, %s41
      %p50 = scmp.eq.s32.totalorder %s21, 1
      %p51 = por %p49, %p50
      %p52 = scmp.ne.s32.totalorder %s41, %s42
      %p53 = scmp.eq.s32.totalorder %s21, 0
      %p54 = por %p52, %p53
      %p55 = scmp.ne.s32.totalorder %s41, %s42
      %p56 = scmp.eq.s32.totalorder %s22, 1
      %p57 = por %p55, %p56
      %p59 = scmp.ne.s32.totalorder %s42, %s58
      %p60 = scmp.eq.s32.totalorder %s22, 0
      %p61 = por %p59, %p60
      %s63 = sadd.s32 %s62, 1
      %p66 = scmp.eq.s32.totalorder %s16, 1
      %p67 = scmp.ne.s32.totalorder %s62, %s64
      %p68 = scmp.eq.s32.totalorder %s16, 0
      %p69 = por %p67, %p68
      %p70 = scmp.ne.s32.totalorder %s62, %s64
      %p71 = scmp.eq.s32.totalorder %s21, 1
      %p72 = por %p70, %p71
      %p73 = scmp.ne.s32.totalorder %s64, %s65
      %p74 = scmp.eq.s32.totalorder %s21, 0
      %p75 = por %p73, %p74
      %p76 = scmp.ne.s32.totalorder %s64, %s65
      %p77 = scmp.eq.s32.totalorder %s22, 1
      %p78 = por %p76, %p77
      %p80 = scmp.ne.s32.totalorder %s65, %s79
      %p81 = scmp.eq.s32.totalorder %s22, 0
      %p82 = por %p80, %p81
      %s84 = sadd.s32 %s83, 1
      %p87 = scmp.eq.s32.totalorder %s16, 1
      %p88 = scmp.ne.s32.totalorder %s83, %s85
      %p89 = scmp.eq.s32.totalorder %s16, 0
      %p90 = por %p88, %p89
      %p91 = scmp.ne.s32.totalorder %s83, %s85
      %p92 = scmp.eq.s32.totalorder %s21, 1
      %p93 = por %p91, %p92
      %p94 = scmp.ne.s32.totalorder %s85, %s86
      %p95 = scmp.eq.s32.totalorder %s21, 0
      %p96 = por %p94, %p95
      %p97 = scmp.ne.s32.totalorder %s85, %s86
      %p98 = scmp.eq.s32.totalorder %s22, 1
      %p99 = por %p97, %p98
      %p101 = scmp.ne.s32.totalorder %s86, %s100
      %p102 = scmp.eq.s32.totalorder %s22, 0
      %p103 = por %p101, %p102
      %s105 = sadd.s32 %s104, 1
      %p108 = scmp.eq.s32.totalorder %s16, 1
      %p109 = scmp.ne.s32.totalorder %s104, %s106
      %p110 = scmp.eq.s32.totalorder %s16, 0
      %p111 = por %p109, %p110
      %p112 = scmp.ne.s32.totalorder %s104, %s106
      %p113 = scmp.eq.s32.totalorder %s21, 1
      %p114 = por %p112, %p113
      %p115 = scmp.ne.s32.totalorder %s106, %s107
      %p116 = scmp.eq.s32.totalorder %s21, 0
      %p117 = por %p115, %p116
      %p118 = scmp.ne.s32.totalorder %s106, %s107
      %p119 = scmp.eq.s32.totalorder %s22, 1
      %p120 = por %p118, %p119
      %p122 = scmp.ne.s32.totalorder %s107, %s121
      %p123 = scmp.eq.s32.totalorder %s22, 0
      %p124 = por %p122, %p123
      %s126 = sadd.s32 %s125, 1
      %p129 = scmp.eq.s32.totalorder %s16, 1
      %p130 = scmp.ne.s32.totalorder %s125, %s127
      %p131 = scmp.eq.s32.totalorder %s16, 0
      %p132 = por %p130, %p131
      %p133 = scmp.ne.s32.totalorder %s125, %s127
      %p134 = scmp.eq.s32.totalorder %s21, 1
      %p135 = por %p133, %p134
      %p136 = scmp.ne.s32.totalorder %s127, %s128
      %p137 = scmp.eq.s32.totalorder %s21, 0
      %p138 = por %p136, %p137
      %p139 = scmp.ne.s32.totalorder %s127, %s128
      %p140 = scmp.eq.s32.totalorder %s22, 1
      %p141 = por %p139, %p140
      %p143 = scmp.ne.s32.totalorder %s128, %s142
      %p144 = scmp.eq.s32.totalorder %s22, 0
      %p145 = por %p143, %p144
      %s146 = ssub.s32 %s23, %s35
      %p147 = scmp.eq.s32.totalorder %s146, 0
      %s149 = sadd.s32 %s148, 1
      %s150 = scalar_select %p147, %s148, %s149
      %p153 = pneg %p147
      %p154 = scmp.eq.s32.totalorder %s16, 1
      %p155 = por %p153, %p154
      %p156 = scmp.ne.s32.totalorder %s148, %s151
      %p157 = scmp.eq.s32.totalorder %s16, 0
      %p158 = por %p156, %p157
      %p159 = scmp.ne.s32.totalorder %s148, %s151
      %p160 = scmp.eq.s32.totalorder %s21, 1
      %p161 = por %p159, %p160
      %p162 = scmp.ne.s32.totalorder %s151, %s152
      %p163 = scmp.eq.s32.totalorder %s21, 0
      %p164 = por %p162, %p163
      %p165 = scmp.ne.s32.totalorder %s151, %s152
      %p166 = scmp.eq.s32.totalorder %s22, 1
      %p167 = por %p165, %p166
      %p169 = scmp.ne.s32.totalorder %s152, %s168
      %p170 = scmp.eq.s32.totalorder %s22, 0
      %p171 = por %p169, %p170
      %s172 = ssub.s32 %s23, %s35
      %p173 = scmp.eq.s32.totalorder %s172, 0
      %s175 = sadd.s32 %s174, 1
      %s176 = scalar_select %p173, %s174, %s175
      %p179 = pneg %p173
      %p180 = scmp.eq.s32.totalorder %s16, 1
      %p181 = por %p179, %p180
      %p182 = scmp.ne.s32.totalorder %s174, %s177
      %p183 = scmp.eq.s32.totalorder %s16, 0
      %p184 = por %p182, %p183
      %p185 = scmp.ne.s32.totalorder %s174, %s177
      %p186 = scmp.eq.s32.totalorder %s21, 1
      %p187 = por %p185, %p186
      %p188 = scmp.ne.s32.totalorder %s177, %s178
      %p189 = scmp.eq.s32.totalorder %s21, 0
      %p190 = por %p188, %p189
      %p191 = scmp.ne.s32.totalorder %s177, %s178
      %p192 = scmp.eq.s32.totalorder %s22, 1
      %p193 = por %p191, %p192
      %p195 = scmp.ne.s32.totalorder %s178, %s194
      %p196 = scmp.eq.s32.totalorder %s22, 0
      %p197 = por %p195, %p196
      %s198 = ssub.s32 %s24, %s31
      %s199 = ssub.s32 %s23, %s35
      %s200 = sor.u32 %s198, %s199
      %p201 = scmp.eq.s32.totalorder %s200, 0
      %s203 = sadd.s32 %s202, 1
      %s204 = scalar_select %p201, %s202, %s203
      %p207 = pneg %p201
      %p208 = scmp.eq.s32.totalorder %s16, 1
      %p209 = por %p207, %p208
      %p210 = scmp.ne.s32.totalorder %s202, %s205
      %p211 = scmp.eq.s32.totalorder %s16, 0
      %p212 = por %p210, %p211
      %p213 = scmp.ne.s32.totalorder %s202, %s205
      %p214 = scmp.eq.s32.totalorder %s21, 1
      %p215 = por %p213, %p214
      %p216 = scmp.ne.s32.totalorder %s205, %s206
      %p217 = scmp.eq.s32.totalorder %s21, 0
      %p218 = por %p216, %p217
      %p219 = scmp.ne.s32.totalorder %s205, %s206
      %p220 = scmp.eq.s32.totalorder %s22, 1
      %p221 = por %p219, %p220
      %p223 = scmp.ne.s32.totalorder %s206, %s222
      %p224 = scmp.eq.s32.totalorder %s22, 0
      %p225 = por %p223, %p224
      %p226 = scmp.le.s32.totalorder 1, %s16
      %p227 = scmp.lt.s32.totalorder %s16, 3
      %p228 = pnand %p226, %p227
      %p229 = pneg %p228
      // Predicated region
      $region9: #{generator_forward.1} parent=5 // pred_check
        _
      $region10: #{generator_forward.1} parent=5 // pred_check_branch
        %231 = sbr.rel (%p228) target = $region12
      $region11: #{generator_forward.1} parent=5 // pred_region
        %s232 = ssub.s32 %s16, 1
        // Predicated region
        $region13: #{generator_forward.1} parent=11 // pred_check
          %p233 = pneg %p54
        $region14: #{generator_forward.1} parent=11 // pred_check_branch
          %235 = sbr.rel (%p233) target = $region16
        $region15: #{generator_forward.1} parent=11 // pred_region
          %s236 = smul.u32 2, %s26
          %p237 = scmp.lt.s32.totalorder %s236, 1
          %s238 = scalar_select %p237, %s236, 1
          %s239 = smul.addr %s238, 4
          %s240 = scalar_lea.vmem %s0, %s239
          %s241 = smul.u32 2, %s26
        $region16: #{generator_forward.1} parent=11 // pred_fallthru
          _
        // Predicated region
        $region17: #{generator_forward.1} parent=11 // pred_check
          %p242 = pneg %p75
        $region18: #{generator_forward.1} parent=11 // pred_check_branch
          %244 = sbr.rel (%p242) target = $region20
        $region19: #{generator_forward.1} parent=11 // pred_region
          %246 = vsyncadd [#allocation3], 0
          %s247 = sshll.u32 %s1, 4
          %s248 = int_to_ptr.hbm [resolvable:$true] %s247
          %s249 = sshll.u32 [#allocation2], 4
          %s250 = int_to_ptr.vmem [resolvable:$true] %s249
          %255 = dma.hbm_to_vmem [thread:$0]  %s248, 2048, %s250, [#allocation3], 128, 128, 8
        $region20: #{generator_forward.1} parent=11 // pred_fallthru
          _
        // Predicated region
        $region21: #{generator_forward.1} parent=11 // pred_check
          %p256 = pneg %p96
        $region22: #{generator_forward.1} parent=11 // pred_check_branch
          %258 = sbr.rel (%p256) target = $region24
        $region23: #{generator_forward.1} parent=11 // pred_region
          %260 = vsyncadd [#allocation5], 0
          %s262 = sshll.u32 %s2, 4
          %s263 = int_to_ptr.hbm [resolvable:$true] %s262
          %s264 = sshll.u32 [#allocation4], 4
          %s265 = int_to_ptr.vmem [resolvable:$true] %s264
          %267 = dma.hbm_to_vmem [thread:$0]  %s263, 32, %s265, [#allocation5]
        $region24: #{generator_forward.1} parent=11 // pred_fallthru
          _
        // Predicated region
        $region25: #{generator_forward.1} parent=11 // pred_check
          %p268 = pneg %p117
        $region26: #{generator_forward.1} parent=11 // pred_check_branch
          %270 = sbr.rel (%p268) target = $region28
        $region27: #{generator_forward.1} parent=11 // pred_region
          %272 = vsyncadd [#allocation5], 0
          %s273 = sshll.u32 %s3, 4
          %s274 = int_to_ptr.hbm [resolvable:$true] %s273
          %s275 = sshll.u32 [#allocation6], 4
          %s276 = int_to_ptr.vmem [resolvable:$true] %s275
          %281 = dma.hbm_to_vmem [thread:$0]  %s274, 8192, %s276, [#allocation5], 256, 256, 16
        $region28: #{generator_forward.1} parent=11 // pred_fallthru
          _
        // Predicated region
        $region29: #{generator_forward.1} parent=11 // pred_check
          %p282 = pneg %p138
        $region30: #{generator_forward.1} parent=11 // pred_check_branch
          %284 = sbr.rel (%p282) target = $region32
        $region31: #{generator_forward.1} parent=11 // pred_region
          %286 = vsyncadd [#allocation8], 0
          %s288 = sshll.u32 %s4, 4
          %s289 = int_to_ptr.hbm [resolvable:$true] %s288
          %s290 = sshll.u32 [#allocation7], 4
          %s291 = int_to_ptr.vmem [resolvable:$true] %s290
          %293 = dma.hbm_to_vmem [thread:$0]  %s289, 64, %s291, [#allocation8]
        $region32: #{generator_forward.1} parent=11 // pred_fallthru
          _
      $region12: #{generator_forward.1} parent=5 // pred_fallthru
        _
      %p294 = scmp.lt.s32.totalorder %s16, 2
      // Predicated region
      $region33: #{generator_forward.1} parent=5 // pred_check
        %p295 = pneg %p294
      $region34: #{generator_forward.1} parent=5 // pred_check_branch
        %297 = sbr.rel (%p295) target = $region36
      $region35: #{generator_forward.1} parent=5 // pred_region
        // Predicated region
        $region37: #{generator_forward.1} parent=35 // pred_check
          %p298 = pneg %p158
        $region38: #{generator_forward.1} parent=35 // pred_check_branch
          %300 = sbr.rel (%p298) target = $region40
        $region39: #{generator_forward.1} parent=35 // pred_region
          %s301 = sand.u32 %s16, 1
          %s302 = scalar_lea.sflag [#allocation3], %s301
          %s303 = sand.u32 %s148, 1
          %s304 = smul.addr %s303, 4096
          %s305 = scalar_lea.vmem [#allocation9], %s304
          %s306 = smul.u32 16, %s23
          %308 = vsyncadd %s302, 0
          %s309 = smul.addr %s306, 4
          %s310 = scalar_lea.hbm %s5, %s309
          %s311 = sshll.u32 %s310, 4
          %s312 = int_to_ptr.hbm [resolvable:$true] %s311
          %s313 = sshll.u32 %s305, 4
          %s314 = int_to_ptr.vmem [resolvable:$true] %s313
          %319 = dma.hbm_to_vmem [thread:$0]  %s312, 65536, %s314, %s302, 2048, 1024, 64
        $region40: #{generator_forward.1} parent=35 // pred_fallthru
          _
        // Predicated region
        $region41: #{generator_forward.1} parent=35 // pred_check
          %p320 = pneg %p184
        $region42: #{generator_forward.1} parent=35 // pred_check_branch
          %322 = sbr.rel (%p320) target = $region44
        $region43: #{generator_forward.1} parent=35 // pred_region
          %s323 = sand.u32 %s16, 1
          %s324 = scalar_lea.sflag [#allocation3], %s323
          %s325 = sand.u32 %s174, 1
          %s326 = smul.addr %s325, 16
          %s327 = scalar_lea.vmem [#allocation10], %s326
          %s328 = smul.u32 16, %s23
          %330 = vsyncadd %s324, 0
          %s331 = scalar_lea.hbm %s6, %s328
          %s333 = sshll.u32 %s331, 4
          %s334 = int_to_ptr.hbm [resolvable:$true] %s333
          %s335 = sshll.u32 %s327, 4
          %s336 = int_to_ptr.vmem [resolvable:$true] %s335
          %338 = dma.hbm_to_vmem [thread:$0]  %s334, 256, %s336, %s324
        $region44: #{generator_forward.1} parent=35 // pred_fallthru
          _
      $region36: #{generator_forward.1} parent=5 // pred_fallthru
        _
      %p339 = scmp.le.s32.totalorder 1, %s16
      %p340 = scmp.lt.s32.totalorder %s16, 3
      %p341 = pnand %p339, %p340
      %p342 = pneg %p341
      // Predicated region
      $region45: #{generator_forward.1} parent=5 // pred_check
        _
      $region46: #{generator_forward.1} parent=5 // pred_check_branch
        %344 = sbr.rel (%p341) target = $region48
      $region47: #{generator_forward.1} parent=5 // pred_region
        %s345 = ssub.s32 %s16, 1
        // Predicated region
        $region49: #{generator_forward.1} parent=47 // pred_check
          %p346 = pneg %p75
        $region50: #{generator_forward.1} parent=47 // pred_check_branch
          %348 = sbr.rel (%p346) target = $region52
        $region51: #{generator_forward.1} parent=47 // pred_region
          %350 = dma.done [#allocation3], 2048
        $region52: #{generator_forward.1} parent=47 // pred_fallthru
          _
        // Predicated region
        $region53: #{generator_forward.1} parent=47 // pred_check
          %p351 = pneg %p96
        $region54: #{generator_forward.1} parent=47 // pred_check_branch
          %353 = sbr.rel (%p351) target = $region56
        $region55: #{generator_forward.1} parent=47 // pred_region
          %355 = dma.done [#allocation5], 32
        $region56: #{generator_forward.1} parent=47 // pred_fallthru
          _
        // Predicated region
        $region57: #{generator_forward.1} parent=47 // pred_check
          %p356 = pneg %p117
        $region58: #{generator_forward.1} parent=47 // pred_check_branch
          %358 = sbr.rel (%p356) target = $region60
        $region59: #{generator_forward.1} parent=47 // pred_region
          %360 = dma.done [#allocation5], 8192
        $region60: #{generator_forward.1} parent=47 // pred_fallthru
          _
        // Predicated region
        $region61: #{generator_forward.1} parent=47 // pred_check
          %p361 = pneg %p138
        $region62: #{generator_forward.1} parent=47 // pred_check_branch
          %363 = sbr.rel (%p361) target = $region64
        $region63: #{generator_forward.1} parent=47 // pred_region
          %365 = dma.done [#allocation8], 64
        $region64: #{generator_forward.1} parent=47 // pred_fallthru
          _
        %s366 = sand.u32 %s21, 1
        %s367 = scalar_lea.sflag [#allocation3], %s366
        %s368 = sand.u32 %s151, 1
        %s369 = smul.addr %s368, 4096
        %s370 = scalar_lea.vmem [#allocation9], %s369
        // Predicated region
        $region65: #{generator_forward.1} parent=47 // pred_check
          %p371 = pneg %p164
        $region66: #{generator_forward.1} parent=47 // pred_check_branch
          %373 = sbr.rel (%p371) target = $region68
        $region67: #{generator_forward.1} parent=47 // pred_region
          %375 = dma.done %s367, 65536
        $region68: #{generator_forward.1} parent=47 // pred_fallthru
          _
        %s376 = sand.u32 %s21, 1
        %s377 = scalar_lea.sflag [#allocation3], %s376
        %s378 = sand.u32 %s177, 1
        %s379 = smul.addr %s378, 16
        %s380 = scalar_lea.vmem [#allocation10], %s379
        // Predicated region
        $region69: #{generator_forward.1} parent=47 // pred_check
          %p381 = pneg %p190
        $region70: #{generator_forward.1} parent=47 // pred_check_branch
          %383 = sbr.rel (%p381) target = $region72
        $region71: #{generator_forward.1} parent=47 // pred_region
          %385 = dma.done %s377, 256
        $region72: #{generator_forward.1} parent=47 // pred_fallthru
          _
        %s386 = smul.u32 2, %s26
        %p387 = scmp.lt.s32.totalorder %s386, 1
        %s388 = scalar_select %p387, %s386, 1
        %s389 = smul.addr %s388, 4
        %s390 = scalar_lea.vmem %s0, %s389
        %p391 = pneg %p54
        %p392 = pneg %p51
        %p393 = pneg %p75
        %p394 = pneg %p72
        %p395 = pneg %p96
        %p396 = pneg %p93
        %p397 = pneg %p117
        %p398 = pneg %p114
        %p399 = pneg %p138
        %p400 = pneg %p135
        %s401 = sand.u32 %s21, 1
        %s402 = scalar_lea.sflag [#allocation3], %s401
        %s403 = sand.u32 %s151, 1
        %s404 = smul.addr %s403, 4096
        %s405 = scalar_lea.vmem [#allocation9], %s404
        %p406 = pneg %p164
        %p407 = pneg %p161
        %s408 = sand.u32 %s21, 1
        %s409 = scalar_lea.sflag [#allocation3], %s408
        %s410 = sand.u32 %s177, 1
        %s411 = smul.addr %s410, 16
        %s412 = scalar_lea.vmem [#allocation10], %s411
        %p413 = pneg %p190
        %p414 = pneg %p187
        %p415 = pneg %p218
        %p416 = pneg %p215
        %s417 = sand.u32 %s205, 1
        %s418 = sand.u32 %s205, 1
        %s419 = smul.addr %s418, 256
        %s420 = scalar_lea.vmem [#allocation11], %s419
        %s421 = smul.u32 2, %s26
        %p422 = scmp.lt.s32.totalorder %s421, 1
        %s423 = scalar_select %p422, %s421, 1
        %s424 = smul.addr %s423, 4
        %s425 = scalar_lea.vmem %s0, %s424
        %s426 = smul.u32 2, %s26
        %s427 = smul.u32 16, %s25
        %s428 = smul.u32 16, %s25
        %s429 = smul.u32 2, %s26
        %s430 = smul.u32 16, %s25
        %v431 = vld [vmem:[%s425] sm:$0xf]
        %v432 = vld [vmem:[%s425 + $0x4] sm:$0xf]
        %v433 = vld [vmem:[#allocation2] sm:$0xff]
        %v434 = vld [vmem:[#allocation2 + $0x8] sm:$0xff]
        %v435 = vld [vmem:[#allocation2 + $0x10] sm:$0xff]
        %v436 = vld [vmem:[#allocation2 + $0x18] sm:$0xff]
        %v437 = vld [vmem:[#allocation2 + $0x20] sm:$0xff]
        %v438 = vld [vmem:[#allocation2 + $0x28] sm:$0xff]
        %v439 = vld [vmem:[#allocation2 + $0x30] sm:$0xff]
        %v440 = vld [vmem:[#allocation2 + $0x38] sm:$0xff]
        %v441 = vld [vmem:[#allocation2 + $0x40] sm:$0xff]
        %v442 = vld [vmem:[#allocation2 + $0x48] sm:$0xff]
        %v443 = vld [vmem:[#allocation2 + $0x50] sm:$0xff]
        %v444 = vld [vmem:[#allocation2 + $0x58] sm:$0xff]
        %v445 = vld [vmem:[#allocation2 + $0x60] sm:$0xff]
        %v446 = vld [vmem:[#allocation2 + $0x68] sm:$0xff]
        %v447 = vld [vmem:[#allocation2 + $0x70] sm:$0xff]
        %v448 = vld [vmem:[#allocation2 + $0x78] sm:$0xff]
        %v449 = vld [vmem:[#allocation4] sm:$0x3]
        %v451 = vperm.slane %v449, 0
        %v452 = vperm.slane %v449, 1
        %v457 = vunpack.c.l.b16 %v431
        %v458 = vunpack.c.l.b16 %v432
        %v459 = vpack.c.b16 %v458, %v457
        %v477 = vunpack.c.l.b16 %v433
        %v478 = vunpack.c.h.b16 %v433
        %v479 = vunpack.c.l.b16 %v434
        %v480 = vunpack.c.h.b16 %v434
        %v481 = vunpack.c.l.b16 %v435
        %v482 = vunpack.c.h.b16 %v435
        %v483 = vunpack.c.l.b16 %v436
        %v484 = vunpack.c.h.b16 %v436
        %v485 = vunpack.c.l.b16 %v437
        %v486 = vunpack.c.h.b16 %v437
        %v487 = vunpack.c.l.b16 %v438
        %v488 = vunpack.c.h.b16 %v438
        %v489 = vunpack.c.l.b16 %v439
        %v490 = vunpack.c.h.b16 %v439
        %v491 = vunpack.c.l.b16 %v440
        %v492 = vunpack.c.h.b16 %v440
        %v493 = vunpack.c.l.b16 %v441
        %v494 = vunpack.c.h.b16 %v441
        %v495 = vunpack.c.l.b16 %v442
        %v496 = vunpack.c.h.b16 %v442
        %v497 = vunpack.c.l.b16 %v443
        %v498 = vunpack.c.h.b16 %v443
        %v499 = vunpack.c.l.b16 %v444
        %v500 = vunpack.c.h.b16 %v444
        %v501 = vunpack.c.l.b16 %v445
        %v502 = vunpack.c.h.b16 %v445
        %v503 = vunpack.c.l.b16 %v446
        %v504 = vunpack.c.h.b16 %v446
        %v505 = vunpack.c.l.b16 %v447
        %v506 = vunpack.c.h.b16 %v447
        %v507 = vunpack.c.l.b16 %v448
        %v508 = vunpack.c.h.b16 %v448
        %v509 = vpack.c.b16 %v479, %v477
        %v510 = vpack.c.b16 %v480, %v478
        %v511 = vpack.c.b16 %v483, %v481
        %v512 = vpack.c.b16 %v484, %v482
        %v513 = vpack.c.b16 %v487, %v485
        %v514 = vpack.c.b16 %v488, %v486
        %v515 = vpack.c.b16 %v491, %v489
        %v516 = vpack.c.b16 %v492, %v490
        %v517 = vpack.c.b16 %v495, %v493
        %v518 = vpack.c.b16 %v496, %v494
        %v519 = vpack.c.b16 %v499, %v497
        %v520 = vpack.c.b16 %v500, %v498
        %v521 = vpack.c.b16 %v503, %v501
        %v522 = vpack.c.b16 %v504, %v502
        %v523 = vpack.c.b16 %v507, %v505
        %v524 = vpack.c.b16 %v508, %v506
        %541 = vmatpush.bf16.msra.mxu0 %v523
        %542 = vmatpush.bf16.msra.mxu0 %v521
        %543 = vmatpush.bf16.msra.mxu0 %v519
        %544 = vmatpush.bf16.msra.mxu0 %v517
        %545 = vmatpush.bf16.msra.mxu0 %v515
        %546 = vmatpush.bf16.msra.mxu0 %v513
        %547 = vmatpush.bf16.msra.mxu0 %v511
        %548 = vmatpush.bf16.msra.mxu0 %v509
        %549 = vmatmul.bf16.gmra.mxu0 %v459
        %v550 = vpop.f32.mrf.mxu0
        %v551 = vadd.f32 %v451, %v550
        %v552 = vpop.f32.mrf.mxu0
        %v553 = vadd.f32 %v451, %v552
        %554 = vdwg.mxu0
        %555 = vmatpush.bf16.msra.mxu0 %v524
        %556 = vmatpush.bf16.msra.mxu0 %v522
        %557 = vmatpush.bf16.msra.mxu0 %v520
        %558 = vmatpush.bf16.msra.mxu0 %v518
        %559 = vmatpush.bf16.msra.mxu0 %v516
        %560 = vmatpush.bf16.msra.mxu0 %v514
        %561 = vmatpush.bf16.msra.mxu0 %v512
        %562 = vmatpush.bf16.msra.mxu0 %v510
        %563 = vmatmul.bf16.gmra.mxu0 %v459
        %v564 = vpop.f32.mrf.mxu0
        %v565 = vadd.f32 %v452, %v564
        %v566 = vpop.f32.mrf.mxu0
        %v567 = vadd.f32 %v452, %v566
        %568 = vdwg.mxu0
        %v569 = vmax.f32 %v551, 0.0
        %v570 = vmax.f32 %v565, 0.0
        %v571 = vmax.f32 %v553, 0.0
        %v572 = vmax.f32 %v567, 0.0
        %v573 = vpack.c.bf16 %v571, %v569
        %v574 = vpack.c.bf16 %v572, %v570
        %v575 = vld [vmem:[#allocation6] sm:$0xff]
        %v576 = vld [vmem:[#allocation6 + $0x8] sm:$0xff]
        %v577 = vld [vmem:[#allocation6 + $0x10] sm:$0xff]
        %v578 = vld [vmem:[#allocation6 + $0x18] sm:$0xff]
        %v579 = vld [vmem:[#allocation6 + $0x20] sm:$0xff]
        %v580 = vld [vmem:[#allocation6 + $0x28] sm:$0xff]
        %v581 = vld [vmem:[#allocation6 + $0x30] sm:$0xff]
        %v582 = vld [vmem:[#allocation6 + $0x38] sm:$0xff]
        %v583 = vld [vmem:[#allocation6 + $0x40] sm:$0xff]
        %v584 = vld [vmem:[#allocation6 + $0x48] sm:$0xff]
        %v585 = vld [vmem:[#allocation6 + $0x50] sm:$0xff]
        %v586 = vld [vmem:[#allocation6 + $0x58] sm:$0xff]
        %v587 = vld [vmem:[#allocation6 + $0x60] sm:$0xff]
        %v588 = vld [vmem:[#allocation6 + $0x68] sm:$0xff]
        %v589 = vld [vmem:[#allocation6 + $0x70] sm:$0xff]
        %v590 = vld [vmem:[#allocation6 + $0x78] sm:$0xff]
        %v591 = vld [vmem:[#allocation6 + $0x80] sm:$0xff]
        %v592 = vld [vmem:[#allocation6 + $0x88] sm:$0xff]
        %v593 = vld [vmem:[#allocation6 + $0x90] sm:$0xff]
        %v594 = vld [vmem:[#allocation6 + $0x98] sm:$0xff]
        %v595 = vld [vmem:[#allocation6 + $0xa0] sm:$0xff]
        %v596 = vld [vmem:[#allocation6 + $0xa8] sm:$0xff]
        %v597 = vld [vmem:[#allocation6 + $0xb0] sm:$0xff]
        %v598 = vld [vmem:[#allocation6 + $0xb8] sm:$0xff]
        %v599 = vld [vmem:[#allocation6 + $0xc0] sm:$0xff]
        %v600 = vld [vmem:[#allocation6 + $0xc8] sm:$0xff]
        %v601 = vld [vmem:[#allocation6 + $0xd0] sm:$0xff]
        %v602 = vld [vmem:[#allocation6 + $0xd8] sm:$0xff]
        %v603 = vld [vmem:[#allocation6 + $0xe0] sm:$0xff]
        %v604 = vld [vmem:[#allocation6 + $0xe8] sm:$0xff]
        %v605 = vld [vmem:[#allocation6 + $0xf0] sm:$0xff]
        %v606 = vld [vmem:[#allocation6 + $0xf8] sm:$0xff]
        %v607 = vld [vmem:[#allocation6 + $0x100] sm:$0xff]
        %v608 = vld [vmem:[#allocation6 + $0x108] sm:$0xff]
        %v609 = vld [vmem:[#allocation6 + $0x110] sm:$0xff]
        %v610 = vld [vmem:[#allocation6 + $0x118] sm:$0xff]
        %v611 = vld [vmem:[#allocation6 + $0x120] sm:$0xff]
        %v612 = vld [vmem:[#allocation6 + $0x128] sm:$0xff]
        %v613 = vld [vmem:[#allocation6 + $0x130] sm:$0xff]
        %v614 = vld [vmem:[#allocation6 + $0x138] sm:$0xff]
        %v615 = vld [vmem:[#allocation6 + $0x140] sm:$0xff]
        %v616 = vld [vmem:[#allocation6 + $0x148] sm:$0xff]
        %v617 = vld [vmem:[#allocation6 + $0x150] sm:$0xff]
        %v618 = vld [vmem:[#allocation6 + $0x158] sm:$0xff]
        %v619 = vld [vmem:[#allocation6 + $0x160] sm:$0xff]
        %v620 = vld [vmem:[#allocation6 + $0x168] sm:$0xff]
        %v621 = vld [vmem:[#allocation6 + $0x170] sm:$0xff]
        %v622 = vld [vmem:[#allocation6 + $0x178] sm:$0xff]
        %v623 = vld [vmem:[#allocation6 + $0x180] sm:$0xff]
        %v624 = vld [vmem:[#allocation6 + $0x188] sm:$0xff]
        %v625 = vld [vmem:[#allocation6 + $0x190] sm:$0xff]
        %v626 = vld [vmem:[#allocation6 + $0x198] sm:$0xff]
        %v627 = vld [vmem:[#allocation6 + $0x1a0] sm:$0xff]
        %v628 = vld [vmem:[#allocation6 + $0x1a8] sm:$0xff]
        %v629 = vld [vmem:[#allocation6 + $0x1b0] sm:$0xff]
        %v630 = vld [vmem:[#allocation6 + $0x1b8] sm:$0xff]
        %v631 = vld [vmem:[#allocation6 + $0x1c0] sm:$0xff]
        %v632 = vld [vmem:[#allocation6 + $0x1c8] sm:$0xff]
        %v633 = vld [vmem:[#allocation6 + $0x1d0] sm:$0xff]
        %v634 = vld [vmem:[#allocation6 + $0x1d8] sm:$0xff]
        %v635 = vld [vmem:[#allocation6 + $0x1e0] sm:$0xff]
        %v636 = vld [vmem:[#allocation6 + $0x1e8] sm:$0xff]
        %v637 = vld [vmem:[#allocation6 + $0x1f0] sm:$0xff]
        %v638 = vld [vmem:[#allocation6 + $0x1f8] sm:$0xff]
        %v639 = vld [vmem:[#allocation7] sm:$0xf]
        %v641 = vperm.slane %v639, 0
        %v642 = vperm.slane %v639, 1
        %v643 = vperm.slane %v639, 2
        %v644 = vperm.slane %v639, 3
        %v713 = vunpack.c.l.b16 %v575
        %v714 = vunpack.c.h.b16 %v575
        %v715 = vunpack.c.l.b16 %v576
        %v716 = vunpack.c.h.b16 %v576
        %v717 = vunpack.c.l.b16 %v577
        %v718 = vunpack.c.h.b16 %v577
        %v719 = vunpack.c.l.b16 %v578
        %v720 = vunpack.c.h.b16 %v578
        %v721 = vunpack.c.l.b16 %v579
        %v722 = vunpack.c.h.b16 %v579
        %v723 = vunpack.c.l.b16 %v580
        %v724 = vunpack.c.h.b16 %v580
        %v725 = vunpack.c.l.b16 %v581
        %v726 = vunpack.c.h.b16 %v581
        %v727 = vunpack.c.l.b16 %v582
        %v728 = vunpack.c.h.b16 %v582
        %v729 = vunpack.c.l.b16 %v583
        %v730 = vunpack.c.h.b16 %v583
        %v731 = vunpack.c.l.b16 %v584
        %v732 = vunpack.c.h.b16 %v584
        %v733 = vunpack.c.l.b16 %v585
        %v734 = vunpack.c.h.b16 %v585
        %v735 = vunpack.c.l.b16 %v586
        %v736 = vunpack.c.h.b16 %v586
        %v737 = vunpack.c.l.b16 %v587
        %v738 = vunpack.c.h.b16 %v587
        %v739 = vunpack.c.l.b16 %v588
        %v740 = vunpack.c.h.b16 %v588
        %v741 = vunpack.c.l.b16 %v589
        %v742 = vunpack.c.h.b16 %v589
        %v743 = vunpack.c.l.b16 %v590
        %v744 = vunpack.c.h.b16 %v590
        %v745 = vunpack.c.l.b16 %v591
        %v746 = vunpack.c.h.b16 %v591
        %v747 = vunpack.c.l.b16 %v592
        %v748 = vunpack.c.h.b16 %v592
        %v749 = vunpack.c.l.b16 %v593
        %v750 = vunpack.c.h.b16 %v593
        %v751 = vunpack.c.l.b16 %v594
        %v752 = vunpack.c.h.b16 %v594
        %v753 = vunpack.c.l.b16 %v595
        %v754 = vunpack.c.h.b16 %v595
        %v755 = vunpack.c.l.b16 %v596
        %v756 = vunpack.c.h.b16 %v596
        %v757 = vunpack.c.l.b16 %v597
        %v758 = vunpack.c.h.b16 %v597
        %v759 = vunpack.c.l.b16 %v598
        %v760 = vunpack.c.h.b16 %v598
        %v761 = vunpack.c.l.b16 %v599
        %v762 = vunpack.c.h.b16 %v599
        %v763 = vunpack.c.l.b16 %v600
        %v764 = vunpack.c.h.b16 %v600
        %v765 = vunpack.c.l.b16 %v601
        %v766 = vunpack.c.h.b16 %v601
        %v767 = vunpack.c.l.b16 %v602
        %v768 = vunpack.c.h.b16 %v602
        %v769 = vunpack.c.l.b16 %v603
        %v770 = vunpack.c.h.b16 %v603
        %v771 = vunpack.c.l.b16 %v604
        %v772 = vunpack.c.h.b16 %v604
        %v773 = vunpack.c.l.b16 %v605
        %v774 = vunpack.c.h.b16 %v605
        %v775 = vunpack.c.l.b16 %v606
        %v776 = vunpack.c.h.b16 %v606
        %v777 = vunpack.c.l.b16 %v607
        %v778 = vunpack.c.h.b16 %v607
        %v779 = vunpack.c.l.b16 %v608
        %v780 = vunpack.c.h.b16 %v608
        %v781 = vunpack.c.l.b16 %v609
        %v782 = vunpack.c.h.b16 %v609
        %v783 = vunpack.c.l.b16 %v610
        %v784 = vunpack.c.h.b16 %v610
        %v785 = vunpack.c.l.b16 %v611
        %v786 = vunpack.c.h.b16 %v611
        %v787 = vunpack.c.l.b16 %v612
        %v788 = vunpack.c.h.b16 %v612
        %v789 = vunpack.c.l.b16 %v613
        %v790 = vunpack.c.h.b16 %v613
        %v791 = vunpack.c.l.b16 %v614
        %v792 = vunpack.c.h.b16 %v614
        %v793 = vunpack.c.l.b16 %v615
        %v794 = vunpack.c.h.b16 %v615
        %v795 = vunpack.c.l.b16 %v616
        %v796 = vunpack.c.h.b16 %v616
        %v797 = vunpack.c.l.b16 %v617
        %v798 = vunpack.c.h.b16 %v617
        %v799 = vunpack.c.l.b16 %v618
        %v800 = vunpack.c.h.b16 %v618
        %v801 = vunpack.c.l.b16 %v619
        %v802 = vunpack.c.h.b16 %v619
        %v803 = vunpack.c.l.b16 %v620
        %v804 = vunpack.c.h.b16 %v620
        %v805 = vunpack.c.l.b16 %v621
        %v806 = vunpack.c.h.b16 %v621
        %v807 = vunpack.c.l.b16 %v622
        %v808 = vunpack.c.h.b16 %v622
        %v809 = vunpack.c.l.b16 %v623
        %v810 = vunpack.c.h.b16 %v623
        %v811 = vunpack.c.l.b16 %v624
        %v812 = vunpack.c.h.b16 %v624
        %v813 = vunpack.c.l.b16 %v625
        %v814 = vunpack.c.h.b16 %v625
        %v815 = vunpack.c.l.b16 %v626
        %v816 = vunpack.c.h.b16 %v626
        %v817 = vunpack.c.l.b16 %v627
        %v818 = vunpack.c.h.b16 %v627
        %v819 = vunpack.c.l.b16 %v628
        %v820 = vunpack.c.h.b16 %v628
        %v821 = vunpack.c.l.b16 %v629
        %v822 = vunpack.c.h.b16 %v629
        %v823 = vunpack.c.l.b16 %v630
        %v824 = vunpack.c.h.b16 %v630
        %v825 = vunpack.c.l.b16 %v631
        %v826 = vunpack.c.h.b16 %v631
        %v827 = vunpack.c.l.b16 %v632
        %v828 = vunpack.c.h.b16 %v632
        %v829 = vunpack.c.l.b16 %v633
        %v830 = vunpack.c.h.b16 %v633
        %v831 = vunpack.c.l.b16 %v634
        %v832 = vunpack.c.h.b16 %v634
        %v833 = vunpack.c.l.b16 %v635
        %v834 = vunpack.c.h.b16 %v635
        %v835 = vunpack.c.l.b16 %v636
        %v836 = vunpack.c.h.b16 %v636
        %v837 = vunpack.c.l.b16 %v637
        %v838 = vunpack.c.h.b16 %v637
        %v839 = vunpack.c.l.b16 %v638
        %v840 = vunpack.c.h.b16 %v638
        %v841 = vpack.c.b16 %v717, %v713
        %v842 = vpack.c.b16 %v718, %v714
        %v843 = vpack.c.b16 %v719, %v715
        %v844 = vpack.c.b16 %v720, %v716
        %v845 = vpack.c.b16 %v725, %v721
        %v846 = vpack.c.b16 %v726, %v722
        %v847 = vpack.c.b16 %v727, %v723
        %v848 = vpack.c.b16 %v728, %v724
        %v849 = vpack.c.b16 %v733, %v729
        %v850 = vpack.c.b16 %v734, %v730
        %v851 = vpack.c.b16 %v735, %v731
        %v852 = vpack.c.b16 %v736, %v732
        %v853 = vpack.c.b16 %v741, %v737
        %v854 = vpack.c.b16 %v742, %v738
        %v855 = vpack.c.b16 %v743, %v739
        %v856 = vpack.c.b16 %v744, %v740
        %v857 = vpack.c.b16 %v749, %v745
        %v858 = vpack.c.b16 %v750, %v746
        %v859 = vpack.c.b16 %v751, %v747
        %v860 = vpack.c.b16 %v752, %v748
        %v861 = vpack.c.b16 %v757, %v753
        %v862 = vpack.c.b16 %v758, %v754
        %v863 = vpack.c.b16 %v759, %v755
        %v864 = vpack.c.b16 %v760, %v756
        %v865 = vpack.c.b16 %v765, %v761
        %v866 = vpack.c.b16 %v766, %v762
        %v867 = vpack.c.b16 %v767, %v763
        %v868 = vpack.c.b16 %v768, %v764
        %v869 = vpack.c.b16 %v773, %v769
        %v870 = vpack.c.b16 %v774, %v770
        %v871 = vpack.c.b16 %v775, %v771
        %v872 = vpack.c.b16 %v776, %v772
        %v873 = vpack.c.b16 %v781, %v777
        %v874 = vpack.c.b16 %v782, %v778
        %v875 = vpack.c.b16 %v783, %v779
        %v876 = vpack.c.b16 %v784, %v780
        %v877 = vpack.c.b16 %v789, %v785
        %v878 = vpack.c.b16 %v790, %v786
        %v879 = vpack.c.b16 %v791, %v787
        %v880 = vpack.c.b16 %v792, %v788
        %v881 = vpack.c.b16 %v797, %v793
        %v882 = vpack.c.b16 %v798, %v794
        %v883 = vpack.c.b16 %v799, %v795
        %v884 = vpack.c.b16 %v800, %v796
        %v885 = vpack.c.b16 %v805, %v801
        %v886 = vpack.c.b16 %v806, %v802
        %v887 = vpack.c.b16 %v807, %v803
        %v888 = vpack.c.b16 %v808, %v804
        %v889 = vpack.c.b16 %v813, %v809
        %v890 = vpack.c.b16 %v814, %v810
        %v891 = vpack.c.b16 %v815, %v811
        %v892 = vpack.c.b16 %v816, %v812
        %v893 = vpack.c.b16 %v821, %v817
        %v894 = vpack.c.b16 %v822, %v818
        %v895 = vpack.c.b16 %v823, %v819
        %v896 = vpack.c.b16 %v824, %v820
        %v897 = vpack.c.b16 %v829, %v825
        %v898 = vpack.c.b16 %v830, %v826
        %v899 = vpack.c.b16 %v831, %v827
        %v900 = vpack.c.b16 %v832, %v828
        %v901 = vpack.c.b16 %v837, %v833
        %v902 = vpack.c.b16 %v838, %v834
        %v903 = vpack.c.b16 %v839, %v835
        %v904 = vpack.c.b16 %v840, %v836
        %969 = vmatpush.bf16.msra.mxu0 %v869
        %970 = vmatpush.bf16.msra.mxu0 %v865
        %971 = vmatpush.bf16.msra.mxu0 %v861
        %972 = vmatpush.bf16.msra.mxu0 %v857
        %973 = vmatpush.bf16.msra.mxu0 %v853
        %974 = vmatpush.bf16.msra.mxu0 %v849
        %975 = vmatpush.bf16.msra.mxu0 %v845
        %976 = vmatpush.bf16.msra.mxu0 %v841
        %977 = vmatmul.bf16.gmra.mxu0 %v573
        %v978 = vpop.f32.mrf.mxu0
        %v979 = vadd.f32 %v641, %v978
        %v980 = vpop.f32.mrf.mxu0
        %v981 = vadd.f32 %v641, %v980
        %982 = vdwg.mxu0
        %983 = vmatpush.bf16.msra.mxu0 %v901
        %984 = vmatpush.bf16.msra.mxu0 %v897
        %985 = vmatpush.bf16.msra.mxu0 %v893
        %986 = vmatpush.bf16.msra.mxu0 %v889
        %987 = vmatpush.bf16.msra.mxu0 %v885
        %988 = vmatpush.bf16.msra.mxu0 %v881
        %989 = vmatpush.bf16.msra.mxu0 %v877
        %990 = vmatpush.bf16.msra.mxu0 %v873
        %991 = vmatmul.bf16.gmra.mxu0 %v574
        %v992 = vpop.f32.mrf.mxu0
        %v993 = vadd.f32 %v979, %v992
        %v994 = vpop.f32.mrf.mxu0
        %v995 = vadd.f32 %v981, %v994
        %996 = vdwg.mxu0
        %997 = vmatpush.bf16.msra.mxu0 %v870
        %998 = vmatpush.bf16.msra.mxu0 %v866
        %999 = vmatpush.bf16.msra.mxu0 %v862
        %1000 = vmatpush.bf16.msra.mxu0 %v858
        %1001 = vmatpush.bf16.msra.mxu0 %v854
        %1002 = vmatpush.bf16.msra.mxu0 %v850
        %1003 = vmatpush.bf16.msra.mxu0 %v846
        %1004 = vmatpush.bf16.msra.mxu0 %v842
        %1005 = vmatmul.bf16.gmra.mxu0 %v573
        %v1006 = vpop.f32.mrf.mxu0
        %v1007 = vadd.f32 %v642, %v1006
        %v1008 = vpop.f32.mrf.mxu0
        %v1009 = vadd.f32 %v642, %v1008
        %1010 = vdwg.mxu0
        %1011 = vmatpush.bf16.msra.mxu0 %v902
        %1012 = vmatpush.bf16.msra.mxu0 %v898
        %1013 = vmatpush.bf16.msra.mxu0 %v894
        %1014 = vmatpush.bf16.msra.mxu0 %v890
        %1015 = vmatpush.bf16.msra.mxu0 %v886
        %1016 = vmatpush.bf16.msra.mxu0 %v882
        %1017 = vmatpush.bf16.msra.mxu0 %v878
        %1018 = vmatpush.bf16.msra.mxu0 %v874
        %1019 = vmatmul.bf16.gmra.mxu0 %v574
        %v1020 = vpop.f32.mrf.mxu0
        %v1021 = vadd.f32 %v1007, %v1020
        %v1022 = vpop.f32.mrf.mxu0
        %v1023 = vadd.f32 %v1009, %v1022
        %1024 = vdwg.mxu0
        %1025 = vmatpush.bf16.msra.mxu0 %v871
        %1026 = vmatpush.bf16.msra.mxu0 %v867
        %1027 = vmatpush.bf16.msra.mxu0 %v863
        %1028 = vmatpush.bf16.msra.mxu0 %v859
        %1029 = vmatpush.bf16.msra.mxu0 %v855
        %1030 = vmatpush.bf16.msra.mxu0 %v851
        %1031 = vmatpush.bf16.msra.mxu0 %v847
        %1032 = vmatpush.bf16.msra.mxu0 %v843
        %1033 = vmatmul.bf16.gmra.mxu0 %v573
        %v1034 = vpop.f32.mrf.mxu0
        %v1035 = vadd.f32 %v643, %v1034
        %v1036 = vpop.f32.mrf.mxu0
        %v1037 = vadd.f32 %v643, %v1036
        %1038 = vdwg.mxu0
        %1039 = vmatpush.bf16.msra.mxu0 %v903
        %1040 = vmatpush.bf16.msra.mxu0 %v899
        %1041 = vmatpush.bf16.msra.mxu0 %v895
        %1042 = vmatpush.bf16.msra.mxu0 %v891
        %1043 = vmatpush.bf16.msra.mxu0 %v887
        %1044 = vmatpush.bf16.msra.mxu0 %v883
        %1045 = vmatpush.bf16.msra.mxu0 %v879
        %1046 = vmatpush.bf16.msra.mxu0 %v875
        %1047 = vmatmul.bf16.gmra.mxu0 %v574
        %v1048 = vpop.f32.mrf.mxu0
        %v1049 = vadd.f32 %v1035, %v1048
        %v1050 = vpop.f32.mrf.mxu0
        %v1051 = vadd.f32 %v1037, %v1050
        %1052 = vdwg.mxu0
        %1053 = vmatpush.bf16.msra.mxu0 %v872
        %1054 = vmatpush.bf16.msra.mxu0 %v868
        %1055 = vmatpush.bf16.msra.mxu0 %v864
        %1056 = vmatpush.bf16.msra.mxu0 %v860
        %1057 = vmatpush.bf16.msra.mxu0 %v856
        %1058 = vmatpush.bf16.msra.mxu0 %v852
        %1059 = vmatpush.bf16.msra.mxu0 %v848
        %1060 = vmatpush.bf16.msra.mxu0 %v844
        %1061 = vmatmul.bf16.gmra.mxu0 %v573
        %v1062 = vpop.f32.mrf.mxu0
        %v1063 = vadd.f32 %v644, %v1062
        %v1064 = vpop.f32.mrf.mxu0
        %v1065 = vadd.f32 %v644, %v1064
        %1066 = vdwg.mxu0
        %1067 = vmatpush.bf16.msra.mxu0 %v904
        %1068 = vmatpush.bf16.msra.mxu0 %v900
        %1069 = vmatpush.bf16.msra.mxu0 %v896
        %1070 = vmatpush.bf16.msra.mxu0 %v892
        %1071 = vmatpush.bf16.msra.mxu0 %v888
        %1072 = vmatpush.bf16.msra.mxu0 %v884
        %1073 = vmatpush.bf16.msra.mxu0 %v880
        %1074 = vmatpush.bf16.msra.mxu0 %v876
        %1075 = vmatmul.bf16.gmra.mxu0 %v574
        %v1076 = vpop.f32.mrf.mxu0
        %v1077 = vadd.f32 %v1063, %v1076
        %v1078 = vpop.f32.mrf.mxu0
        %v1079 = vadd.f32 %v1065, %v1078
        %1080 = vdwg.mxu0
        %v1081 = vmax.f32 %v993, 0.0
        %v1082 = vmax.f32 %v1021, 0.0
        %v1083 = vmax.f32 %v1049, 0.0
        %v1084 = vmax.f32 %v1077, 0.0
        %v1085 = vmax.f32 %v995, 0.0
        %v1086 = vmax.f32 %v1023, 0.0
        %v1087 = vmax.f32 %v1051, 0.0
        %v1088 = vmax.f32 %v1079, 0.0
        %v1089 = vpack.c.bf16 %v1085, %v1081
        %v1090 = vpack.c.bf16 %v1086, %v1082
        %v1091 = vpack.c.bf16 %v1087, %v1083
        %v1092 = vpack.c.bf16 %v1088, %v1084
        %v1093 = vld [vmem:[%s370] sm:$0xff]
        %v1094 = vld [vmem:[%s370 + $0x8] sm:$0xff]
        %v1095 = vld [vmem:[%s370 + $0x10] sm:$0xff]
        %v1096 = vld [vmem:[%s370 + $0x18] sm:$0xff]
        %v1097 = vld [vmem:[%s370 + $0x20] sm:$0xff]
        %v1098 = vld [vmem:[%s370 + $0x28] sm:$0xff]
        %v1099 = vld [vmem:[%s370 + $0x30] sm:$0xff]
        %v1100 = vld [vmem:[%s370 + $0x38] sm:$0xff]
        %v1101 = vld [vmem:[%s370 + $0x40] sm:$0xff]
        %v1102 = vld [vmem:[%s370 + $0x48] sm:$0xff]
        %v1103 = vld [vmem:[%s370 + $0x50] sm:$0xff]
        %v1104 = vld [vmem:[%s370 + $0x58] sm:$0xff]
        %v1105 = vld [vmem:[%s370 + $0x60] sm:$0xff]
        %v1106 = vld [vmem:[%s370 + $0x68] sm:$0xff]
        %v1107 = vld [vmem:[%s370 + $0x70] sm:$0xff]
        %v1108 = vld [vmem:[%s370 + $0x78] sm:$0xff]
        %v1109 = vld [vmem:[%s370 + $0x80] sm:$0xff]
        %v1110 = vld [vmem:[%s370 + $0x88] sm:$0xff]
        %v1111 = vld [vmem:[%s370 + $0x90] sm:$0xff]
        %v1112 = vld [vmem:[%s370 + $0x98] sm:$0xff]
        %v1113 = vld [vmem:[%s370 + $0xa0] sm:$0xff]
        %v1114 = vld [vmem:[%s370 + $0xa8] sm:$0xff]
        %v1115 = vld [vmem:[%s370 + $0xb0] sm:$0xff]
        %v1116 = vld [vmem:[%s370 + $0xb8] sm:$0xff]
        %v1117 = vld [vmem:[%s370 + $0xc0] sm:$0xff]
        %v1118 = vld [vmem:[%s370 + $0xc8] sm:$0xff]
        %v1119 = vld [vmem:[%s370 + $0xd0] sm:$0xff]
        %v1120 = vld [vmem:[%s370 + $0xd8] sm:$0xff]
        %v1121 = vld [vmem:[%s370 + $0xe0] sm:$0xff]
        %v1122 = vld [vmem:[%s370 + $0xe8] sm:$0xff]
        %v1123 = vld [vmem:[%s370 + $0xf0] sm:$0xff]
        %v1124 = vld [vmem:[%s370 + $0xf8] sm:$0xff]
        %v1125 = vld [vmem:[%s370 + $0x100] sm:$0xff]
        %v1126 = vld [vmem:[%s370 + $0x108] sm:$0xff]
        %v1127 = vld [vmem:[%s370 + $0x110] sm:$0xff]
        %v1128 = vld [vmem:[%s370 + $0x118] sm:$0xff]
        %v1129 = vld [vmem:[%s370 + $0x120] sm:$0xff]
        %v1130 = vld [vmem:[%s370 + $0x128] sm:$0xff]
        %v1131 = vld [vmem:[%s370 + $0x130] sm:$0xff]
        %v1132 = vld [vmem:[%s370 + $0x138] sm:$0xff]
        %v1133 = vld [vmem:[%s370 + $0x140] sm:$0xff]
        %v1134 = vld [vmem:[%s370 + $0x148] sm:$0xff]
        %v1135 = vld [vmem:[%s370 + $0x150] sm:$0xff]
        %v1136 = vld [vmem:[%s370 + $0x158] sm:$0xff]
        %v1137 = vld [vmem:[%s370 + $0x160] sm:$0xff]
        %v1138 = vld [vmem:[%s370 + $0x168] sm:$0xff]
        %v1139 = vld [vmem:[%s370 + $0x170] sm:$0xff]
        %v1140 = vld [vmem:[%s370 + $0x178] sm:$0xff]
        %v1141 = vld [vmem:[%s370 + $0x180] sm:$0xff]
        %v1142 = vld [vmem:[%s370 + $0x188] sm:$0xff]
        %v1143 = vld [vmem:[%s370 + $0x190] sm:$0xff]
        %v1144 = vld [vmem:[%s370 + $0x198] sm:$0xff]
        %v1145 = vld [vmem:[%s370 + $0x1a0] sm:$0xff]
        %v1146 = vld [vmem:[%s370 + $0x1a8] sm:$0xff]
        %v1147 = vld [vmem:[%s370 + $0x1b0] sm:$0xff]
        %v1148 = vld [vmem:[%s370 + $0x1b8] sm:$0xff]
        %v1149 = vld [vmem:[%s370 + $0x1c0] sm:$0xff]
        %v1150 = vld [vmem:[%s370 + $0x1c8] sm:$0xff]
        %v1151 = vld [vmem:[%s370 + $0x1d0] sm:$0xff]
        %v1152 = vld [vmem:[%s370 + $0x1d8] sm:$0xff]
        %v1153 = vld [vmem:[%s370 + $0x1e0] sm:$0xff]
        %v1154 = vld [vmem:[%s370 + $0x1e8] sm:$0xff]
        %v1155 = vld [vmem:[%s370 + $0x1f0] sm:$0xff]
        %v1156 = vld [vmem:[%s370 + $0x1f8] sm:$0xff]
        %v1157 = vld [vmem:[%s370 + $0x200] sm:$0xff]
        %v1158 = vld [vmem:[%s370 + $0x208] sm:$0xff]
        %v1159 = vld [vmem:[%s370 + $0x210] sm:$0xff]
        %v1160 = vld [vmem:[%s370 + $0x218] sm:$0xff]
        %v1161 = vld [vmem:[%s370 + $0x220] sm:$0xff]
        %v1162 = vld [vmem:[%s370 + $0x228] sm:$0xff]
        %v1163 = vld [vmem:[%s370 + $0x230] sm:$0xff]
        %v1164 = vld [vmem:[%s370 + $0x238] sm:$0xff]
        %v1165 = vld [vmem:[%s370 + $0x240] sm:$0xff]
        %v1166 = vld [vmem:[%s370 + $0x248] sm:$0xff]
        %v1167 = vld [vmem:[%s370 + $0x250] sm:$0xff]
        %v1168 = vld [vmem:[%s370 + $0x258] sm:$0xff]
        %v1169 = vld [vmem:[%s370 + $0x260] sm:$0xff]
        %v1170 = vld [vmem:[%s370 + $0x268] sm:$0xff]
        %v1171 = vld [vmem:[%s370 + $0x270] sm:$0xff]
        %v1172 = vld [vmem:[%s370 + $0x278] sm:$0xff]
        %v1173 = vld [vmem:[%s370 + $0x280] sm:$0xff]
        %v1174 = vld [vmem:[%s370 + $0x288] sm:$0xff]
        %v1175 = vld [vmem:[%s370 + $0x290] sm:$0xff]
        %v1176 = vld [vmem:[%s370 + $0x298] sm:$0xff]
        %v1177 = vld [vmem:[%s370 + $0x2a0] sm:$0xff]
        %v1178 = vld [vmem:[%s370 + $0x2a8] sm:$0xff]
        %v1179 = vld [vmem:[%s370 + $0x2b0] sm:$0xff]
        %v1180 = vld [vmem:[%s370 + $0x2b8] sm:$0xff]
        %v1181 = vld [vmem:[%s370 + $0x2c0] sm:$0xff]
        %v1182 = vld [vmem:[%s370 + $0x2c8] sm:$0xff]
        %v1183 = vld [vmem:[%s370 + $0x2d0] sm:$0xff]
        %v1184 = vld [vmem:[%s370 + $0x2d8] sm:$0xff]
        %v1185 = vld [vmem:[%s370 + $0x2e0] sm:$0xff]
        %v1186 = vld [vmem:[%s370 + $0x2e8] sm:$0xff]
        %v1187 = vld [vmem:[%s370 + $0x2f0] sm:$0xff]
        %v1188 = vld [vmem:[%s370 + $0x2f8] sm:$0xff]
        %v1189 = vld [vmem:[%s370 + $0x300] sm:$0xff]
        %v1190 = vld [vmem:[%s370 + $0x308] sm:$0xff]
        %v1191 = vld [vmem:[%s370 + $0x310] sm:$0xff]
        %v1192 = vld [vmem:[%s370 + $0x318] sm:$0xff]
        %v1193 = vld [vmem:[%s370 + $0x320] sm:$0xff]
        %v1194 = vld [vmem:[%s370 + $0x328] sm:$0xff]
        %v1195 = vld [vmem:[%s370 + $0x330] sm:$0xff]
        %v1196 = vld [vmem:[%s370 + $0x338] sm:$0xff]
        %v1197 = vld [vmem:[%s370 + $0x340] sm:$0xff]
        %v1198 = vld [vmem:[%s370 + $0x348] sm:$0xff]
        %v1199 = vld [vmem:[%s370 + $0x350] sm:$0xff]
        %v1200 = vld [vmem:[%s370 + $0x358] sm:$0xff]
        %v1201 = vld [vmem:[%s370 + $0x360] sm:$0xff]
        %v1202 = vld [vmem:[%s370 + $0x368] sm:$0xff]
        %v1203 = vld [vmem:[%s370 + $0x370] sm:$0xff]
        %v1204 = vld [vmem:[%s370 + $0x378] sm:$0xff]
        %v1205 = vld [vmem:[%s370 + $0x380] sm:$0xff]
        %v1206 = vld [vmem:[%s370 + $0x388] sm:$0xff]
        %v1207 = vld [vmem:[%s370 + $0x390] sm:$0xff]
        %v1208 = vld [vmem:[%s370 + $0x398] sm:$0xff]
        %v1209 = vld [vmem:[%s370 + $0x3a0] sm:$0xff]
        %v1210 = vld [vmem:[%s370 + $0x3a8] sm:$0xff]
        %v1211 = vld [vmem:[%s370 + $0x3b0] sm:$0xff]
        %v1212 = vld [vmem:[%s370 + $0x3b8] sm:$0xff]
        %v1213 = vld [vmem:[%s370 + $0x3c0] sm:$0xff]
        %v1214 = vld [vmem:[%s370 + $0x3c8] sm:$0xff]
        %v1215 = vld [vmem:[%s370 + $0x3d0] sm:$0xff]
        %v1216 = vld [vmem:[%s370 + $0x3d8] sm:$0xff]
        %v1217 = vld [vmem:[%s370 + $0x3e0] sm:$0xff]
        %v1218 = vld [vmem:[%s370 + $0x3e8] sm:$0xff]
        %v1219 = vld [vmem:[%s370 + $0x3f0] sm:$0xff]
        %v1220 = vld [vmem:[%s370 + $0x3f8] sm:$0xff]
        %v1221 = vld [vmem:[%s370 + $0x400] sm:$0xff]
        %v1222 = vld [vmem:[%s370 + $0x408] sm:$0xff]
        %v1223 = vld [vmem:[%s370 + $0x410] sm:$0xff]
        %v1224 = vld [vmem:[%s370 + $0x418] sm:$0xff]
        %v1225 = vld [vmem:[%s370 + $0x420] sm:$0xff]
        %v1226 = vld [vmem:[%s370 + $0x428] sm:$0xff]
        %v1227 = vld [vmem:[%s370 + $0x430] sm:$0xff]
        %v1228 = vld [vmem:[%s370 + $0x438] sm:$0xff]
        %v1229 = vld [vmem:[%s370 + $0x440] sm:$0xff]
        %v1230 = vld [vmem:[%s370 + $0x448] sm:$0xff]
        %v1231 = vld [vmem:[%s370 + $0x450] sm:$0xff]
        %v1232 = vld [vmem:[%s370 + $0x458] sm:$0xff]
        %v1233 = vld [vmem:[%s370 + $0x460] sm:$0xff]
        %v1234 = vld [vmem:[%s370 + $0x468] sm:$0xff]
        %v1235 = vld [vmem:[%s370 + $0x470] sm:$0xff]
        %v1236 = vld [vmem:[%s370 + $0x478] sm:$0xff]
        %v1237 = vld [vmem:[%s370 + $0x480] sm:$0xff]
        %v1238 = vld [vmem:[%s370 + $0x488] sm:$0xff]
        %v1239 = vld [vmem:[%s370 + $0x490] sm:$0xff]
        %v1240 = vld [vmem:[%s370 + $0x498] sm:$0xff]
        %v1241 = vld [vmem:[%s370 + $0x4a0] sm:$0xff]
        %v1242 = vld [vmem:[%s370 + $0x4a8] sm:$0xff]
        %v1243 = vld [vmem:[%s370 + $0x4b0] sm:$0xff]
        %v1244 = vld [vmem:[%s370 + $0x4b8] sm:$0xff]
        %v1245 = vld [vmem:[%s370 + $0x4c0] sm:$0xff]
        %v1246 = vld [vmem:[%s370 + $0x4c8] sm:$0xff]
        %v1247 = vld [vmem:[%s370 + $0x4d0] sm:$0xff]
        %v1248 = vld [vmem:[%s370 + $0x4d8] sm:$0xff]
        %v1249 = vld [vmem:[%s370 + $0x4e0] sm:$0xff]
        %v1250 = vld [vmem:[%s370 + $0x4e8] sm:$0xff]
        %v1251 = vld [vmem:[%s370 + $0x4f0] sm:$0xff]
        %v1252 = vld [vmem:[%s370 + $0x4f8] sm:$0xff]
        %v1253 = vld [vmem:[%s370 + $0x500] sm:$0xff]
        %v1254 = vld [vmem:[%s370 + $0x508] sm:$0xff]
        %v1255 = vld [vmem:[%s370 + $0x510] sm:$0xff]
        %v1256 = vld [vmem:[%s370 + $0x518] sm:$0xff]
        %v1257 = vld [vmem:[%s370 + $0x520] sm:$0xff]
        %v1258 = vld [vmem:[%s370 + $0x528] sm:$0xff]
        %v1259 = vld [vmem:[%s370 + $0x530] sm:$0xff]
        %v1260 = vld [vmem:[%s370 + $0x538] sm:$0xff]
        %v1261 = vld [vmem:[%s370 + $0x540] sm:$0xff]
        %v1262 = vld [vmem:[%s370 + $0x548] sm:$0xff]
        %v1263 = vld [vmem:[%s370 + $0x550] sm:$0xff]
        %v1264 = vld [vmem:[%s370 + $0x558] sm:$0xff]
        %v1265 = vld [vmem:[%s370 + $0x560] sm:$0xff]
        %v1266 = vld [vmem:[%s370 + $0x568] sm:$0xff]
        %v1267 = vld [vmem:[%s370 + $0x570] sm:$0xff]
        %v1268 = vld [vmem:[%s370 + $0x578] sm:$0xff]
        %v1269 = vld [vmem:[%s370 + $0x580] sm:$0xff]
        %v1270 = vld [vmem:[%s370 + $0x588] sm:$0xff]
        %v1271 = vld [vmem:[%s370 + $0x590] sm:$0xff]
        %v1272 = vld [vmem:[%s370 + $0x598] sm:$0xff]
        %v1273 = vld [vmem:[%s370 + $0x5a0] sm:$0xff]
        %v1274 = vld [vmem:[%s370 + $0x5a8] sm:$0xff]
        %v1275 = vld [vmem:[%s370 + $0x5b0] sm:$0xff]
        %v1276 = vld [vmem:[%s370 + $0x5b8] sm:$0xff]
        %v1277 = vld [vmem:[%s370 + $0x5c0] sm:$0xff]
        %v1278 = vld [vmem:[%s370 + $0x5c8] sm:$0xff]
        %v1279 = vld [vmem:[%s370 + $0x5d0] sm:$0xff]
        %v1280 = vld [vmem:[%s370 + $0x5d8] sm:$0xff]
        %v1281 = vld [vmem:[%s370 + $0x5e0] sm:$0xff]
        %v1282 = vld [vmem:[%s370 + $0x5e8] sm:$0xff]
        %v1283 = vld [vmem:[%s370 + $0x5f0] sm:$0xff]
        %v1284 = vld [vmem:[%s370 + $0x5f8] sm:$0xff]
        %v1285 = vld [vmem:[%s370 + $0x600] sm:$0xff]
        %v1286 = vld [vmem:[%s370 + $0x608] sm:$0xff]
        %v1287 = vld [vmem:[%s370 + $0x610] sm:$0xff]
        %v1288 = vld [vmem:[%s370 + $0x618] sm:$0xff]
        %v1289 = vld [vmem:[%s370 + $0x620] sm:$0xff]
        %v1290 = vld [vmem:[%s370 + $0x628] sm:$0xff]
        %v1291 = vld [vmem:[%s370 + $0x630] sm:$0xff]
        %v1292 = vld [vmem:[%s370 + $0x638] sm:$0xff]
        %v1293 = vld [vmem:[%s370 + $0x640] sm:$0xff]
        %v1294 = vld [vmem:[%s370 + $0x648] sm:$0xff]
        %v1295 = vld [vmem:[%s370 + $0x650] sm:$0xff]
        %v1296 = vld [vmem:[%s370 + $0x658] sm:$0xff]
        %v1297 = vld [vmem:[%s370 + $0x660] sm:$0xff]
        %v1298 = vld [vmem:[%s370 + $0x668] sm:$0xff]
        %v1299 = vld [vmem:[%s370 + $0x670] sm:$0xff]
        %v1300 = vld [vmem:[%s370 + $0x678] sm:$0xff]
        %v1301 = vld [vmem:[%s370 + $0x680] sm:$0xff]
        %v1302 = vld [vmem:[%s370 + $0x688] sm:$0xff]
        %v1303 = vld [vmem:[%s370 + $0x690] sm:$0xff]
        %v1304 = vld [vmem:[%s370 + $0x698] sm:$0xff]
        %v1305 = vld [vmem:[%s370 + $0x6a0] sm:$0xff]
        %v1306 = vld [vmem:[%s370 + $0x6a8] sm:$0xff]
        %v1307 = vld [vmem:[%s370 + $0x6b0] sm:$0xff]
        %v1308 = vld [vmem:[%s370 + $0x6b8] sm:$0xff]
        %v1309 = vld [vmem:[%s370 + $0x6c0] sm:$0xff]
        %v1310 = vld [vmem:[%s370 + $0x6c8] sm:$0xff]
        %v1311 = vld [vmem:[%s370 + $0x6d0] sm:$0xff]
        %v1312 = vld [vmem:[%s370 + $0x6d8] sm:$0xff]
        %v1313 = vld [vmem:[%s370 + $0x6e0] sm:$0xff]
        %v1314 = vld [vmem:[%s370 + $0x6e8] sm:$0xff]
        %v1315 = vld [vmem:[%s370 + $0x6f0] sm:$0xff]
        %v1316 = vld [vmem:[%s370 + $0x6f8] sm:$0xff]
        %v1317 = vld [vmem:[%s370 + $0x700] sm:$0xff]
        %v1318 = vld [vmem:[%s370 + $0x708] sm:$0xff]
        %v1319 = vld [vmem:[%s370 + $0x710] sm:$0xff]
        %v1320 = vld [vmem:[%s370 + $0x718] sm:$0xff]
        %v1321 = vld [vmem:[%s370 + $0x720] sm:$0xff]
        %v1322 = vld [vmem:[%s370 + $0x728] sm:$0xff]
        %v1323 = vld [vmem:[%s370 + $0x730] sm:$0xff]
        %v1324 = vld [vmem:[%s370 + $0x738] sm:$0xff]
        %v1325 = vld [vmem:[%s370 + $0x740] sm:$0xff]
        %v1326 = vld [vmem:[%s370 + $0x748] sm:$0xff]
        %v1327 = vld [vmem:[%s370 + $0x750] sm:$0xff]
        %v1328 = vld [vmem:[%s370 + $0x758] sm:$0xff]
        %v1329 = vld [vmem:[%s370 + $0x760] sm:$0xff]
        %v1330 = vld [vmem:[%s370 + $0x768] sm:$0xff]
        %v1331 = vld [vmem:[%s370 + $0x770] sm:$0xff]
        %v1332 = vld [vmem:[%s370 + $0x778] sm:$0xff]
        %v1333 = vld [vmem:[%s370 + $0x780] sm:$0xff]
        %v1334 = vld [vmem:[%s370 + $0x788] sm:$0xff]
        %v1335 = vld [vmem:[%s370 + $0x790] sm:$0xff]
        %v1336 = vld [vmem:[%s370 + $0x798] sm:$0xff]
        %v1337 = vld [vmem:[%s370 + $0x7a0] sm:$0xff]
        %v1338 = vld [vmem:[%s370 + $0x7a8] sm:$0xff]
        %v1339 = vld [vmem:[%s370 + $0x7b0] sm:$0xff]
        %v1340 = vld [vmem:[%s370 + $0x7b8] sm:$0xff]
        %v1341 = vld [vmem:[%s370 + $0x7c0] sm:$0xff]
        %v1342 = vld [vmem:[%s370 + $0x7c8] sm:$0xff]
        %v1343 = vld [vmem:[%s370 + $0x7d0] sm:$0xff]
        %v1344 = vld [vmem:[%s370 + $0x7d8] sm:$0xff]
        %v1345 = vld [vmem:[%s370 + $0x7e0] sm:$0xff]
        %v1346 = vld [vmem:[%s370 + $0x7e8] sm:$0xff]
        %v1347 = vld [vmem:[%s370 + $0x7f0] sm:$0xff]
        %v1348 = vld [vmem:[%s370 + $0x7f8] sm:$0xff]
        %v1349 = vld [vmem:[%s370 + $0x800] sm:$0xff]
        %v1350 = vld [vmem:[%s370 + $0x808] sm:$0xff]
        %v1351 = vld [vmem:[%s370 + $0x810] sm:$0xff]
        %v1352 = vld [vmem:[%s370 + $0x818] sm:$0xff]
        %v1353 = vld [vmem:[%s370 + $0x820] sm:$0xff]
        %v1354 = vld [vmem:[%s370 + $0x828] sm:$0xff]
        %v1355 = vld [vmem:[%s370 + $0x830] sm:$0xff]
        %v1356 = vld [vmem:[%s370 + $0x838] sm:$0xff]
        %v1357 = vld [vmem:[%s370 + $0x840] sm:$0xff]
        %v1358 = vld [vmem:[%s370 + $0x848] sm:$0xff]
        %v1359 = vld [vmem:[%s370 + $0x850] sm:$0xff]
        %v1360 = vld [vmem:[%s370 + $0x858] sm:$0xff]
        %v1361 = vld [vmem:[%s370 + $0x860] sm:$0xff]
        %v1362 = vld [vmem:[%s370 + $0x868] sm:$0xff]
        %v1363 = vld [vmem:[%s370 + $0x870] sm:$0xff]
        %v1364 = vld [vmem:[%s370 + $0x878] sm:$0xff]
        %v1365 = vld [vmem:[%s370 + $0x880] sm:$0xff]
        %v1366 = vld [vmem:[%s370 + $0x888] sm:$0xff]
        %v1367 = vld [vmem:[%s370 + $0x890] sm:$0xff]
        %v1368 = vld [vmem:[%s370 + $0x898] sm:$0xff]
        %v1369 = vld [vmem:[%s370 + $0x8a0] sm:$0xff]
        %v1370 = vld [vmem:[%s370 + $0x8a8] sm:$0xff]
        %v1371 = vld [vmem:[%s370 + $0x8b0] sm:$0xff]
        %v1372 = vld [vmem:[%s370 + $0x8b8] sm:$0xff]
        %v1373 = vld [vmem:[%s370 + $0x8c0] sm:$0xff]
        %v1374 = vld [vmem:[%s370 + $0x8c8] sm:$0xff]
        %v1375 = vld [vmem:[%s370 + $0x8d0] sm:$0xff]
        %v1376 = vld [vmem:[%s370 + $0x8d8] sm:$0xff]
        %v1377 = vld [vmem:[%s370 + $0x8e0] sm:$0xff]
        %v1378 = vld [vmem:[%s370 + $0x8e8] sm:$0xff]
        %v1379 = vld [vmem:[%s370 + $0x8f0] sm:$0xff]
        %v1380 = vld [vmem:[%s370 + $0x8f8] sm:$0xff]
        %v1381 = vld [vmem:[%s370 + $0x900] sm:$0xff]
        %v1382 = vld [vmem:[%s370 + $0x908] sm:$0xff]
        %v1383 = vld [vmem:[%s370 + $0x910] sm:$0xff]
        %v1384 = vld [vmem:[%s370 + $0x918] sm:$0xff]
        %v1385 = vld [vmem:[%s370 + $0x920] sm:$0xff]
        %v1386 = vld [vmem:[%s370 + $0x928] sm:$0xff]
        %v1387 = vld [vmem:[%s370 + $0x930] sm:$0xff]
        %v1388 = vld [vmem:[%s370 + $0x938] sm:$0xff]
        %v1389 = vld [vmem:[%s370 + $0x940] sm:$0xff]
        %v1390 = vld [vmem:[%s370 + $0x948] sm:$0xff]
        %v1391 = vld [vmem:[%s370 + $0x950] sm:$0xff]
        %v1392 = vld [vmem:[%s370 + $0x958] sm:$0xff]
        %v1393 = vld [vmem:[%s370 + $0x960] sm:$0xff]
        %v1394 = vld [vmem:[%s370 + $0x968] sm:$0xff]
        %v1395 = vld [vmem:[%s370 + $0x970] sm:$0xff]
        %v1396 = vld [vmem:[%s370 + $0x978] sm:$0xff]
        %v1397 = vld [vmem:[%s370 + $0x980] sm:$0xff]
        %v1398 = vld [vmem:[%s370 + $0x988] sm:$0xff]
        %v1399 = vld [vmem:[%s370 + $0x990] sm:$0xff]
        %v1400 = vld [vmem:[%s370 + $0x998] sm:$0xff]
        %v1401 = vld [vmem:[%s370 + $0x9a0] sm:$0xff]
        %v1402 = vld [vmem:[%s370 + $0x9a8] sm:$0xff]
        %v1403 = vld [vmem:[%s370 + $0x9b0] sm:$0xff]
        %v1404 = vld [vmem:[%s370 + $0x9b8] sm:$0xff]
        %v1405 = vld [vmem:[%s370 + $0x9c0] sm:$0xff]
        %v1406 = vld [vmem:[%s370 + $0x9c8] sm:$0xff]
        %v1407 = vld [vmem:[%s370 + $0x9d0] sm:$0xff]
        %v1408 = vld [vmem:[%s370 + $0x9d8] sm:$0xff]
        %v1409 = vld [vmem:[%s370 + $0x9e0] sm:$0xff]
        %v1410 = vld [vmem:[%s370 + $0x9e8] sm:$0xff]
        %v1411 = vld [vmem:[%s370 + $0x9f0] sm:$0xff]
        %v1412 = vld [vmem:[%s370 + $0x9f8] sm:$0xff]
        %v1413 = vld [vmem:[%s370 + $0xa00] sm:$0xff]
        %v1414 = vld [vmem:[%s370 + $0xa08] sm:$0xff]
        %v1415 = vld [vmem:[%s370 + $0xa10] sm:$0xff]
        %v1416 = vld [vmem:[%s370 + $0xa18] sm:$0xff]
        %v1417 = vld [vmem:[%s370 + $0xa20] sm:$0xff]
        %v1418 = vld [vmem:[%s370 + $0xa28] sm:$0xff]
        %v1419 = vld [vmem:[%s370 + $0xa30] sm:$0xff]
        %v1420 = vld [vmem:[%s370 + $0xa38] sm:$0xff]
        %v1421 = vld [vmem:[%s370 + $0xa40] sm:$0xff]
        %v1422 = vld [vmem:[%s370 + $0xa48] sm:$0xff]
        %v1423 = vld [vmem:[%s370 + $0xa50] sm:$0xff]
        %v1424 = vld [vmem:[%s370 + $0xa58] sm:$0xff]
        %v1425 = vld [vmem:[%s370 + $0xa60] sm:$0xff]
        %v1426 = vld [vmem:[%s370 + $0xa68] sm:$0xff]
        %v1427 = vld [vmem:[%s370 + $0xa70] sm:$0xff]
        %v1428 = vld [vmem:[%s370 + $0xa78] sm:$0xff]
        %v1429 = vld [vmem:[%s370 + $0xa80] sm:$0xff]
        %v1430 = vld [vmem:[%s370 + $0xa88] sm:$0xff]
        %v1431 = vld [vmem:[%s370 + $0xa90] sm:$0xff]
        %v1432 = vld [vmem:[%s370 + $0xa98] sm:$0xff]
        %v1433 = vld [vmem:[%s370 + $0xaa0] sm:$0xff]
        %v1434 = vld [vmem:[%s370 + $0xaa8] sm:$0xff]
        %v1435 = vld [vmem:[%s370 + $0xab0] sm:$0xff]
        %v1436 = vld [vmem:[%s370 + $0xab8] sm:$0xff]
        %v1437 = vld [vmem:[%s370 + $0xac0] sm:$0xff]
        %v1438 = vld [vmem:[%s370 + $0xac8] sm:$0xff]
        %v1439 = vld [vmem:[%s370 + $0xad0] sm:$0xff]
        %v1440 = vld [vmem:[%s370 + $0xad8] sm:$0xff]
        %v1441 = vld [vmem:[%s370 + $0xae0] sm:$0xff]
        %v1442 = vld [vmem:[%s370 + $0xae8] sm:$0xff]
        %v1443 = vld [vmem:[%s370 + $0xaf0] sm:$0xff]
        %v1444 = vld [vmem:[%s370 + $0xaf8] sm:$0xff]
        %v1445 = vld [vmem:[%s370 + $0xb00] sm:$0xff]
        %v1446 = vld [vmem:[%s370 + $0xb08] sm:$0xff]
        %v1447 = vld [vmem:[%s370 + $0xb10] sm:$0xff]
        %v1448 = vld [vmem:[%s370 + $0xb18] sm:$0xff]
        %v1449 = vld [vmem:[%s370 + $0xb20] sm:$0xff]
        %v1450 = vld [vmem:[%s370 + $0xb28] sm:$0xff]
        %v1451 = vld [vmem:[%s370 + $0xb30] sm:$0xff]
        %v1452 = vld [vmem:[%s370 + $0xb38] sm:$0xff]
        %v1453 = vld [vmem:[%s370 + $0xb40] sm:$0xff]
        %v1454 = vld [vmem:[%s370 + $0xb48] sm:$0xff]
        %v1455 = vld [vmem:[%s370 + $0xb50] sm:$0xff]
        %v1456 = vld [vmem:[%s370 + $0xb58] sm:$0xff]
        %v1457 = vld [vmem:[%s370 + $0xb60] sm:$0xff]
        %v1458 = vld [vmem:[%s370 + $0xb68] sm:$0xff]
        %v1459 = vld [vmem:[%s370 + $0xb70] sm:$0xff]
        %v1460 = vld [vmem:[%s370 + $0xb78] sm:$0xff]
        %v1461 = vld [vmem:[%s370 + $0xb80] sm:$0xff]
        %v1462 = vld [vmem:[%s370 + $0xb88] sm:$0xff]
        %v1463 = vld [vmem:[%s370 + $0xb90] sm:$0xff]
        %v1464 = vld [vmem:[%s370 + $0xb98] sm:$0xff]
        %v1465 = vld [vmem:[%s370 + $0xba0] sm:$0xff]
        %v1466 = vld [vmem:[%s370 + $0xba8] sm:$0xff]
        %v1467 = vld [vmem:[%s370 + $0xbb0] sm:$0xff]
        %v1468 = vld [vmem:[%s370 + $0xbb8] sm:$0xff]
        %v1469 = vld [vmem:[%s370 + $0xbc0] sm:$0xff]
        %v1470 = vld [vmem:[%s370 + $0xbc8] sm:$0xff]
        %v1471 = vld [vmem:[%s370 + $0xbd0] sm:$0xff]
        %v1472 = vld [vmem:[%s370 + $0xbd8] sm:$0xff]
        %v1473 = vld [vmem:[%s370 + $0xbe0] sm:$0xff]
        %v1474 = vld [vmem:[%s370 + $0xbe8] sm:$0xff]
        %v1475 = vld [vmem:[%s370 + $0xbf0] sm:$0xff]
        %v1476 = vld [vmem:[%s370 + $0xbf8] sm:$0xff]
        %v1477 = vld [vmem:[%s370 + $0xc00] sm:$0xff]
        %v1478 = vld [vmem:[%s370 + $0xc08] sm:$0xff]
        %v1479 = vld [vmem:[%s370 + $0xc10] sm:$0xff]
        %v1480 = vld [vmem:[%s370 + $0xc18] sm:$0xff]
        %v1481 = vld [vmem:[%s370 + $0xc20] sm:$0xff]
        %v1482 = vld [vmem:[%s370 + $0xc28] sm:$0xff]
        %v1483 = vld [vmem:[%s370 + $0xc30] sm:$0xff]
        %v1484 = vld [vmem:[%s370 + $0xc38] sm:$0xff]
        %v1485 = vld [vmem:[%s370 + $0xc40] sm:$0xff]
        %v1486 = vld [vmem:[%s370 + $0xc48] sm:$0xff]
        %v1487 = vld [vmem:[%s370 + $0xc50] sm:$0xff]
        %v1488 = vld [vmem:[%s370 + $0xc58] sm:$0xff]
        %v1489 = vld [vmem:[%s370 + $0xc60] sm:$0xff]
        %v1490 = vld [vmem:[%s370 + $0xc68] sm:$0xff]
        %v1491 = vld [vmem:[%s370 + $0xc70] sm:$0xff]
        %v1492 = vld [vmem:[%s370 + $0xc78] sm:$0xff]
        %v1493 = vld [vmem:[%s370 + $0xc80] sm:$0xff]
        %v1494 = vld [vmem:[%s370 + $0xc88] sm:$0xff]
        %v1495 = vld [vmem:[%s370 + $0xc90] sm:$0xff]
        %v1496 = vld [vmem:[%s370 + $0xc98] sm:$0xff]
        %v1497 = vld [vmem:[%s370 + $0xca0] sm:$0xff]
        %v1498 = vld [vmem:[%s370 + $0xca8] sm:$0xff]
        %v1499 = vld [vmem:[%s370 + $0xcb0] sm:$0xff]
        %v1500 = vld [vmem:[%s370 + $0xcb8] sm:$0xff]
        %v1501 = vld [vmem:[%s370 + $0xcc0] sm:$0xff]
        %v1502 = vld [vmem:[%s370 + $0xcc8] sm:$0xff]
        %v1503 = vld [vmem:[%s370 + $0xcd0] sm:$0xff]
        %v1504 = vld [vmem:[%s370 + $0xcd8] sm:$0xff]
        %v1505 = vld [vmem:[%s370 + $0xce0] sm:$0xff]
        %v1506 = vld [vmem:[%s370 + $0xce8] sm:$0xff]
        %v1507 = vld [vmem:[%s370 + $0xcf0] sm:$0xff]
        %v1508 = vld [vmem:[%s370 + $0xcf8] sm:$0xff]
        %v1509 = vld [vmem:[%s370 + $0xd00] sm:$0xff]
        %v1510 = vld [vmem:[%s370 + $0xd08] sm:$0xff]
        %v1511 = vld [vmem:[%s370 + $0xd10] sm:$0xff]
        %v1512 = vld [vmem:[%s370 + $0xd18] sm:$0xff]
        %v1513 = vld [vmem:[%s370 + $0xd20] sm:$0xff]
        %v1514 = vld [vmem:[%s370 + $0xd28] sm:$0xff]
        %v1515 = vld [vmem:[%s370 + $0xd30] sm:$0xff]
        %v1516 = vld [vmem:[%s370 + $0xd38] sm:$0xff]
        %v1517 = vld [vmem:[%s370 + $0xd40] sm:$0xff]
        %v1518 = vld [vmem:[%s370 + $0xd48] sm:$0xff]
        %v1519 = vld [vmem:[%s370 + $0xd50] sm:$0xff]
        %v1520 = vld [vmem:[%s370 + $0xd58] sm:$0xff]
        %v1521 = vld [vmem:[%s370 + $0xd60] sm:$0xff]
        %v1522 = vld [vmem:[%s370 + $0xd68] sm:$0xff]
        %v1523 = vld [vmem:[%s370 + $0xd70] sm:$0xff]
        %v1524 = vld [vmem:[%s370 + $0xd78] sm:$0xff]
        %v1525 = vld [vmem:[%s370 + $0xd80] sm:$0xff]
        %v1526 = vld [vmem:[%s370 + $0xd88] sm:$0xff]
        %v1527 = vld [vmem:[%s370 + $0xd90] sm:$0xff]
        %v1528 = vld [vmem:[%s370 + $0xd98] sm:$0xff]
        %v1529 = vld [vmem:[%s370 + $0xda0] sm:$0xff]
        %v1530 = vld [vmem:[%s370 + $0xda8] sm:$0xff]
        %v1531 = vld [vmem:[%s370 + $0xdb0] sm:$0xff]
        %v1532 = vld [vmem:[%s370 + $0xdb8] sm:$0xff]
        %v1533 = vld [vmem:[%s370 + $0xdc0] sm:$0xff]
        %v1534 = vld [vmem:[%s370 + $0xdc8] sm:$0xff]
        %v1535 = vld [vmem:[%s370 + $0xdd0] sm:$0xff]
        %v1536 = vld [vmem:[%s370 + $0xdd8] sm:$0xff]
        %v1537 = vld [vmem:[%s370 + $0xde0] sm:$0xff]
        %v1538 = vld [vmem:[%s370 + $0xde8] sm:$0xff]
        %v1539 = vld [vmem:[%s370 + $0xdf0] sm:$0xff]
        %v1540 = vld [vmem:[%s370 + $0xdf8] sm:$0xff]
        %v1541 = vld [vmem:[%s370 + $0xe00] sm:$0xff]
        %v1542 = vld [vmem:[%s370 + $0xe08] sm:$0xff]
        %v1543 = vld [vmem:[%s370 + $0xe10] sm:$0xff]
        %v1544 = vld [vmem:[%s370 + $0xe18] sm:$0xff]
        %v1545 = vld [vmem:[%s370 + $0xe20] sm:$0xff]
        %v1546 = vld [vmem:[%s370 + $0xe28] sm:$0xff]
        %v1547 = vld [vmem:[%s370 + $0xe30] sm:$0xff]
        %v1548 = vld [vmem:[%s370 + $0xe38] sm:$0xff]
        %v1549 = vld [vmem:[%s370 + $0xe40] sm:$0xff]
        %v1550 = vld [vmem:[%s370 + $0xe48] sm:$0xff]
        %v1551 = vld [vmem:[%s370 + $0xe50] sm:$0xff]
        %v1552 = vld [vmem:[%s370 + $0xe58] sm:$0xff]
        %v1553 = vld [vmem:[%s370 + $0xe60] sm:$0xff]
        %v1554 = vld [vmem:[%s370 + $0xe68] sm:$0xff]
        %v1555 = vld [vmem:[%s370 + $0xe70] sm:$0xff]
        %v1556 = vld [vmem:[%s370 + $0xe78] sm:$0xff]
        %v1557 = vld [vmem:[%s370 + $0xe80] sm:$0xff]
        %v1558 = vld [vmem:[%s370 + $0xe88] sm:$0xff]
        %v1559 = vld [vmem:[%s370 + $0xe90] sm:$0xff]
        %v1560 = vld [vmem:[%s370 + $0xe98] sm:$0xff]
        %v1561 = vld [vmem:[%s370 + $0xea0] sm:$0xff]
        %v1562 = vld [vmem:[%s370 + $0xea8] sm:$0xff]
        %v1563 = vld [vmem:[%s370 + $0xeb0] sm:$0xff]
        %v1564 = vld [vmem:[%s370 + $0xeb8] sm:$0xff]
        %v1565 = vld [vmem:[%s370 + $0xec0] sm:$0xff]
        %v1566 = vld [vmem:[%s370 + $0xec8] sm:$0xff]
        %v1567 = vld [vmem:[%s370 + $0xed0] sm:$0xff]
        %v1568 = vld [vmem:[%s370 + $0xed8] sm:$0xff]
        %v1569 = vld [vmem:[%s370 + $0xee0] sm:$0xff]
        %v1570 = vld [vmem:[%s370 + $0xee8] sm:$0xff]
        %v1571 = vld [vmem:[%s370 + $0xef0] sm:$0xff]
        %v1572 = vld [vmem:[%s370 + $0xef8] sm:$0xff]
        %v1573 = vld [vmem:[%s370 + $0xf00] sm:$0xff]
        %v1574 = vld [vmem:[%s370 + $0xf08] sm:$0xff]
        %v1575 = vld [vmem:[%s370 + $0xf10] sm:$0xff]
        %v1576 = vld [vmem:[%s370 + $0xf18] sm:$0xff]
        %v1577 = vld [vmem:[%s370 + $0xf20] sm:$0xff]
        %v1578 = vld [vmem:[%s370 + $0xf28] sm:$0xff]
        %v1579 = vld [vmem:[%s370 + $0xf30] sm:$0xff]
        %v1580 = vld [vmem:[%s370 + $0xf38] sm:$0xff]
        %v1581 = vld [vmem:[%s370 + $0xf40] sm:$0xff]
        %v1582 = vld [vmem:[%s370 + $0xf48] sm:$0xff]
        %v1583 = vld [vmem:[%s370 + $0xf50] sm:$0xff]
        %v1584 = vld [vmem:[%s370 + $0xf58] sm:$0xff]
        %v1585 = vld [vmem:[%s370 + $0xf60] sm:$0xff]
        %v1586 = vld [vmem:[%s370 + $0xf68] sm:$0xff]
        %v1587 = vld [vmem:[%s370 + $0xf70] sm:$0xff]
        %v1588 = vld [vmem:[%s370 + $0xf78] sm:$0xff]
        %v1589 = vld [vmem:[%s370 + $0xf80] sm:$0xff]
        %v1590 = vld [vmem:[%s370 + $0xf88] sm:$0xff]
        %v1591 = vld [vmem:[%s370 + $0xf90] sm:$0xff]
        %v1592 = vld [vmem:[%s370 + $0xf98] sm:$0xff]
        %v1593 = vld [vmem:[%s370 + $0xfa0] sm:$0xff]
        %v1594 = vld [vmem:[%s370 + $0xfa8] sm:$0xff]
        %v1595 = vld [vmem:[%s370 + $0xfb0] sm:$0xff]
        %v1596 = vld [vmem:[%s370 + $0xfb8] sm:$0xff]
        %v1597 = vld [vmem:[%s370 + $0xfc0] sm:$0xff]
        %v1598 = vld [vmem:[%s370 + $0xfc8] sm:$0xff]
        %v1599 = vld [vmem:[%s370 + $0xfd0] sm:$0xff]
        %v1600 = vld [vmem:[%s370 + $0xfd8] sm:$0xff]
        %v1601 = vld [vmem:[%s370 + $0xfe0] sm:$0xff]
        %v1602 = vld [vmem:[%s370 + $0xfe8] sm:$0xff]
        %v1603 = vld [vmem:[%s370 + $0xff0] sm:$0xff]
        %v1604 = vld [vmem:[%s370 + $0xff8] sm:$0xff]
        %v1605 = vld [vmem:[%s380] sm:$0xff]
        %v1606 = vld [vmem:[%s380 + $0x8] sm:$0xff]
        %v1609 = vperm.slane %v1605, 0
        %v1610 = vperm.slane %v1605, 1
        %v1611 = vperm.slane %v1605, 2
        %v1612 = vperm.slane %v1605, 3
        %v1613 = vperm.slane %v1605, 4
        %v1614 = vperm.slane %v1605, 5
        %v1615 = vperm.slane %v1605, 6
        %v1616 = vperm.slane %v1605, 7
        %v1617 = vperm.slane %v1606, 0
        %v1618 = vperm.slane %v1606, 1
        %v1619 = vperm.slane %v1606, 2
        %v1620 = vperm.slane %v1606, 3
        %v1621 = vperm.slane %v1606, 4
        %v1622 = vperm.slane %v1606, 5
        %v1623 = vperm.slane %v1606, 6
        %v1624 = vperm.slane %v1606, 7
        %v2153 = vunpack.c.l.b16 %v1093
        %v2154 = vunpack.c.h.b16 %v1093
        %v2155 = vunpack.c.l.b16 %v1094
        %v2156 = vunpack.c.h.b16 %v1094
        %v2157 = vunpack.c.l.b16 %v1095
        %v2158 = vunpack.c.h.b16 %v1095
        %v2159 = vunpack.c.l.b16 %v1096
        %v2160 = vunpack.c.h.b16 %v1096
        %v2161 = vunpack.c.l.b16 %v1097
        %v2162 = vunpack.c.h.b16 %v1097
        %v2163 = vunpack.c.l.b16 %v1098
        %v2164 = vunpack.c.h.b16 %v1098
        %v2165 = vunpack.c.l.b16 %v1099
        %v2166 = vunpack.c.h.b16 %v1099
        %v2167 = vunpack.c.l.b16 %v1100
        %v2168 = vunpack.c.h.b16 %v1100
        %v2169 = vunpack.c.l.b16 %v1101
        %v2170 = vunpack.c.h.b16 %v1101
        %v2171 = vunpack.c.l.b16 %v1102
        %v2172 = vunpack.c.h.b16 %v1102
        %v2173 = vunpack.c.l.b16 %v1103
        %v2174 = vunpack.c.h.b16 %v1103
        %v2175 = vunpack.c.l.b16 %v1104
        %v2176 = vunpack.c.h.b16 %v1104
        %v2177 = vunpack.c.l.b16 %v1105
        %v2178 = vunpack.c.h.b16 %v1105
        %v2179 = vunpack.c.l.b16 %v1106
        %v2180 = vunpack.c.h.b16 %v1106
        %v2181 = vunpack.c.l.b16 %v1107
        %v2182 = vunpack.c.h.b16 %v1107
        %v2183 = vunpack.c.l.b16 %v1108
        %v2184 = vunpack.c.h.b16 %v1108
        %v2185 = vunpack.c.l.b16 %v1109
        %v2186 = vunpack.c.h.b16 %v1109
        %v2187 = vunpack.c.l.b16 %v1110
        %v2188 = vunpack.c.h.b16 %v1110
        %v2189 = vunpack.c.l.b16 %v1111
        %v2190 = vunpack.c.h.b16 %v1111
        %v2191 = vunpack.c.l.b16 %v1112
        %v2192 = vunpack.c.h.b16 %v1112
        %v2193 = vunpack.c.l.b16 %v1113
        %v2194 = vunpack.c.h.b16 %v1113
        %v2195 = vunpack.c.l.b16 %v1114
        %v2196 = vunpack.c.h.b16 %v1114
        %v2197 = vunpack.c.l.b16 %v1115
        %v2198 = vunpack.c.h.b16 %v1115
        %v2199 = vunpack.c.l.b16 %v1116
        %v2200 = vunpack.c.h.b16 %v1116
        %v2201 = vunpack.c.l.b16 %v1117
        %v2202 = vunpack.c.h.b16 %v1117
        %v2203 = vunpack.c.l.b16 %v1118
        %v2204 = vunpack.c.h.b16 %v1118
        %v2205 = vunpack.c.l.b16 %v1119
        %v2206 = vunpack.c.h.b16 %v1119
        %v2207 = vunpack.c.l.b16 %v1120
        %v2208 = vunpack.c.h.b16 %v1120
        %v2209 = vunpack.c.l.b16 %v1121
        %v2210 = vunpack.c.h.b16 %v1121
        %v2211 = vunpack.c.l.b16 %v1122
        %v2212 = vunpack.c.h.b16 %v1122
        %v2213 = vunpack.c.l.b16 %v1123
        %v2214 = vunpack.c.h.b16 %v1123
        %v2215 = vunpack.c.l.b16 %v1124
        %v2216 = vunpack.c.h.b16 %v1124
        %v2217 = vunpack.c.l.b16 %v1125
        %v2218 = vunpack.c.h.b16 %v1125
        %v2219 = vunpack.c.l.b16 %v1126
        %v2220 = vunpack.c.h.b16 %v1126
        %v2221 = vunpack.c.l.b16 %v1127
        %v2222 = vunpack.c.h.b16 %v1127
        %v2223 = vunpack.c.l.b16 %v1128
        %v2224 = vunpack.c.h.b16 %v1128
        %v2225 = vunpack.c.l.b16 %v1129
        %v2226 = vunpack.c.h.b16 %v1129
        %v2227 = vunpack.c.l.b16 %v1130
        %v2228 = vunpack.c.h.b16 %v1130
        %v2229 = vunpack.c.l.b16 %v1131
        %v2230 = vunpack.c.h.b16 %v1131
        %v2231 = vunpack.c.l.b16 %v1132
        %v2232 = vunpack.c.h.b16 %v1132
        %v2233 = vunpack.c.l.b16 %v1133
        %v2234 = vunpack.c.h.b16 %v1133
        %v2235 = vunpack.c.l.b16 %v1134
        %v2236 = vunpack.c.h.b16 %v1134
        %v2237 = vunpack.c.l.b16 %v1135
        %v2238 = vunpack.c.h.b16 %v1135
        %v2239 = vunpack.c.l.b16 %v1136
        %v2240 = vunpack.c.h.b16 %v1136
        %v2241 = vunpack.c.l.b16 %v1137
        %v2242 = vunpack.c.h.b16 %v1137
        %v2243 = vunpack.c.l.b16 %v1138
        %v2244 = vunpack.c.h.b16 %v1138
        %v2245 = vunpack.c.l.b16 %v1139
        %v2246 = vunpack.c.h.b16 %v1139
        %v2247 = vunpack.c.l.b16 %v1140
        %v2248 = vunpack.c.h.b16 %v1140
        %v2249 = vunpack.c.l.b16 %v1141
        %v2250 = vunpack.c.h.b16 %v1141
        %v2251 = vunpack.c.l.b16 %v1142
        %v2252 = vunpack.c.h.b16 %v1142
        %v2253 = vunpack.c.l.b16 %v1143
        %v2254 = vunpack.c.h.b16 %v1143
        %v2255 = vunpack.c.l.b16 %v1144
        %v2256 = vunpack.c.h.b16 %v1144
        %v2257 = vunpack.c.l.b16 %v1145
        %v2258 = vunpack.c.h.b16 %v1145
        %v2259 = vunpack.c.l.b16 %v1146
        %v2260 = vunpack.c.h.b16 %v1146
        %v2261 = vunpack.c.l.b16 %v1147
        %v2262 = vunpack.c.h.b16 %v1147
        %v2263 = vunpack.c.l.b16 %v1148
        %v2264 = vunpack.c.h.b16 %v1148
        %v2265 = vunpack.c.l.b16 %v1149
        %v2266 = vunpack.c.h.b16 %v1149
        %v2267 = vunpack.c.l.b16 %v1150
        %v2268 = vunpack.c.h.b16 %v1150
        %v2269 = vunpack.c.l.b16 %v1151
        %v2270 = vunpack.c.h.b16 %v1151
        %v2271 = vunpack.c.l.b16 %v1152
        %v2272 = vunpack.c.h.b16 %v1152
        %v2273 = vunpack.c.l.b16 %v1153
        %v2274 = vunpack.c.h.b16 %v1153
        %v2275 = vunpack.c.l.b16 %v1154
        %v2276 = vunpack.c.h.b16 %v1154
        %v2277 = vunpack.c.l.b16 %v1155
        %v2278 = vunpack.c.h.b16 %v1155
        %v2279 = vunpack.c.l.b16 %v1156
        %v2280 = vunpack.c.h.b16 %v1156
        %v2281 = vunpack.c.l.b16 %v1157
        %v2282 = vunpack.c.h.b16 %v1157
        %v2283 = vunpack.c.l.b16 %v1158
        %v2284 = vunpack.c.h.b16 %v1158
        %v2285 = vunpack.c.l.b16 %v1159
        %v2286 = vunpack.c.h.b16 %v1159
        %v2287 = vunpack.c.l.b16 %v1160
        %v2288 = vunpack.c.h.b16 %v1160
        %v2289 = vunpack.c.l.b16 %v1161
        %v2290 = vunpack.c.h.b16 %v1161
        %v2291 = vunpack.c.l.b16 %v1162
        %v2292 = vunpack.c.h.b16 %v1162
        %v2293 = vunpack.c.l.b16 %v1163
        %v2294 = vunpack.c.h.b16 %v1163
        %v2295 = vunpack.c.l.b16 %v1164
        %v2296 = vunpack.c.h.b16 %v1164
        %v2297 = vunpack.c.l.b16 %v1165
        %v2298 = vunpack.c.h.b16 %v1165
        %v2299 = vunpack.c.l.b16 %v1166
        %v2300 = vunpack.c.h.b16 %v1166
        %v2301 = vunpack.c.l.b16 %v1167
        %v2302 = vunpack.c.h.b16 %v1167
        %v2303 = vunpack.c.l.b16 %v1168
        %v2304 = vunpack.c.h.b16 %v1168
        %v2305 = vunpack.c.l.b16 %v1169
        %v2306 = vunpack.c.h.b16 %v1169
        %v2307 = vunpack.c.l.b16 %v1170
        %v2308 = vunpack.c.h.b16 %v1170
        %v2309 = vunpack.c.l.b16 %v1171
        %v2310 = vunpack.c.h.b16 %v1171
        %v2311 = vunpack.c.l.b16 %v1172
        %v2312 = vunpack.c.h.b16 %v1172
        %v2313 = vunpack.c.l.b16 %v1173
        %v2314 = vunpack.c.h.b16 %v1173
        %v2315 = vunpack.c.l.b16 %v1174
        %v2316 = vunpack.c.h.b16 %v1174
        %v2317 = vunpack.c.l.b16 %v1175
        %v2318 = vunpack.c.h.b16 %v1175
        %v2319 = vunpack.c.l.b16 %v1176
        %v2320 = vunpack.c.h.b16 %v1176
        %v2321 = vunpack.c.l.b16 %v1177
        %v2322 = vunpack.c.h.b16 %v1177
        %v2323 = vunpack.c.l.b16 %v1178
        %v2324 = vunpack.c.h.b16 %v1178
        %v2325 = vunpack.c.l.b16 %v1179
        %v2326 = vunpack.c.h.b16 %v1179
        %v2327 = vunpack.c.l.b16 %v1180
        %v2328 = vunpack.c.h.b16 %v1180
        %v2329 = vunpack.c.l.b16 %v1181
        %v2330 = vunpack.c.h.b16 %v1181
        %v2331 = vunpack.c.l.b16 %v1182
        %v2332 = vunpack.c.h.b16 %v1182
        %v2333 = vunpack.c.l.b16 %v1183
        %v2334 = vunpack.c.h.b16 %v1183
        %v2335 = vunpack.c.l.b16 %v1184
        %v2336 = vunpack.c.h.b16 %v1184
        %v2337 = vunpack.c.l.b16 %v1185
        %v2338 = vunpack.c.h.b16 %v1185
        %v2339 = vunpack.c.l.b16 %v1186
        %v2340 = vunpack.c.h.b16 %v1186
        %v2341 = vunpack.c.l.b16 %v1187
        %v2342 = vunpack.c.h.b16 %v1187
        %v2343 = vunpack.c.l.b16 %v1188
        %v2344 = vunpack.c.h.b16 %v1188
        %v2345 = vunpack.c.l.b16 %v1189
        %v2346 = vunpack.c.h.b16 %v1189
        %v2347 = vunpack.c.l.b16 %v1190
        %v2348 = vunpack.c.h.b16 %v1190
        %v2349 = vunpack.c.l.b16 %v1191
        %v2350 = vunpack.c.h.b16 %v1191
        %v2351 = vunpack.c.l.b16 %v1192
        %v2352 = vunpack.c.h.b16 %v1192
        %v2353 = vunpack.c.l.b16 %v1193
        %v2354 = vunpack.c.h.b16 %v1193
        %v2355 = vunpack.c.l.b16 %v1194
        %v2356 = vunpack.c.h.b16 %v1194
        %v2357 = vunpack.c.l.b16 %v1195
        %v2358 = vunpack.c.h.b16 %v1195
        %v2359 = vunpack.c.l.b16 %v1196
        %v2360 = vunpack.c.h.b16 %v1196
        %v2361 = vunpack.c.l.b16 %v1197
        %v2362 = vunpack.c.h.b16 %v1197
        %v2363 = vunpack.c.l.b16 %v1198
        %v2364 = vunpack.c.h.b16 %v1198
        %v2365 = vunpack.c.l.b16 %v1199
        %v2366 = vunpack.c.h.b16 %v1199
        %v2367 = vunpack.c.l.b16 %v1200
        %v2368 = vunpack.c.h.b16 %v1200
        %v2369 = vunpack.c.l.b16 %v1201
        %v2370 = vunpack.c.h.b16 %v1201
        %v2371 = vunpack.c.l.b16 %v1202
        %v2372 = vunpack.c.h.b16 %v1202
        %v2373 = vunpack.c.l.b16 %v1203
        %v2374 = vunpack.c.h.b16 %v1203
        %v2375 = vunpack.c.l.b16 %v1204
        %v2376 = vunpack.c.h.b16 %v1204
        %v2377 = vunpack.c.l.b16 %v1205
        %v2378 = vunpack.c.h.b16 %v1205
        %v2379 = vunpack.c.l.b16 %v1206
        %v2380 = vunpack.c.h.b16 %v1206
        %v2381 = vunpack.c.l.b16 %v1207
        %v2382 = vunpack.c.h.b16 %v1207
        %v2383 = vunpack.c.l.b16 %v1208
        %v2384 = vunpack.c.h.b16 %v1208
        %v2385 = vunpack.c.l.b16 %v1209
        %v2386 = vunpack.c.h.b16 %v1209
        %v2387 = vunpack.c.l.b16 %v1210
        %v2388 = vunpack.c.h.b16 %v1210
        %v2389 = vunpack.c.l.b16 %v1211
        %v2390 = vunpack.c.h.b16 %v1211
        %v2391 = vunpack.c.l.b16 %v1212
        %v2392 = vunpack.c.h.b16 %v1212
        %v2393 = vunpack.c.l.b16 %v1213
        %v2394 = vunpack.c.h.b16 %v1213
        %v2395 = vunpack.c.l.b16 %v1214
        %v2396 = vunpack.c.h.b16 %v1214
        %v2397 = vunpack.c.l.b16 %v1215
        %v2398 = vunpack.c.h.b16 %v1215
        %v2399 = vunpack.c.l.b16 %v1216
        %v2400 = vunpack.c.h.b16 %v1216
        %v2401 = vunpack.c.l.b16 %v1217
        %v2402 = vunpack.c.h.b16 %v1217
        %v2403 = vunpack.c.l.b16 %v1218
        %v2404 = vunpack.c.h.b16 %v1218
        %v2405 = vunpack.c.l.b16 %v1219
        %v2406 = vunpack.c.h.b16 %v1219
        %v2407 = vunpack.c.l.b16 %v1220
        %v2408 = vunpack.c.h.b16 %v1220
        %v2409 = vunpack.c.l.b16 %v1221
        %v2410 = vunpack.c.h.b16 %v1221
        %v2411 = vunpack.c.l.b16 %v1222
        %v2412 = vunpack.c.h.b16 %v1222
        %v2413 = vunpack.c.l.b16 %v1223
        %v2414 = vunpack.c.h.b16 %v1223
        %v2415 = vunpack.c.l.b16 %v1224
        %v2416 = vunpack.c.h.b16 %v1224
        %v2417 = vunpack.c.l.b16 %v1225
        %v2418 = vunpack.c.h.b16 %v1225
        %v2419 = vunpack.c.l.b16 %v1226
        %v2420 = vunpack.c.h.b16 %v1226
        %v2421 = vunpack.c.l.b16 %v1227
        %v2422 = vunpack.c.h.b16 %v1227
        %v2423 = vunpack.c.l.b16 %v1228
        %v2424 = vunpack.c.h.b16 %v1228
        %v2425 = vunpack.c.l.b16 %v1229
        %v2426 = vunpack.c.h.b16 %v1229
        %v2427 = vunpack.c.l.b16 %v1230
        %v2428 = vunpack.c.h.b16 %v1230
        %v2429 = vunpack.c.l.b16 %v1231
        %v2430 = vunpack.c.h.b16 %v1231
        %v2431 = vunpack.c.l.b16 %v1232
        %v2432 = vunpack.c.h.b16 %v1232
        %v2433 = vunpack.c.l.b16 %v1233
        %v2434 = vunpack.c.h.b16 %v1233
        %v2435 = vunpack.c.l.b16 %v1234
        %v2436 = vunpack.c.h.b16 %v1234
        %v2437 = vunpack.c.l.b16 %v1235
        %v2438 = vunpack.c.h.b16 %v1235
        %v2439 = vunpack.c.l.b16 %v1236
        %v2440 = vunpack.c.h.b16 %v1236
        %v2441 = vunpack.c.l.b16 %v1237
        %v2442 = vunpack.c.h.b16 %v1237
        %v2443 = vunpack.c.l.b16 %v1238
        %v2444 = vunpack.c.h.b16 %v1238
        %v2445 = vunpack.c.l.b16 %v1239
        %v2446 = vunpack.c.h.b16 %v1239
        %v2447 = vunpack.c.l.b16 %v1240
        %v2448 = vunpack.c.h.b16 %v1240
        %v2449 = vunpack.c.l.b16 %v1241
        %v2450 = vunpack.c.h.b16 %v1241
        %v2451 = vunpack.c.l.b16 %v1242
        %v2452 = vunpack.c.h.b16 %v1242
        %v2453 = vunpack.c.l.b16 %v1243
        %v2454 = vunpack.c.h.b16 %v1243
        %v2455 = vunpack.c.l.b16 %v1244
        %v2456 = vunpack.c.h.b16 %v1244
        %v2457 = vunpack.c.l.b16 %v1245
        %v2458 = vunpack.c.h.b16 %v1245
        %v2459 = vunpack.c.l.b16 %v1246
        %v2460 = vunpack.c.h.b16 %v1246
        %v2461 = vunpack.c.l.b16 %v1247
        %v2462 = vunpack.c.h.b16 %v1247
        %v2463 = vunpack.c.l.b16 %v1248
        %v2464 = vunpack.c.h.b16 %v1248
        %v2465 = vunpack.c.l.b16 %v1249
        %v2466 = vunpack.c.h.b16 %v1249
        %v2467 = vunpack.c.l.b16 %v1250
        %v2468 = vunpack.c.h.b16 %v1250
        %v2469 = vunpack.c.l.b16 %v1251
        %v2470 = vunpack.c.h.b16 %v1251
        %v2471 = vunpack.c.l.b16 %v1252
        %v2472 = vunpack.c.h.b16 %v1252
        %v2473 = vunpack.c.l.b16 %v1253
        %v2474 = vunpack.c.h.b16 %v1253
        %v2475 = vunpack.c.l.b16 %v1254
        %v2476 = vunpack.c.h.b16 %v1254
        %v2477 = vunpack.c.l.b16 %v1255
        %v2478 = vunpack.c.h.b16 %v1255
        %v2479 = vunpack.c.l.b16 %v1256
        %v2480 = vunpack.c.h.b16 %v1256
        %v2481 = vunpack.c.l.b16 %v1257
        %v2482 = vunpack.c.h.b16 %v1257
        %v2483 = vunpack.c.l.b16 %v1258
        %v2484 = vunpack.c.h.b16 %v1258
        %v2485 = vunpack.c.l.b16 %v1259
        %v2486 = vunpack.c.h.b16 %v1259
        %v2487 = vunpack.c.l.b16 %v1260
        %v2488 = vunpack.c.h.b16 %v1260
        %v2489 = vunpack.c.l.b16 %v1261
        %v2490 = vunpack.c.h.b16 %v1261
        %v2491 = vunpack.c.l.b16 %v1262
        %v2492 = vunpack.c.h.b16 %v1262
        %v2493 = vunpack.c.l.b16 %v1263
        %v2494 = vunpack.c.h.b16 %v1263
        %v2495 = vunpack.c.l.b16 %v1264
        %v2496 = vunpack.c.h.b16 %v1264
        %v2497 = vunpack.c.l.b16 %v1265
        %v2498 = vunpack.c.h.b16 %v1265
        %v2499 = vunpack.c.l.b16 %v1266
        %v2500 = vunpack.c.h.b16 %v1266
        %v2501 = vunpack.c.l.b16 %v1267
        %v2502 = vunpack.c.h.b16 %v1267
        %v2503 = vunpack.c.l.b16 %v1268
        %v2504 = vunpack.c.h.b16 %v1268
        %v2505 = vunpack.c.l.b16 %v1269
        %v2506 = vunpack.c.h.b16 %v1269
        %v2507 = vunpack.c.l.b16 %v1270
        %v2508 = vunpack.c.h.b16 %v1270
        %v2509 = vunpack.c.l.b16 %v1271
        %v2510 = vunpack.c.h.b16 %v1271
        %v2511 = vunpack.c.l.b16 %v1272
        %v2512 = vunpack.c.h.b16 %v1272
        %v2513 = vunpack.c.l.b16 %v1273
        %v2514 = vunpack.c.h.b16 %v1273
        %v2515 = vunpack.c.l.b16 %v1274
        %v2516 = vunpack.c.h.b16 %v1274
        %v2517 = vunpack.c.l.b16 %v1275
        %v2518 = vunpack.c.h.b16 %v1275
        %v2519 = vunpack.c.l.b16 %v1276
        %v2520 = vunpack.c.h.b16 %v1276
        %v2521 = vunpack.c.l.b16 %v1277
        %v2522 = vunpack.c.h.b16 %v1277
        %v2523 = vunpack.c.l.b16 %v1278
        %v2524 = vunpack.c.h.b16 %v1278
        %v2525 = vunpack.c.l.b16 %v1279
        %v2526 = vunpack.c.h.b16 %v1279
        %v2527 = vunpack.c.l.b16 %v1280
        %v2528 = vunpack.c.h.b16 %v1280
        %v2529 = vunpack.c.l.b16 %v1281
        %v2530 = vunpack.c.h.b16 %v1281
        %v2531 = vunpack.c.l.b16 %v1282
        %v2532 = vunpack.c.h.b16 %v1282
        %v2533 = vunpack.c.l.b16 %v1283
        %v2534 = vunpack.c.h.b16 %v1283
        %v2535 = vunpack.c.l.b16 %v1284
        %v2536 = vunpack.c.h.b16 %v1284
        %v2537 = vunpack.c.l.b16 %v1285
        %v2538 = vunpack.c.h.b16 %v1285
        %v2539 = vunpack.c.l.b16 %v1286
        %v2540 = vunpack.c.h.b16 %v1286
        %v2541 = vunpack.c.l.b16 %v1287
        %v2542 = vunpack.c.h.b16 %v1287
        %v2543 = vunpack.c.l.b16 %v1288
        %v2544 = vunpack.c.h.b16 %v1288
        %v2545 = vunpack.c.l.b16 %v1289
        %v2546 = vunpack.c.h.b16 %v1289
        %v2547 = vunpack.c.l.b16 %v1290
        %v2548 = vunpack.c.h.b16 %v1290
        %v2549 = vunpack.c.l.b16 %v1291
        %v2550 = vunpack.c.h.b16 %v1291
        %v2551 = vunpack.c.l.b16 %v1292
        %v2552 = vunpack.c.h.b16 %v1292
        %v2553 = vunpack.c.l.b16 %v1293
        %v2554 = vunpack.c.h.b16 %v1293
        %v2555 = vunpack.c.l.b16 %v1294
        %v2556 = vunpack.c.h.b16 %v1294
        %v2557 = vunpack.c.l.b16 %v1295
        %v2558 = vunpack.c.h.b16 %v1295
        %v2559 = vunpack.c.l.b16 %v1296
        %v2560 = vunpack.c.h.b16 %v1296
        %v2561 = vunpack.c.l.b16 %v1297
        %v2562 = vunpack.c.h.b16 %v1297
        %v2563 = vunpack.c.l.b16 %v1298
        %v2564 = vunpack.c.h.b16 %v1298
        %v2565 = vunpack.c.l.b16 %v1299
        %v2566 = vunpack.c.h.b16 %v1299
        %v2567 = vunpack.c.l.b16 %v1300
        %v2568 = vunpack.c.h.b16 %v1300
        %v2569 = vunpack.c.l.b16 %v1301
        %v2570 = vunpack.c.h.b16 %v1301
        %v2571 = vunpack.c.l.b16 %v1302
        %v2572 = vunpack.c.h.b16 %v1302
        %v2573 = vunpack.c.l.b16 %v1303
        %v2574 = vunpack.c.h.b16 %v1303
        %v2575 = vunpack.c.l.b16 %v1304
        %v2576 = vunpack.c.h.b16 %v1304
        %v2577 = vunpack.c.l.b16 %v1305
        %v2578 = vunpack.c.h.b16 %v1305
        %v2579 = vunpack.c.l.b16 %v1306
        %v2580 = vunpack.c.h.b16 %v1306
        %v2581 = vunpack.c.l.b16 %v1307
        %v2582 = vunpack.c.h.b16 %v1307
        %v2583 = vunpack.c.l.b16 %v1308
        %v2584 = vunpack.c.h.b16 %v1308
        %v2585 = vunpack.c.l.b16 %v1309
        %v2586 = vunpack.c.h.b16 %v1309
        %v2587 = vunpack.c.l.b16 %v1310
        %v2588 = vunpack.c.h.b16 %v1310
        %v2589 = vunpack.c.l.b16 %v1311
        %v2590 = vunpack.c.h.b16 %v1311
        %v2591 = vunpack.c.l.b16 %v1312
        %v2592 = vunpack.c.h.b16 %v1312
        %v2593 = vunpack.c.l.b16 %v1313
        %v2594 = vunpack.c.h.b16 %v1313
        %v2595 = vunpack.c.l.b16 %v1314
        %v2596 = vunpack.c.h.b16 %v1314
        %v2597 = vunpack.c.l.b16 %v1315
        %v2598 = vunpack.c.h.b16 %v1315
        %v2599 = vunpack.c.l.b16 %v1316
        %v2600 = vunpack.c.h.b16 %v1316
        %v2601 = vunpack.c.l.b16 %v1317
        %v2602 = vunpack.c.h.b16 %v1317
        %v2603 = vunpack.c.l.b16 %v1318
        %v2604 = vunpack.c.h.b16 %v1318
        %v2605 = vunpack.c.l.b16 %v1319
        %v2606 = vunpack.c.h.b16 %v1319
        %v2607 = vunpack.c.l.b16 %v1320
        %v2608 = vunpack.c.h.b16 %v1320
        %v2609 = vunpack.c.l.b16 %v1321
        %v2610 = vunpack.c.h.b16 %v1321
        %v2611 = vunpack.c.l.b16 %v1322
        %v2612 = vunpack.c.h.b16 %v1322
        %v2613 = vunpack.c.l.b16 %v1323
        %v2614 = vunpack.c.h.b16 %v1323
        %v2615 = vunpack.c.l.b16 %v1324
        %v2616 = vunpack.c.h.b16 %v1324
        %v2617 = vunpack.c.l.b16 %v1325
        %v2618 = vunpack.c.h.b16 %v1325
        %v2619 = vunpack.c.l.b16 %v1326
        %v2620 = vunpack.c.h.b16 %v1326
        %v2621 = vunpack.c.l.b16 %v1327
        %v2622 = vunpack.c.h.b16 %v1327
        %v2623 = vunpack.c.l.b16 %v1328
        %v2624 = vunpack.c.h.b16 %v1328
        %v2625 = vunpack.c.l.b16 %v1329
        %v2626 = vunpack.c.h.b16 %v1329
        %v2627 = vunpack.c.l.b16 %v1330
        %v2628 = vunpack.c.h.b16 %v1330
        %v2629 = vunpack.c.l.b16 %v1331
        %v2630 = vunpack.c.h.b16 %v1331
        %v2631 = vunpack.c.l.b16 %v1332
        %v2632 = vunpack.c.h.b16 %v1332
        %v2633 = vunpack.c.l.b16 %v1333
        %v2634 = vunpack.c.h.b16 %v1333
        %v2635 = vunpack.c.l.b16 %v1334
        %v2636 = vunpack.c.h.b16 %v1334
        %v2637 = vunpack.c.l.b16 %v1335
        %v2638 = vunpack.c.h.b16 %v1335
        %v2639 = vunpack.c.l.b16 %v1336
        %v2640 = vunpack.c.h.b16 %v1336
        %v2641 = vunpack.c.l.b16 %v1337
        %v2642 = vunpack.c.h.b16 %v1337
        %v2643 = vunpack.c.l.b16 %v1338
        %v2644 = vunpack.c.h.b16 %v1338
        %v2645 = vunpack.c.l.b16 %v1339
        %v2646 = vunpack.c.h.b16 %v1339
        %v2647 = vunpack.c.l.b16 %v1340
        %v2648 = vunpack.c.h.b16 %v1340
        %v2649 = vunpack.c.l.b16 %v1341
        %v2650 = vunpack.c.h.b16 %v1341
        %v2651 = vunpack.c.l.b16 %v1342
        %v2652 = vunpack.c.h.b16 %v1342
        %v2653 = vunpack.c.l.b16 %v1343
        %v2654 = vunpack.c.h.b16 %v1343
        %v2655 = vunpack.c.l.b16 %v1344
        %v2656 = vunpack.c.h.b16 %v1344
        %v2657 = vunpack.c.l.b16 %v1345
        %v2658 = vunpack.c.h.b16 %v1345
        %v2659 = vunpack.c.l.b16 %v1346
        %v2660 = vunpack.c.h.b16 %v1346
        %v2661 = vunpack.c.l.b16 %v1347
        %v2662 = vunpack.c.h.b16 %v1347
        %v2663 = vunpack.c.l.b16 %v1348
        %v2664 = vunpack.c.h.b16 %v1348
        %v2665 = vunpack.c.l.b16 %v1349
        %v2666 = vunpack.c.h.b16 %v1349
        %v2667 = vunpack.c.l.b16 %v1350
        %v2668 = vunpack.c.h.b16 %v1350
        %v2669 = vunpack.c.l.b16 %v1351
        %v2670 = vunpack.c.h.b16 %v1351
        %v2671 = vunpack.c.l.b16 %v1352
        %v2672 = vunpack.c.h.b16 %v1352
        %v2673 = vunpack.c.l.b16 %v1353
        %v2674 = vunpack.c.h.b16 %v1353
        %v2675 = vunpack.c.l.b16 %v1354
        %v2676 = vunpack.c.h.b16 %v1354
        %v2677 = vunpack.c.l.b16 %v1355
        %v2678 = vunpack.c.h.b16 %v1355
        %v2679 = vunpack.c.l.b16 %v1356
        %v2680 = vunpack.c.h.b16 %v1356
        %v2681 = vunpack.c.l.b16 %v1357
        %v2682 = vunpack.c.h.b16 %v1357
        %v2683 = vunpack.c.l.b16 %v1358
        %v2684 = vunpack.c.h.b16 %v1358
        %v2685 = vunpack.c.l.b16 %v1359
        %v2686 = vunpack.c.h.b16 %v1359
        %v2687 = vunpack.c.l.b16 %v1360
        %v2688 = vunpack.c.h.b16 %v1360
        %v2689 = vunpack.c.l.b16 %v1361
        %v2690 = vunpack.c.h.b16 %v1361
        %v2691 = vunpack.c.l.b16 %v1362
        %v2692 = vunpack.c.h.b16 %v1362
        %v2693 = vunpack.c.l.b16 %v1363
        %v2694 = vunpack.c.h.b16 %v1363
        %v2695 = vunpack.c.l.b16 %v1364
        %v2696 = vunpack.c.h.b16 %v1364
        %v2697 = vunpack.c.l.b16 %v1365
        %v2698 = vunpack.c.h.b16 %v1365
        %v2699 = vunpack.c.l.b16 %v1366
        %v2700 = vunpack.c.h.b16 %v1366
        %v2701 = vunpack.c.l.b16 %v1367
        %v2702 = vunpack.c.h.b16 %v1367
        %v2703 = vunpack.c.l.b16 %v1368
        %v2704 = vunpack.c.h.b16 %v1368
        %v2705 = vunpack.c.l.b16 %v1369
        %v2706 = vunpack.c.h.b16 %v1369
        %v2707 = vunpack.c.l.b16 %v1370
        %v2708 = vunpack.c.h.b16 %v1370
        %v2709 = vunpack.c.l.b16 %v1371
        %v2710 = vunpack.c.h.b16 %v1371
        %v2711 = vunpack.c.l.b16 %v1372
        %v2712 = vunpack.c.h.b16 %v1372
        %v2713 = vunpack.c.l.b16 %v1373
        %v2714 = vunpack.c.h.b16 %v1373
        %v2715 = vunpack.c.l.b16 %v1374
        %v2716 = vunpack.c.h.b16 %v1374
        %v2717 = vunpack.c.l.b16 %v1375
        %v2718 = vunpack.c.h.b16 %v1375
        %v2719 = vunpack.c.l.b16 %v1376
        %v2720 = vunpack.c.h.b16 %v1376
        %v2721 = vunpack.c.l.b16 %v1377
        %v2722 = vunpack.c.h.b16 %v1377
        %v2723 = vunpack.c.l.b16 %v1378
        %v2724 = vunpack.c.h.b16 %v1378
        %v2725 = vunpack.c.l.b16 %v1379
        %v2726 = vunpack.c.h.b16 %v1379
        %v2727 = vunpack.c.l.b16 %v1380
        %v2728 = vunpack.c.h.b16 %v1380
        %v2729 = vunpack.c.l.b16 %v1381
        %v2730 = vunpack.c.h.b16 %v1381
        %v2731 = vunpack.c.l.b16 %v1382
        %v2732 = vunpack.c.h.b16 %v1382
        %v2733 = vunpack.c.l.b16 %v1383
        %v2734 = vunpack.c.h.b16 %v1383
        %v2735 = vunpack.c.l.b16 %v1384
        %v2736 = vunpack.c.h.b16 %v1384
        %v2737 = vunpack.c.l.b16 %v1385
        %v2738 = vunpack.c.h.b16 %v1385
        %v2739 = vunpack.c.l.b16 %v1386
        %v2740 = vunpack.c.h.b16 %v1386
        %v2741 = vunpack.c.l.b16 %v1387
        %v2742 = vunpack.c.h.b16 %v1387
        %v2743 = vunpack.c.l.b16 %v1388
        %v2744 = vunpack.c.h.b16 %v1388
        %v2745 = vunpack.c.l.b16 %v1389
        %v2746 = vunpack.c.h.b16 %v1389
        %v2747 = vunpack.c.l.b16 %v1390
        %v2748 = vunpack.c.h.b16 %v1390
        %v2749 = vunpack.c.l.b16 %v1391
        %v2750 = vunpack.c.h.b16 %v1391
        %v2751 = vunpack.c.l.b16 %v1392
        %v2752 = vunpack.c.h.b16 %v1392
        %v2753 = vunpack.c.l.b16 %v1393
        %v2754 = vunpack.c.h.b16 %v1393
        %v2755 = vunpack.c.l.b16 %v1394
        %v2756 = vunpack.c.h.b16 %v1394
        %v2757 = vunpack.c.l.b16 %v1395
        %v2758 = vunpack.c.h.b16 %v1395
        %v2759 = vunpack.c.l.b16 %v1396
        %v2760 = vunpack.c.h.b16 %v1396
        %v2761 = vunpack.c.l.b16 %v1397
        %v2762 = vunpack.c.h.b16 %v1397
        %v2763 = vunpack.c.l.b16 %v1398
        %v2764 = vunpack.c.h.b16 %v1398
        %v2765 = vunpack.c.l.b16 %v1399
        %v2766 = vunpack.c.h.b16 %v1399
        %v2767 = vunpack.c.l.b16 %v1400
        %v2768 = vunpack.c.h.b16 %v1400
        %v2769 = vunpack.c.l.b16 %v1401
        %v2770 = vunpack.c.h.b16 %v1401
        %v2771 = vunpack.c.l.b16 %v1402
        %v2772 = vunpack.c.h.b16 %v1402
        %v2773 = vunpack.c.l.b16 %v1403
        %v2774 = vunpack.c.h.b16 %v1403
        %v2775 = vunpack.c.l.b16 %v1404
        %v2776 = vunpack.c.h.b16 %v1404
        %v2777 = vunpack.c.l.b16 %v1405
        %v2778 = vunpack.c.h.b16 %v1405
        %v2779 = vunpack.c.l.b16 %v1406
        %v2780 = vunpack.c.h.b16 %v1406
        %v2781 = vunpack.c.l.b16 %v1407
        %v2782 = vunpack.c.h.b16 %v1407
        %v2783 = vunpack.c.l.b16 %v1408
        %v2784 = vunpack.c.h.b16 %v1408
        %v2785 = vunpack.c.l.b16 %v1409
        %v2786 = vunpack.c.h.b16 %v1409
        %v2787 = vunpack.c.l.b16 %v1410
        %v2788 = vunpack.c.h.b16 %v1410
        %v2789 = vunpack.c.l.b16 %v1411
        %v2790 = vunpack.c.h.b16 %v1411
        %v2791 = vunpack.c.l.b16 %v1412
        %v2792 = vunpack.c.h.b16 %v1412
        %v2793 = vunpack.c.l.b16 %v1413
        %v2794 = vunpack.c.h.b16 %v1413
        %v2795 = vunpack.c.l.b16 %v1414
        %v2796 = vunpack.c.h.b16 %v1414
        %v2797 = vunpack.c.l.b16 %v1415
        %v2798 = vunpack.c.h.b16 %v1415
        %v2799 = vunpack.c.l.b16 %v1416
        %v2800 = vunpack.c.h.b16 %v1416
        %v2801 = vunpack.c.l.b16 %v1417
        %v2802 = vunpack.c.h.b16 %v1417
        %v2803 = vunpack.c.l.b16 %v1418
        %v2804 = vunpack.c.h.b16 %v1418
        %v2805 = vunpack.c.l.b16 %v1419
        %v2806 = vunpack.c.h.b16 %v1419
        %v2807 = vunpack.c.l.b16 %v1420
        %v2808 = vunpack.c.h.b16 %v1420
        %v2809 = vunpack.c.l.b16 %v1421
        %v2810 = vunpack.c.h.b16 %v1421
        %v2811 = vunpack.c.l.b16 %v1422
        %v2812 = vunpack.c.h.b16 %v1422
        %v2813 = vunpack.c.l.b16 %v1423
        %v2814 = vunpack.c.h.b16 %v1423
        %v2815 = vunpack.c.l.b16 %v1424
        %v2816 = vunpack.c.h.b16 %v1424
        %v2817 = vunpack.c.l.b16 %v1425
        %v2818 = vunpack.c.h.b16 %v1425
        %v2819 = vunpack.c.l.b16 %v1426
        %v2820 = vunpack.c.h.b16 %v1426
        %v2821 = vunpack.c.l.b16 %v1427
        %v2822 = vunpack.c.h.b16 %v1427
        %v2823 = vunpack.c.l.b16 %v1428
        %v2824 = vunpack.c.h.b16 %v1428
        %v2825 = vunpack.c.l.b16 %v1429
        %v2826 = vunpack.c.h.b16 %v1429
        %v2827 = vunpack.c.l.b16 %v1430
        %v2828 = vunpack.c.h.b16 %v1430
        %v2829 = vunpack.c.l.b16 %v1431
        %v2830 = vunpack.c.h.b16 %v1431
        %v2831 = vunpack.c.l.b16 %v1432
        %v2832 = vunpack.c.h.b16 %v1432
        %v2833 = vunpack.c.l.b16 %v1433
        %v2834 = vunpack.c.h.b16 %v1433
        %v2835 = vunpack.c.l.b16 %v1434
        %v2836 = vunpack.c.h.b16 %v1434
        %v2837 = vunpack.c.l.b16 %v1435
        %v2838 = vunpack.c.h.b16 %v1435
        %v2839 = vunpack.c.l.b16 %v1436
        %v2840 = vunpack.c.h.b16 %v1436
        %v2841 = vunpack.c.l.b16 %v1437
        %v2842 = vunpack.c.h.b16 %v1437
        %v2843 = vunpack.c.l.b16 %v1438
        %v2844 = vunpack.c.h.b16 %v1438
        %v2845 = vunpack.c.l.b16 %v1439
        %v2846 = vunpack.c.h.b16 %v1439
        %v2847 = vunpack.c.l.b16 %v1440
        %v2848 = vunpack.c.h.b16 %v1440
        %v2849 = vunpack.c.l.b16 %v1441
        %v2850 = vunpack.c.h.b16 %v1441
        %v2851 = vunpack.c.l.b16 %v1442
        %v2852 = vunpack.c.h.b16 %v1442
        %v2853 = vunpack.c.l.b16 %v1443
        %v2854 = vunpack.c.h.b16 %v1443
        %v2855 = vunpack.c.l.b16 %v1444
        %v2856 = vunpack.c.h.b16 %v1444
        %v2857 = vunpack.c.l.b16 %v1445
        %v2858 = vunpack.c.h.b16 %v1445
        %v2859 = vunpack.c.l.b16 %v1446
        %v2860 = vunpack.c.h.b16 %v1446
        %v2861 = vunpack.c.l.b16 %v1447
        %v2862 = vunpack.c.h.b16 %v1447
        %v2863 = vunpack.c.l.b16 %v1448
        %v2864 = vunpack.c.h.b16 %v1448
        %v2865 = vunpack.c.l.b16 %v1449
        %v2866 = vunpack.c.h.b16 %v1449
        %v2867 = vunpack.c.l.b16 %v1450
        %v2868 = vunpack.c.h.b16 %v1450
        %v2869 = vunpack.c.l.b16 %v1451
        %v2870 = vunpack.c.h.b16 %v1451
        %v2871 = vunpack.c.l.b16 %v1452
        %v2872 = vunpack.c.h.b16 %v1452
        %v2873 = vunpack.c.l.b16 %v1453
        %v2874 = vunpack.c.h.b16 %v1453
        %v2875 = vunpack.c.l.b16 %v1454
        %v2876 = vunpack.c.h.b16 %v1454
        %v2877 = vunpack.c.l.b16 %v1455
        %v2878 = vunpack.c.h.b16 %v1455
        %v2879 = vunpack.c.l.b16 %v1456
        %v2880 = vunpack.c.h.b16 %v1456
        %v2881 = vunpack.c.l.b16 %v1457
        %v2882 = vunpack.c.h.b16 %v1457
        %v2883 = vunpack.c.l.b16 %v1458
        %v2884 = vunpack.c.h.b16 %v1458
        %v2885 = vunpack.c.l.b16 %v1459
        %v2886 = vunpack.c.h.b16 %v1459
        %v2887 = vunpack.c.l.b16 %v1460
        %v2888 = vunpack.c.h.b16 %v1460
        %v2889 = vunpack.c.l.b16 %v1461
        %v2890 = vunpack.c.h.b16 %v1461
        %v2891 = vunpack.c.l.b16 %v1462
        %v2892 = vunpack.c.h.b16 %v1462
        %v2893 = vunpack.c.l.b16 %v1463
        %v2894 = vunpack.c.h.b16 %v1463
        %v2895 = vunpack.c.l.b16 %v1464
        %v2896 = vunpack.c.h.b16 %v1464
        %v2897 = vunpack.c.l.b16 %v1465
        %v2898 = vunpack.c.h.b16 %v1465
        %v2899 = vunpack.c.l.b16 %v1466
        %v2900 = vunpack.c.h.b16 %v1466
        %v2901 = vunpack.c.l.b16 %v1467
        %v2902 = vunpack.c.h.b16 %v1467
        %v2903 = vunpack.c.l.b16 %v1468
        %v2904 = vunpack.c.h.b16 %v1468
        %v2905 = vunpack.c.l.b16 %v1469
        %v2906 = vunpack.c.h.b16 %v1469
        %v2907 = vunpack.c.l.b16 %v1470
        %v2908 = vunpack.c.h.b16 %v1470
        %v2909 = vunpack.c.l.b16 %v1471
        %v2910 = vunpack.c.h.b16 %v1471
        %v2911 = vunpack.c.l.b16 %v1472
        %v2912 = vunpack.c.h.b16 %v1472
        %v2913 = vunpack.c.l.b16 %v1473
        %v2914 = vunpack.c.h.b16 %v1473
        %v2915 = vunpack.c.l.b16 %v1474
        %v2916 = vunpack.c.h.b16 %v1474
        %v2917 = vunpack.c.l.b16 %v1475
        %v2918 = vunpack.c.h.b16 %v1475
        %v2919 = vunpack.c.l.b16 %v1476
        %v2920 = vunpack.c.h.b16 %v1476
        %v2921 = vunpack.c.l.b16 %v1477
        %v2922 = vunpack.c.h.b16 %v1477
        %v2923 = vunpack.c.l.b16 %v1478
        %v2924 = vunpack.c.h.b16 %v1478
        %v2925 = vunpack.c.l.b16 %v1479
        %v2926 = vunpack.c.h.b16 %v1479
        %v2927 = vunpack.c.l.b16 %v1480
        %v2928 = vunpack.c.h.b16 %v1480
        %v2929 = vunpack.c.l.b16 %v1481
        %v2930 = vunpack.c.h.b16 %v1481
        %v2931 = vunpack.c.l.b16 %v1482
        %v2932 = vunpack.c.h.b16 %v1482
        %v2933 = vunpack.c.l.b16 %v1483
        %v2934 = vunpack.c.h.b16 %v1483
        %v2935 = vunpack.c.l.b16 %v1484
        %v2936 = vunpack.c.h.b16 %v1484
        %v2937 = vunpack.c.l.b16 %v1485
        %v2938 = vunpack.c.h.b16 %v1485
        %v2939 = vunpack.c.l.b16 %v1486
        %v2940 = vunpack.c.h.b16 %v1486
        %v2941 = vunpack.c.l.b16 %v1487
        %v2942 = vunpack.c.h.b16 %v1487
        %v2943 = vunpack.c.l.b16 %v1488
        %v2944 = vunpack.c.h.b16 %v1488
        %v2945 = vunpack.c.l.b16 %v1489
        %v2946 = vunpack.c.h.b16 %v1489
        %v2947 = vunpack.c.l.b16 %v1490
        %v2948 = vunpack.c.h.b16 %v1490
        %v2949 = vunpack.c.l.b16 %v1491
        %v2950 = vunpack.c.h.b16 %v1491
        %v2951 = vunpack.c.l.b16 %v1492
        %v2952 = vunpack.c.h.b16 %v1492
        %v2953 = vunpack.c.l.b16 %v1493
        %v2954 = vunpack.c.h.b16 %v1493
        %v2955 = vunpack.c.l.b16 %v1494
        %v2956 = vunpack.c.h.b16 %v1494
        %v2957 = vunpack.c.l.b16 %v1495
        %v2958 = vunpack.c.h.b16 %v1495
        %v2959 = vunpack.c.l.b16 %v1496
        %v2960 = vunpack.c.h.b16 %v1496
        %v2961 = vunpack.c.l.b16 %v1497
        %v2962 = vunpack.c.h.b16 %v1497
        %v2963 = vunpack.c.l.b16 %v1498
        %v2964 = vunpack.c.h.b16 %v1498
        %v2965 = vunpack.c.l.b16 %v1499
        %v2966 = vunpack.c.h.b16 %v1499
        %v2967 = vunpack.c.l.b16 %v1500
        %v2968 = vunpack.c.h.b16 %v1500
        %v2969 = vunpack.c.l.b16 %v1501
        %v2970 = vunpack.c.h.b16 %v1501
        %v2971 = vunpack.c.l.b16 %v1502
        %v2972 = vunpack.c.h.b16 %v1502
        %v2973 = vunpack.c.l.b16 %v1503
        %v2974 = vunpack.c.h.b16 %v1503
        %v2975 = vunpack.c.l.b16 %v1504
        %v2976 = vunpack.c.h.b16 %v1504
        %v2977 = vunpack.c.l.b16 %v1505
        %v2978 = vunpack.c.h.b16 %v1505
        %v2979 = vunpack.c.l.b16 %v1506
        %v2980 = vunpack.c.h.b16 %v1506
        %v2981 = vunpack.c.l.b16 %v1507
        %v2982 = vunpack.c.h.b16 %v1507
        %v2983 = vunpack.c.l.b16 %v1508
        %v2984 = vunpack.c.h.b16 %v1508
        %v2985 = vunpack.c.l.b16 %v1509
        %v2986 = vunpack.c.h.b16 %v1509
        %v2987 = vunpack.c.l.b16 %v1510
        %v2988 = vunpack.c.h.b16 %v1510
        %v2989 = vunpack.c.l.b16 %v1511
        %v2990 = vunpack.c.h.b16 %v1511
        %v2991 = vunpack.c.l.b16 %v1512
        %v2992 = vunpack.c.h.b16 %v1512
        %v2993 = vunpack.c.l.b16 %v1513
        %v2994 = vunpack.c.h.b16 %v1513
        %v2995 = vunpack.c.l.b16 %v1514
        %v2996 = vunpack.c.h.b16 %v1514
        %v2997 = vunpack.c.l.b16 %v1515
        %v2998 = vunpack.c.h.b16 %v1515
        %v2999 = vunpack.c.l.b16 %v1516
        %v3000 = vunpack.c.h.b16 %v1516
        %v3001 = vunpack.c.l.b16 %v1517
        %v3002 = vunpack.c.h.b16 %v1517
        %v3003 = vunpack.c.l.b16 %v1518
        %v3004 = vunpack.c.h.b16 %v1518
        %v3005 = vunpack.c.l.b16 %v1519
        %v3006 = vunpack.c.h.b16 %v1519
        %v3007 = vunpack.c.l.b16 %v1520
        %v3008 = vunpack.c.h.b16 %v1520
        %v3009 = vunpack.c.l.b16 %v1521
        %v3010 = vunpack.c.h.b16 %v1521
        %v3011 = vunpack.c.l.b16 %v1522
        %v3012 = vunpack.c.h.b16 %v1522
        %v3013 = vunpack.c.l.b16 %v1523
        %v3014 = vunpack.c.h.b16 %v1523
        %v3015 = vunpack.c.l.b16 %v1524
        %v3016 = vunpack.c.h.b16 %v1524
        %v3017 = vunpack.c.l.b16 %v1525
        %v3018 = vunpack.c.h.b16 %v1525
        %v3019 = vunpack.c.l.b16 %v1526
        %v3020 = vunpack.c.h.b16 %v1526
        %v3021 = vunpack.c.l.b16 %v1527
        %v3022 = vunpack.c.h.b16 %v1527
        %v3023 = vunpack.c.l.b16 %v1528
        %v3024 = vunpack.c.h.b16 %v1528
        %v3025 = vunpack.c.l.b16 %v1529
        %v3026 = vunpack.c.h.b16 %v1529
        %v3027 = vunpack.c.l.b16 %v1530
        %v3028 = vunpack.c.h.b16 %v1530
        %v3029 = vunpack.c.l.b16 %v1531
        %v3030 = vunpack.c.h.b16 %v1531
        %v3031 = vunpack.c.l.b16 %v1532
        %v3032 = vunpack.c.h.b16 %v1532
        %v3033 = vunpack.c.l.b16 %v1533
        %v3034 = vunpack.c.h.b16 %v1533
        %v3035 = vunpack.c.l.b16 %v1534
        %v3036 = vunpack.c.h.b16 %v1534
        %v3037 = vunpack.c.l.b16 %v1535
        %v3038 = vunpack.c.h.b16 %v1535
        %v3039 = vunpack.c.l.b16 %v1536
        %v3040 = vunpack.c.h.b16 %v1536
        %v3041 = vunpack.c.l.b16 %v1537
        %v3042 = vunpack.c.h.b16 %v1537
        %v3043 = vunpack.c.l.b16 %v1538
        %v3044 = vunpack.c.h.b16 %v1538
        %v3045 = vunpack.c.l.b16 %v1539
        %v3046 = vunpack.c.h.b16 %v1539
        %v3047 = vunpack.c.l.b16 %v1540
        %v3048 = vunpack.c.h.b16 %v1540
        %v3049 = vunpack.c.l.b16 %v1541
        %v3050 = vunpack.c.h.b16 %v1541
        %v3051 = vunpack.c.l.b16 %v1542
        %v3052 = vunpack.c.h.b16 %v1542
        %v3053 = vunpack.c.l.b16 %v1543
        %v3054 = vunpack.c.h.b16 %v1543
        %v3055 = vunpack.c.l.b16 %v1544
        %v3056 = vunpack.c.h.b16 %v1544
        %v3057 = vunpack.c.l.b16 %v1545
        %v3058 = vunpack.c.h.b16 %v1545
        %v3059 = vunpack.c.l.b16 %v1546
        %v3060 = vunpack.c.h.b16 %v1546
        %v3061 = vunpack.c.l.b16 %v1547
        %v3062 = vunpack.c.h.b16 %v1547
        %v3063 = vunpack.c.l.b16 %v1548
        %v3064 = vunpack.c.h.b16 %v1548
        %v3065 = vunpack.c.l.b16 %v1549
        %v3066 = vunpack.c.h.b16 %v1549
        %v3067 = vunpack.c.l.b16 %v1550
        %v3068 = vunpack.c.h.b16 %v1550
        %v3069 = vunpack.c.l.b16 %v1551
        %v3070 = vunpack.c.h.b16 %v1551
        %v3071 = vunpack.c.l.b16 %v1552
        %v3072 = vunpack.c.h.b16 %v1552
        %v3073 = vunpack.c.l.b16 %v1553
        %v3074 = vunpack.c.h.b16 %v1553
        %v3075 = vunpack.c.l.b16 %v1554
        %v3076 = vunpack.c.h.b16 %v1554
        %v3077 = vunpack.c.l.b16 %v1555
        %v3078 = vunpack.c.h.b16 %v1555
        %v3079 = vunpack.c.l.b16 %v1556
        %v3080 = vunpack.c.h.b16 %v1556
        %v3081 = vunpack.c.l.b16 %v1557
        %v3082 = vunpack.c.h.b16 %v1557
        %v3083 = vunpack.c.l.b16 %v1558
        %v3084 = vunpack.c.h.b16 %v1558
        %v3085 = vunpack.c.l.b16 %v1559
        %v3086 = vunpack.c.h.b16 %v1559
        %v3087 = vunpack.c.l.b16 %v1560
        %v3088 = vunpack.c.h.b16 %v1560
        %v3089 = vunpack.c.l.b16 %v1561
        %v3090 = vunpack.c.h.b16 %v1561
        %v3091 = vunpack.c.l.b16 %v1562
        %v3092 = vunpack.c.h.b16 %v1562
        %v3093 = vunpack.c.l.b16 %v1563
        %v3094 = vunpack.c.h.b16 %v1563
        %v3095 = vunpack.c.l.b16 %v1564
        %v3096 = vunpack.c.h.b16 %v1564
        %v3097 = vunpack.c.l.b16 %v1565
        %v3098 = vunpack.c.h.b16 %v1565
        %v3099 = vunpack.c.l.b16 %v1566
        %v3100 = vunpack.c.h.b16 %v1566
        %v3101 = vunpack.c.l.b16 %v1567
        %v3102 = vunpack.c.h.b16 %v1567
        %v3103 = vunpack.c.l.b16 %v1568
        %v3104 = vunpack.c.h.b16 %v1568
        %v3105 = vunpack.c.l.b16 %v1569
        %v3106 = vunpack.c.h.b16 %v1569
        %v3107 = vunpack.c.l.b16 %v1570
        %v3108 = vunpack.c.h.b16 %v1570
        %v3109 = vunpack.c.l.b16 %v1571
        %v3110 = vunpack.c.h.b16 %v1571
        %v3111 = vunpack.c.l.b16 %v1572
        %v3112 = vunpack.c.h.b16 %v1572
        %v3113 = vunpack.c.l.b16 %v1573
        %v3114 = vunpack.c.h.b16 %v1573
        %v3115 = vunpack.c.l.b16 %v1574
        %v3116 = vunpack.c.h.b16 %v1574
        %v3117 = vunpack.c.l.b16 %v1575
        %v3118 = vunpack.c.h.b16 %v1575
        %v3119 = vunpack.c.l.b16 %v1576
        %v3120 = vunpack.c.h.b16 %v1576
        %v3121 = vunpack.c.l.b16 %v1577
        %v3122 = vunpack.c.h.b16 %v1577
        %v3123 = vunpack.c.l.b16 %v1578
        %v3124 = vunpack.c.h.b16 %v1578
        %v3125 = vunpack.c.l.b16 %v1579
        %v3126 = vunpack.c.h.b16 %v1579
        %v3127 = vunpack.c.l.b16 %v1580
        %v3128 = vunpack.c.h.b16 %v1580
        %v3129 = vunpack.c.l.b16 %v1581
        %v3130 = vunpack.c.h.b16 %v1581
        %v3131 = vunpack.c.l.b16 %v1582
        %v3132 = vunpack.c.h.b16 %v1582
        %v3133 = vunpack.c.l.b16 %v1583
        %v3134 = vunpack.c.h.b16 %v1583
        %v3135 = vunpack.c.l.b16 %v1584
        %v3136 = vunpack.c.h.b16 %v1584
        %v3137 = vunpack.c.l.b16 %v1585
        %v3138 = vunpack.c.h.b16 %v1585
        %v3139 = vunpack.c.l.b16 %v1586
        %v3140 = vunpack.c.h.b16 %v1586
        %v3141 = vunpack.c.l.b16 %v1587
        %v3142 = vunpack.c.h.b16 %v1587
        %v3143 = vunpack.c.l.b16 %v1588
        %v3144 = vunpack.c.h.b16 %v1588
        %v3145 = vunpack.c.l.b16 %v1589
        %v3146 = vunpack.c.h.b16 %v1589
        %v3147 = vunpack.c.l.b16 %v1590
        %v3148 = vunpack.c.h.b16 %v1590
        %v3149 = vunpack.c.l.b16 %v1591
        %v3150 = vunpack.c.h.b16 %v1591
        %v3151 = vunpack.c.l.b16 %v1592
        %v3152 = vunpack.c.h.b16 %v1592
        %v3153 = vunpack.c.l.b16 %v1593
        %v3154 = vunpack.c.h.b16 %v1593
        %v3155 = vunpack.c.l.b16 %v1594
        %v3156 = vunpack.c.h.b16 %v1594
        %v3157 = vunpack.c.l.b16 %v1595
        %v3158 = vunpack.c.h.b16 %v1595
        %v3159 = vunpack.c.l.b16 %v1596
        %v3160 = vunpack.c.h.b16 %v1596
        %v3161 = vunpack.c.l.b16 %v1597
        %v3162 = vunpack.c.h.b16 %v1597
        %v3163 = vunpack.c.l.b16 %v1598
        %v3164 = vunpack.c.h.b16 %v1598
        %v3165 = vunpack.c.l.b16 %v1599
        %v3166 = vunpack.c.h.b16 %v1599
        %v3167 = vunpack.c.l.b16 %v1600
        %v3168 = vunpack.c.h.b16 %v1600
        %v3169 = vunpack.c.l.b16 %v1601
        %v3170 = vunpack.c.h.b16 %v1601
        %v3171 = vunpack.c.l.b16 %v1602
        %v3172 = vunpack.c.h.b16 %v1602
        %v3173 = vunpack.c.l.b16 %v1603
        %v3174 = vunpack.c.h.b16 %v1603
        %v3175 = vunpack.c.l.b16 %v1604
        %v3176 = vunpack.c.h.b16 %v1604
        %v3177 = vpack.c.b16 %v2169, %v2153
        %v3178 = vpack.c.b16 %v2170, %v2154
        %v3179 = vpack.c.b16 %v2171, %v2155
        %v3180 = vpack.c.b16 %v2172, %v2156
        %v3181 = vpack.c.b16 %v2173, %v2157
        %v3182 = vpack.c.b16 %v2174, %v2158
        %v3183 = vpack.c.b16 %v2175, %v2159
        %v3184 = vpack.c.b16 %v2176, %v2160
        %v3185 = vpack.c.b16 %v2177, %v2161
        %v3186 = vpack.c.b16 %v2178, %v2162
        %v3187 = vpack.c.b16 %v2179, %v2163
        %v3188 = vpack.c.b16 %v2180, %v2164
        %v3189 = vpack.c.b16 %v2181, %v2165
        %v3190 = vpack.c.b16 %v2182, %v2166
        %v3191 = vpack.c.b16 %v2183, %v2167
        %v3192 = vpack.c.b16 %v2184, %v2168
        %v3193 = vpack.c.b16 %v2201, %v2185
        %v3194 = vpack.c.b16 %v2202, %v2186
        %v3195 = vpack.c.b16 %v2203, %v2187
        %v3196 = vpack.c.b16 %v2204, %v2188
        %v3197 = vpack.c.b16 %v2205, %v2189
        %v3198 = vpack.c.b16 %v2206, %v2190
        %v3199 = vpack.c.b16 %v2207, %v2191
        %v3200 = vpack.c.b16 %v2208, %v2192
        %v3201 = vpack.c.b16 %v2209, %v2193
        %v3202 = vpack.c.b16 %v2210, %v2194
        %v3203 = vpack.c.b16 %v2211, %v2195
        %v3204 = vpack.c.b16 %v2212, %v2196
        %v3205 = vpack.c.b16 %v2213, %v2197
        %v3206 = vpack.c.b16 %v2214, %v2198
        %v3207 = vpack.c.b16 %v2215, %v2199
        %v3208 = vpack.c.b16 %v2216, %v2200
        %v3209 = vpack.c.b16 %v2233, %v2217
        %v3210 = vpack.c.b16 %v2234, %v2218
        %v3211 = vpack.c.b16 %v2235, %v2219
        %v3212 = vpack.c.b16 %v2236, %v2220
        %v3213 = vpack.c.b16 %v2237, %v2221
        %v3214 = vpack.c.b16 %v2238, %v2222
        %v3215 = vpack.c.b16 %v2239, %v2223
        %v3216 = vpack.c.b16 %v2240, %v2224
        %v3217 = vpack.c.b16 %v2241, %v2225
        %v3218 = vpack.c.b16 %v2242, %v2226
        %v3219 = vpack.c.b16 %v2243, %v2227
        %v3220 = vpack.c.b16 %v2244, %v2228
        %v3221 = vpack.c.b16 %v2245, %v2229
        %v3222 = vpack.c.b16 %v2246, %v2230
        %v3223 = vpack.c.b16 %v2247, %v2231
        %v3224 = vpack.c.b16 %v2248, %v2232
        %v3225 = vpack.c.b16 %v2265, %v2249
        %v3226 = vpack.c.b16 %v2266, %v2250
        %v3227 = vpack.c.b16 %v2267, %v2251
        %v3228 = vpack.c.b16 %v2268, %v2252
        %v3229 = vpack.c.b16 %v2269, %v2253
        %v3230 = vpack.c.b16 %v2270, %v2254
        %v3231 = vpack.c.b16 %v2271, %v2255
        %v3232 = vpack.c.b16 %v2272, %v2256
        %v3233 = vpack.c.b16 %v2273, %v2257
        %v3234 = vpack.c.b16 %v2274, %v2258
        %v3235 = vpack.c.b16 %v2275, %v2259
        %v3236 = vpack.c.b16 %v2276, %v2260
        %v3237 = vpack.c.b16 %v2277, %v2261
        %v3238 = vpack.c.b16 %v2278, %v2262
        %v3239 = vpack.c.b16 %v2279, %v2263
        %v3240 = vpack.c.b16 %v2280, %v2264
        %v3241 = vpack.c.b16 %v2297, %v2281
        %v3242 = vpack.c.b16 %v2298, %v2282
        %v3243 = vpack.c.b16 %v2299, %v2283
        %v3244 = vpack.c.b16 %v2300, %v2284
        %v3245 = vpack.c.b16 %v2301, %v2285
        %v3246 = vpack.c.b16 %v2302, %v2286
        %v3247 = vpack.c.b16 %v2303, %v2287
        %v3248 = vpack.c.b16 %v2304, %v2288
        %v3249 = vpack.c.b16 %v2305, %v2289
        %v3250 = vpack.c.b16 %v2306, %v2290
        %v3251 = vpack.c.b16 %v2307, %v2291
        %v3252 = vpack.c.b16 %v2308, %v2292
        %v3253 = vpack.c.b16 %v2309, %v2293
        %v3254 = vpack.c.b16 %v2310, %v2294
        %v3255 = vpack.c.b16 %v2311, %v2295
        %v3256 = vpack.c.b16 %v2312, %v2296
        %v3257 = vpack.c.b16 %v2329, %v2313
        %v3258 = vpack.c.b16 %v2330, %v2314
        %v3259 = vpack.c.b16 %v2331, %v2315
        %v3260 = vpack.c.b16 %v2332, %v2316
        %v3261 = vpack.c.b16 %v2333, %v2317
        %v3262 = vpack.c.b16 %v2334, %v2318
        %v3263 = vpack.c.b16 %v2335, %v2319
        %v3264 = vpack.c.b16 %v2336, %v2320
        %v3265 = vpack.c.b16 %v2337, %v2321
        %v3266 = vpack.c.b16 %v2338, %v2322
        %v3267 = vpack.c.b16 %v2339, %v2323
        %v3268 = vpack.c.b16 %v2340, %v2324
        %v3269 = vpack.c.b16 %v2341, %v2325
        %v3270 = vpack.c.b16 %v2342, %v2326
        %v3271 = vpack.c.b16 %v2343, %v2327
        %v3272 = vpack.c.b16 %v2344, %v2328
        %v3273 = vpack.c.b16 %v2361, %v2345
        %v3274 = vpack.c.b16 %v2362, %v2346
        %v3275 = vpack.c.b16 %v2363, %v2347
        %v3276 = vpack.c.b16 %v2364, %v2348
        %v3277 = vpack.c.b16 %v2365, %v2349
        %v3278 = vpack.c.b16 %v2366, %v2350
        %v3279 = vpack.c.b16 %v2367, %v2351
        %v3280 = vpack.c.b16 %v2368, %v2352
        %v3281 = vpack.c.b16 %v2369, %v2353
        %v3282 = vpack.c.b16 %v2370, %v2354
        %v3283 = vpack.c.b16 %v2371, %v2355
        %v3284 = vpack.c.b16 %v2372, %v2356
        %v3285 = vpack.c.b16 %v2373, %v2357
        %v3286 = vpack.c.b16 %v2374, %v2358
        %v3287 = vpack.c.b16 %v2375, %v2359
        %v3288 = vpack.c.b16 %v2376, %v2360
        %v3289 = vpack.c.b16 %v2393, %v2377
        %v3290 = vpack.c.b16 %v2394, %v2378
        %v3291 = vpack.c.b16 %v2395, %v2379
        %v3292 = vpack.c.b16 %v2396, %v2380
        %v3293 = vpack.c.b16 %v2397, %v2381
        %v3294 = vpack.c.b16 %v2398, %v2382
        %v3295 = vpack.c.b16 %v2399, %v2383
        %v3296 = vpack.c.b16 %v2400, %v2384
        %v3297 = vpack.c.b16 %v2401, %v2385
        %v3298 = vpack.c.b16 %v2402, %v2386
        %v3299 = vpack.c.b16 %v2403, %v2387
        %v3300 = vpack.c.b16 %v2404, %v2388
        %v3301 = vpack.c.b16 %v2405, %v2389
        %v3302 = vpack.c.b16 %v2406, %v2390
        %v3303 = vpack.c.b16 %v2407, %v2391
        %v3304 = vpack.c.b16 %v2408, %v2392
        %v3305 = vpack.c.b16 %v2425, %v2409
        %v3306 = vpack.c.b16 %v2426, %v2410
        %v3307 = vpack.c.b16 %v2427, %v2411
        %v3308 = vpack.c.b16 %v2428, %v2412
        %v3309 = vpack.c.b16 %v2429, %v2413
        %v3310 = vpack.c.b16 %v2430, %v2414
        %v3311 = vpack.c.b16 %v2431, %v2415
        %v3312 = vpack.c.b16 %v2432, %v2416
        %v3313 = vpack.c.b16 %v2433, %v2417
        %v3314 = vpack.c.b16 %v2434, %v2418
        %v3315 = vpack.c.b16 %v2435, %v2419
        %v3316 = vpack.c.b16 %v2436, %v2420
        %v3317 = vpack.c.b16 %v2437, %v2421
        %v3318 = vpack.c.b16 %v2438, %v2422
        %v3319 = vpack.c.b16 %v2439, %v2423
        %v3320 = vpack.c.b16 %v2440, %v2424
        %v3321 = vpack.c.b16 %v2457, %v2441
        %v3322 = vpack.c.b16 %v2458, %v2442
        %v3323 = vpack.c.b16 %v2459, %v2443
        %v3324 = vpack.c.b16 %v2460, %v2444
        %v3325 = vpack.c.b16 %v2461, %v2445
        %v3326 = vpack.c.b16 %v2462, %v2446
        %v3327 = vpack.c.b16 %v2463, %v2447
        %v3328 = vpack.c.b16 %v2464, %v2448
        %v3329 = vpack.c.b16 %v2465, %v2449
        %v3330 = vpack.c.b16 %v2466, %v2450
        %v3331 = vpack.c.b16 %v2467, %v2451
        %v3332 = vpack.c.b16 %v2468, %v2452
        %v3333 = vpack.c.b16 %v2469, %v2453
        %v3334 = vpack.c.b16 %v2470, %v2454
        %v3335 = vpack.c.b16 %v2471, %v2455
        %v3336 = vpack.c.b16 %v2472, %v2456
        %v3337 = vpack.c.b16 %v2489, %v2473
        %v3338 = vpack.c.b16 %v2490, %v2474
        %v3339 = vpack.c.b16 %v2491, %v2475
        %v3340 = vpack.c.b16 %v2492, %v2476
        %v3341 = vpack.c.b16 %v2493, %v2477
        %v3342 = vpack.c.b16 %v2494, %v2478
        %v3343 = vpack.c.b16 %v2495, %v2479
        %v3344 = vpack.c.b16 %v2496, %v2480
        %v3345 = vpack.c.b16 %v2497, %v2481
        %v3346 = vpack.c.b16 %v2498, %v2482
        %v3347 = vpack.c.b16 %v2499, %v2483
        %v3348 = vpack.c.b16 %v2500, %v2484
        %v3349 = vpack.c.b16 %v2501, %v2485
        %v3350 = vpack.c.b16 %v2502, %v2486
        %v3351 = vpack.c.b16 %v2503, %v2487
        %v3352 = vpack.c.b16 %v2504, %v2488
        %v3353 = vpack.c.b16 %v2521, %v2505
        %v3354 = vpack.c.b16 %v2522, %v2506
        %v3355 = vpack.c.b16 %v2523, %v2507
        %v3356 = vpack.c.b16 %v2524, %v2508
        %v3357 = vpack.c.b16 %v2525, %v2509
        %v3358 = vpack.c.b16 %v2526, %v2510
        %v3359 = vpack.c.b16 %v2527, %v2511
        %v3360 = vpack.c.b16 %v2528, %v2512
        %v3361 = vpack.c.b16 %v2529, %v2513
        %v3362 = vpack.c.b16 %v2530, %v2514
        %v3363 = vpack.c.b16 %v2531, %v2515
        %v3364 = vpack.c.b16 %v2532, %v2516
        %v3365 = vpack.c.b16 %v2533, %v2517
        %v3366 = vpack.c.b16 %v2534, %v2518
        %v3367 = vpack.c.b16 %v2535, %v2519
        %v3368 = vpack.c.b16 %v2536, %v2520
        %v3369 = vpack.c.b16 %v2553, %v2537
        %v3370 = vpack.c.b16 %v2554, %v2538
        %v3371 = vpack.c.b16 %v2555, %v2539
        %v3372 = vpack.c.b16 %v2556, %v2540
        %v3373 = vpack.c.b16 %v2557, %v2541
        %v3374 = vpack.c.b16 %v2558, %v2542
        %v3375 = vpack.c.b16 %v2559, %v2543
        %v3376 = vpack.c.b16 %v2560, %v2544
        %v3377 = vpack.c.b16 %v2561, %v2545
        %v3378 = vpack.c.b16 %v2562, %v2546
        %v3379 = vpack.c.b16 %v2563, %v2547
        %v3380 = vpack.c.b16 %v2564, %v2548
        %v3381 = vpack.c.b16 %v2565, %v2549
        %v3382 = vpack.c.b16 %v2566, %v2550
        %v3383 = vpack.c.b16 %v2567, %v2551
        %v3384 = vpack.c.b16 %v2568, %v2552
        %v3385 = vpack.c.b16 %v2585, %v2569
        %v3386 = vpack.c.b16 %v2586, %v2570
        %v3387 = vpack.c.b16 %v2587, %v2571
        %v3388 = vpack.c.b16 %v2588, %v2572
        %v3389 = vpack.c.b16 %v2589, %v2573
        %v3390 = vpack.c.b16 %v2590, %v2574
        %v3391 = vpack.c.b16 %v2591, %v2575
        %v3392 = vpack.c.b16 %v2592, %v2576
        %v3393 = vpack.c.b16 %v2593, %v2577
        %v3394 = vpack.c.b16 %v2594, %v2578
        %v3395 = vpack.c.b16 %v2595, %v2579
        %v3396 = vpack.c.b16 %v2596, %v2580
        %v3397 = vpack.c.b16 %v2597, %v2581
        %v3398 = vpack.c.b16 %v2598, %v2582
        %v3399 = vpack.c.b16 %v2599, %v2583
        %v3400 = vpack.c.b16 %v2600, %v2584
        %v3401 = vpack.c.b16 %v2617, %v2601
        %v3402 = vpack.c.b16 %v2618, %v2602
        %v3403 = vpack.c.b16 %v2619, %v2603
        %v3404 = vpack.c.b16 %v2620, %v2604
        %v3405 = vpack.c.b16 %v2621, %v2605
        %v3406 = vpack.c.b16 %v2622, %v2606
        %v3407 = vpack.c.b16 %v2623, %v2607
        %v3408 = vpack.c.b16 %v2624, %v2608
        %v3409 = vpack.c.b16 %v2625, %v2609
        %v3410 = vpack.c.b16 %v2626, %v2610
        %v3411 = vpack.c.b16 %v2627, %v2611
        %v3412 = vpack.c.b16 %v2628, %v2612
        %v3413 = vpack.c.b16 %v2629, %v2613
        %v3414 = vpack.c.b16 %v2630, %v2614
        %v3415 = vpack.c.b16 %v2631, %v2615
        %v3416 = vpack.c.b16 %v2632, %v2616
        %v3417 = vpack.c.b16 %v2649, %v2633
        %v3418 = vpack.c.b16 %v2650, %v2634
        %v3419 = vpack.c.b16 %v2651, %v2635
        %v3420 = vpack.c.b16 %v2652, %v2636
        %v3421 = vpack.c.b16 %v2653, %v2637
        %v3422 = vpack.c.b16 %v2654, %v2638
        %v3423 = vpack.c.b16 %v2655, %v2639
        %v3424 = vpack.c.b16 %v2656, %v2640
        %v3425 = vpack.c.b16 %v2657, %v2641
        %v3426 = vpack.c.b16 %v2658, %v2642
        %v3427 = vpack.c.b16 %v2659, %v2643
        %v3428 = vpack.c.b16 %v2660, %v2644
        %v3429 = vpack.c.b16 %v2661, %v2645
        %v3430 = vpack.c.b16 %v2662, %v2646
        %v3431 = vpack.c.b16 %v2663, %v2647
        %v3432 = vpack.c.b16 %v2664, %v2648
        %v3433 = vpack.c.b16 %v2681, %v2665
        %v3434 = vpack.c.b16 %v2682, %v2666
        %v3435 = vpack.c.b16 %v2683, %v2667
        %v3436 = vpack.c.b16 %v2684, %v2668
        %v3437 = vpack.c.b16 %v2685, %v2669
        %v3438 = vpack.c.b16 %v2686, %v2670
        %v3439 = vpack.c.b16 %v2687, %v2671
        %v3440 = vpack.c.b16 %v2688, %v2672
        %v3441 = vpack.c.b16 %v2689, %v2673
        %v3442 = vpack.c.b16 %v2690, %v2674
        %v3443 = vpack.c.b16 %v2691, %v2675
        %v3444 = vpack.c.b16 %v2692, %v2676
        %v3445 = vpack.c.b16 %v2693, %v2677
        %v3446 = vpack.c.b16 %v2694, %v2678
        %v3447 = vpack.c.b16 %v2695, %v2679
        %v3448 = vpack.c.b16 %v2696, %v2680
        %v3449 = vpack.c.b16 %v2713, %v2697
        %v3450 = vpack.c.b16 %v2714, %v2698
        %v3451 = vpack.c.b16 %v2715, %v2699
        %v3452 = vpack.c.b16 %v2716, %v2700
        %v3453 = vpack.c.b16 %v2717, %v2701
        %v3454 = vpack.c.b16 %v2718, %v2702
        %v3455 = vpack.c.b16 %v2719, %v2703
        %v3456 = vpack.c.b16 %v2720, %v2704
        %v3457 = vpack.c.b16 %v2721, %v2705
        %v3458 = vpack.c.b16 %v2722, %v2706
        %v3459 = vpack.c.b16 %v2723, %v2707
        %v3460 = vpack.c.b16 %v2724, %v2708
        %v3461 = vpack.c.b16 %v2725, %v2709
        %v3462 = vpack.c.b16 %v2726, %v2710
        %v3463 = vpack.c.b16 %v2727, %v2711
        %v3464 = vpack.c.b16 %v2728, %v2712
        %v3465 = vpack.c.b16 %v2745, %v2729
        %v3466 = vpack.c.b16 %v2746, %v2730
        %v3467 = vpack.c.b16 %v2747, %v2731
        %v3468 = vpack.c.b16 %v2748, %v2732
        %v3469 = vpack.c.b16 %v2749, %v2733
        %v3470 = vpack.c.b16 %v2750, %v2734
        %v3471 = vpack.c.b16 %v2751, %v2735
        %v3472 = vpack.c.b16 %v2752, %v2736
        %v3473 = vpack.c.b16 %v2753, %v2737
        %v3474 = vpack.c.b16 %v2754, %v2738
        %v3475 = vpack.c.b16 %v2755, %v2739
        %v3476 = vpack.c.b16 %v2756, %v2740
        %v3477 = vpack.c.b16 %v2757, %v2741
        %v3478 = vpack.c.b16 %v2758, %v2742
        %v3479 = vpack.c.b16 %v2759, %v2743
        %v3480 = vpack.c.b16 %v2760, %v2744
        %v3481 = vpack.c.b16 %v2777, %v2761
        %v3482 = vpack.c.b16 %v2778, %v2762
        %v3483 = vpack.c.b16 %v2779, %v2763
        %v3484 = vpack.c.b16 %v2780, %v2764
        %v3485 = vpack.c.b16 %v2781, %v2765
        %v3486 = vpack.c.b16 %v2782, %v2766
        %v3487 = vpack.c.b16 %v2783, %v2767
        %v3488 = vpack.c.b16 %v2784, %v2768
        %v3489 = vpack.c.b16 %v2785, %v2769
        %v3490 = vpack.c.b16 %v2786, %v2770
        %v3491 = vpack.c.b16 %v2787, %v2771
        %v3492 = vpack.c.b16 %v2788, %v2772
        %v3493 = vpack.c.b16 %v2789, %v2773
        %v3494 = vpack.c.b16 %v2790, %v2774
        %v3495 = vpack.c.b16 %v2791, %v2775
        %v3496 = vpack.c.b16 %v2792, %v2776
        %v3497 = vpack.c.b16 %v2809, %v2793
        %v3498 = vpack.c.b16 %v2810, %v2794
        %v3499 = vpack.c.b16 %v2811, %v2795
        %v3500 = vpack.c.b16 %v2812, %v2796
        %v3501 = vpack.c.b16 %v2813, %v2797
        %v3502 = vpack.c.b16 %v2814, %v2798
        %v3503 = vpack.c.b16 %v2815, %v2799
        %v3504 = vpack.c.b16 %v2816, %v2800
        %v3505 = vpack.c.b16 %v2817, %v2801
        %v3506 = vpack.c.b16 %v2818, %v2802
        %v3507 = vpack.c.b16 %v2819, %v2803
        %v3508 = vpack.c.b16 %v2820, %v2804
        %v3509 = vpack.c.b16 %v2821, %v2805
        %v3510 = vpack.c.b16 %v2822, %v2806
        %v3511 = vpack.c.b16 %v2823, %v2807
        %v3512 = vpack.c.b16 %v2824, %v2808
        %v3513 = vpack.c.b16 %v2841, %v2825
        %v3514 = vpack.c.b16 %v2842, %v2826
        %v3515 = vpack.c.b16 %v2843, %v2827
        %v3516 = vpack.c.b16 %v2844, %v2828
        %v3517 = vpack.c.b16 %v2845, %v2829
        %v3518 = vpack.c.b16 %v2846, %v2830
        %v3519 = vpack.c.b16 %v2847, %v2831
        %v3520 = vpack.c.b16 %v2848, %v2832
        %v3521 = vpack.c.b16 %v2849, %v2833
        %v3522 = vpack.c.b16 %v2850, %v2834
        %v3523 = vpack.c.b16 %v2851, %v2835
        %v3524 = vpack.c.b16 %v2852, %v2836
        %v3525 = vpack.c.b16 %v2853, %v2837
        %v3526 = vpack.c.b16 %v2854, %v2838
        %v3527 = vpack.c.b16 %v2855, %v2839
        %v3528 = vpack.c.b16 %v2856, %v2840
        %v3529 = vpack.c.b16 %v2873, %v2857
        %v3530 = vpack.c.b16 %v2874, %v2858
        %v3531 = vpack.c.b16 %v2875, %v2859
        %v3532 = vpack.c.b16 %v2876, %v2860
        %v3533 = vpack.c.b16 %v2877, %v2861
        %v3534 = vpack.c.b16 %v2878, %v2862
        %v3535 = vpack.c.b16 %v2879, %v2863
        %v3536 = vpack.c.b16 %v2880, %v2864
        %v3537 = vpack.c.b16 %v2881, %v2865
        %v3538 = vpack.c.b16 %v2882, %v2866
        %v3539 = vpack.c.b16 %v2883, %v2867
        %v3540 = vpack.c.b16 %v2884, %v2868
        %v3541 = vpack.c.b16 %v2885, %v2869
        %v3542 = vpack.c.b16 %v2886, %v2870
        %v3543 = vpack.c.b16 %v2887, %v2871
        %v3544 = vpack.c.b16 %v2888, %v2872
        %v3545 = vpack.c.b16 %v2905, %v2889
        %v3546 = vpack.c.b16 %v2906, %v2890
        %v3547 = vpack.c.b16 %v2907, %v2891
        %v3548 = vpack.c.b16 %v2908, %v2892
        %v3549 = vpack.c.b16 %v2909, %v2893
        %v3550 = vpack.c.b16 %v2910, %v2894
        %v3551 = vpack.c.b16 %v2911, %v2895
        %v3552 = vpack.c.b16 %v2912, %v2896
        %v3553 = vpack.c.b16 %v2913, %v2897
        %v3554 = vpack.c.b16 %v2914, %v2898
        %v3555 = vpack.c.b16 %v2915, %v2899
        %v3556 = vpack.c.b16 %v2916, %v2900
        %v3557 = vpack.c.b16 %v2917, %v2901
        %v3558 = vpack.c.b16 %v2918, %v2902
        %v3559 = vpack.c.b16 %v2919, %v2903
        %v3560 = vpack.c.b16 %v2920, %v2904
        %v3561 = vpack.c.b16 %v2937, %v2921
        %v3562 = vpack.c.b16 %v2938, %v2922
        %v3563 = vpack.c.b16 %v2939, %v2923
        %v3564 = vpack.c.b16 %v2940, %v2924
        %v3565 = vpack.c.b16 %v2941, %v2925
        %v3566 = vpack.c.b16 %v2942, %v2926
        %v3567 = vpack.c.b16 %v2943, %v2927
        %v3568 = vpack.c.b16 %v2944, %v2928
        %v3569 = vpack.c.b16 %v2945, %v2929
        %v3570 = vpack.c.b16 %v2946, %v2930
        %v3571 = vpack.c.b16 %v2947, %v2931
        %v3572 = vpack.c.b16 %v2948, %v2932
        %v3573 = vpack.c.b16 %v2949, %v2933
        %v3574 = vpack.c.b16 %v2950, %v2934
        %v3575 = vpack.c.b16 %v2951, %v2935
        %v3576 = vpack.c.b16 %v2952, %v2936
        %v3577 = vpack.c.b16 %v2969, %v2953
        %v3578 = vpack.c.b16 %v2970, %v2954
        %v3579 = vpack.c.b16 %v2971, %v2955
        %v3580 = vpack.c.b16 %v2972, %v2956
        %v3581 = vpack.c.b16 %v2973, %v2957
        %v3582 = vpack.c.b16 %v2974, %v2958
        %v3583 = vpack.c.b16 %v2975, %v2959
        %v3584 = vpack.c.b16 %v2976, %v2960
        %v3585 = vpack.c.b16 %v2977, %v2961
        %v3586 = vpack.c.b16 %v2978, %v2962
        %v3587 = vpack.c.b16 %v2979, %v2963
        %v3588 = vpack.c.b16 %v2980, %v2964
        %v3589 = vpack.c.b16 %v2981, %v2965
        %v3590 = vpack.c.b16 %v2982, %v2966
        %v3591 = vpack.c.b16 %v2983, %v2967
        %v3592 = vpack.c.b16 %v2984, %v2968
        %v3593 = vpack.c.b16 %v3001, %v2985
        %v3594 = vpack.c.b16 %v3002, %v2986
        %v3595 = vpack.c.b16 %v3003, %v2987
        %v3596 = vpack.c.b16 %v3004, %v2988
        %v3597 = vpack.c.b16 %v3005, %v2989
        %v3598 = vpack.c.b16 %v3006, %v2990
        %v3599 = vpack.c.b16 %v3007, %v2991
        %v3600 = vpack.c.b16 %v3008, %v2992
        %v3601 = vpack.c.b16 %v3009, %v2993
        %v3602 = vpack.c.b16 %v3010, %v2994
        %v3603 = vpack.c.b16 %v3011, %v2995
        %v3604 = vpack.c.b16 %v3012, %v2996
        %v3605 = vpack.c.b16 %v3013, %v2997
        %v3606 = vpack.c.b16 %v3014, %v2998
        %v3607 = vpack.c.b16 %v3015, %v2999
        %v3608 = vpack.c.b16 %v3016, %v3000
        %v3609 = vpack.c.b16 %v3033, %v3017
        %v3610 = vpack.c.b16 %v3034, %v3018
        %v3611 = vpack.c.b16 %v3035, %v3019
        %v3612 = vpack.c.b16 %v3036, %v3020
        %v3613 = vpack.c.b16 %v3037, %v3021
        %v3614 = vpack.c.b16 %v3038, %v3022
        %v3615 = vpack.c.b16 %v3039, %v3023
        %v3616 = vpack.c.b16 %v3040, %v3024
        %v3617 = vpack.c.b16 %v3041, %v3025
        %v3618 = vpack.c.b16 %v3042, %v3026
        %v3619 = vpack.c.b16 %v3043, %v3027
        %v3620 = vpack.c.b16 %v3044, %v3028
        %v3621 = vpack.c.b16 %v3045, %v3029
        %v3622 = vpack.c.b16 %v3046, %v3030
        %v3623 = vpack.c.b16 %v3047, %v3031
        %v3624 = vpack.c.b16 %v3048, %v3032
        %v3625 = vpack.c.b16 %v3065, %v3049
        %v3626 = vpack.c.b16 %v3066, %v3050
        %v3627 = vpack.c.b16 %v3067, %v3051
        %v3628 = vpack.c.b16 %v3068, %v3052
        %v3629 = vpack.c.b16 %v3069, %v3053
        %v3630 = vpack.c.b16 %v3070, %v3054
        %v3631 = vpack.c.b16 %v3071, %v3055
        %v3632 = vpack.c.b16 %v3072, %v3056
        %v3633 = vpack.c.b16 %v3073, %v3057
        %v3634 = vpack.c.b16 %v3074, %v3058
        %v3635 = vpack.c.b16 %v3075, %v3059
        %v3636 = vpack.c.b16 %v3076, %v3060
        %v3637 = vpack.c.b16 %v3077, %v3061
        %v3638 = vpack.c.b16 %v3078, %v3062
        %v3639 = vpack.c.b16 %v3079, %v3063
        %v3640 = vpack.c.b16 %v3080, %v3064
        %v3641 = vpack.c.b16 %v3097, %v3081
        %v3642 = vpack.c.b16 %v3098, %v3082
        %v3643 = vpack.c.b16 %v3099, %v3083
        %v3644 = vpack.c.b16 %v3100, %v3084
        %v3645 = vpack.c.b16 %v3101, %v3085
        %v3646 = vpack.c.b16 %v3102, %v3086
        %v3647 = vpack.c.b16 %v3103, %v3087
        %v3648 = vpack.c.b16 %v3104, %v3088
        %v3649 = vpack.c.b16 %v3105, %v3089
        %v3650 = vpack.c.b16 %v3106, %v3090
        %v3651 = vpack.c.b16 %v3107, %v3091
        %v3652 = vpack.c.b16 %v3108, %v3092
        %v3653 = vpack.c.b16 %v3109, %v3093
        %v3654 = vpack.c.b16 %v3110, %v3094
        %v3655 = vpack.c.b16 %v3111, %v3095
        %v3656 = vpack.c.b16 %v3112, %v3096
        %v3657 = vpack.c.b16 %v3129, %v3113
        %v3658 = vpack.c.b16 %v3130, %v3114
        %v3659 = vpack.c.b16 %v3131, %v3115
        %v3660 = vpack.c.b16 %v3132, %v3116
        %v3661 = vpack.c.b16 %v3133, %v3117
        %v3662 = vpack.c.b16 %v3134, %v3118
        %v3663 = vpack.c.b16 %v3135, %v3119
        %v3664 = vpack.c.b16 %v3136, %v3120
        %v3665 = vpack.c.b16 %v3137, %v3121
        %v3666 = vpack.c.b16 %v3138, %v3122
        %v3667 = vpack.c.b16 %v3139, %v3123
        %v3668 = vpack.c.b16 %v3140, %v3124
        %v3669 = vpack.c.b16 %v3141, %v3125
        %v3670 = vpack.c.b16 %v3142, %v3126
        %v3671 = vpack.c.b16 %v3143, %v3127
        %v3672 = vpack.c.b16 %v3144, %v3128
        %v3673 = vpack.c.b16 %v3161, %v3145
        %v3674 = vpack.c.b16 %v3162, %v3146
        %v3675 = vpack.c.b16 %v3163, %v3147
        %v3676 = vpack.c.b16 %v3164, %v3148
        %v3677 = vpack.c.b16 %v3165, %v3149
        %v3678 = vpack.c.b16 %v3166, %v3150
        %v3679 = vpack.c.b16 %v3167, %v3151
        %v3680 = vpack.c.b16 %v3168, %v3152
        %v3681 = vpack.c.b16 %v3169, %v3153
        %v3682 = vpack.c.b16 %v3170, %v3154
        %v3683 = vpack.c.b16 %v3171, %v3155
        %v3684 = vpack.c.b16 %v3172, %v3156
        %v3685 = vpack.c.b16 %v3173, %v3157
        %v3686 = vpack.c.b16 %v3174, %v3158
        %v3687 = vpack.c.b16 %v3175, %v3159
        %v3688 = vpack.c.b16 %v3176, %v3160
        %4201 = vmatpush.bf16.msra.mxu0 %v3289
        %4202 = vmatpush.bf16.msra.mxu0 %v3273
        %4203 = vmatpush.bf16.msra.mxu0 %v3257
        %4204 = vmatpush.bf16.msra.mxu0 %v3241
        %4205 = vmatpush.bf16.msra.mxu0 %v3225
        %4206 = vmatpush.bf16.msra.mxu0 %v3209
        %4207 = vmatpush.bf16.msra.mxu0 %v3193
        %4208 = vmatpush.bf16.msra.mxu0 %v3177
        %4209 = vmatmul.bf16.gmra.mxu0 %v1089
        %v4210 = vpop.f32.mrf.mxu0
        %v4211 = vadd.f32 %v1609, %v4210
        %v4212 = vpop.f32.mrf.mxu0
        %v4213 = vadd.f32 %v1609, %v4212
        %4214 = vdwg.mxu0
        %4215 = vmatpush.bf16.msra.mxu0 %v3417
        %4216 = vmatpush.bf16.msra.mxu0 %v3401
        %4217 = vmatpush.bf16.msra.mxu0 %v3385
        %4218 = vmatpush.bf16.msra.mxu0 %v3369
        %4219 = vmatpush.bf16.msra.mxu0 %v3353
        %4220 = vmatpush.bf16.msra.mxu0 %v3337
        %4221 = vmatpush.bf16.msra.mxu0 %v3321
        %4222 = vmatpush.bf16.msra.mxu0 %v3305
        %4223 = vmatmul.bf16.gmra.mxu0 %v1090
        %v4224 = vpop.f32.mrf.mxu0
        %v4225 = vadd.f32 %v4211, %v4224
        %v4226 = vpop.f32.mrf.mxu0
        %v4227 = vadd.f32 %v4213, %v4226
        %4228 = vdwg.mxu0
        %4229 = vmatpush.bf16.msra.mxu0 %v3545
        %4230 = vmatpush.bf16.msra.mxu0 %v3529
        %4231 = vmatpush.bf16.msra.mxu0 %v3513
        %4232 = vmatpush.bf16.msra.mxu0 %v3497
        %4233 = vmatpush.bf16.msra.mxu0 %v3481
        %4234 = vmatpush.bf16.msra.mxu0 %v3465
        %4235 = vmatpush.bf16.msra.mxu0 %v3449
        %4236 = vmatpush.bf16.msra.mxu0 %v3433
        %4237 = vmatmul.bf16.gmra.mxu0 %v1091
        %v4238 = vpop.f32.mrf.mxu0
        %v4239 = vadd.f32 %v4225, %v4238
        %v4240 = vpop.f32.mrf.mxu0
        %v4241 = vadd.f32 %v4227, %v4240
        %4242 = vdwg.mxu0
        %4243 = vmatpush.bf16.msra.mxu0 %v3673
        %4244 = vmatpush.bf16.msra.mxu0 %v3657
        %4245 = vmatpush.bf16.msra.mxu0 %v3641
        %4246 = vmatpush.bf16.msra.mxu0 %v3625
        %4247 = vmatpush.bf16.msra.mxu0 %v3609
        %4248 = vmatpush.bf16.msra.mxu0 %v3593
        %4249 = vmatpush.bf16.msra.mxu0 %v3577
        %4250 = vmatpush.bf16.msra.mxu0 %v3561
        %4251 = vmatmul.bf16.gmra.mxu0 %v1092
        %v4252 = vpop.f32.mrf.mxu0
        %v4253 = vadd.f32 %v4239, %v4252
        %v4254 = vpop.f32.mrf.mxu0
        %v4255 = vadd.f32 %v4241, %v4254
        %4256 = vdwg.mxu0
        %4257 = vmatpush.bf16.msra.mxu0 %v3290
        %4258 = vmatpush.bf16.msra.mxu0 %v3274
        %4259 = vmatpush.bf16.msra.mxu0 %v3258
        %4260 = vmatpush.bf16.msra.mxu0 %v3242
        %4261 = vmatpush.bf16.msra.mxu0 %v3226
        %4262 = vmatpush.bf16.msra.mxu0 %v3210
        %4263 = vmatpush.bf16.msra.mxu0 %v3194
        %4264 = vmatpush.bf16.msra.mxu0 %v3178
        %4265 = vmatmul.bf16.gmra.mxu0 %v1089
        %v4266 = vpop.f32.mrf.mxu0
        %v4267 = vadd.f32 %v1610, %v4266
        %v4268 = vpop.f32.mrf.mxu0
        %v4269 = vadd.f32 %v1610, %v4268
        %4270 = vdwg.mxu0
        %4271 = vmatpush.bf16.msra.mxu0 %v3418
        %4272 = vmatpush.bf16.msra.mxu0 %v3402
        %4273 = vmatpush.bf16.msra.mxu0 %v3386
        %4274 = vmatpush.bf16.msra.mxu0 %v3370
        %4275 = vmatpush.bf16.msra.mxu0 %v3354
        %4276 = vmatpush.bf16.msra.mxu0 %v3338
        %4277 = vmatpush.bf16.msra.mxu0 %v3322
        %4278 = vmatpush.bf16.msra.mxu0 %v3306
        %4279 = vmatmul.bf16.gmra.mxu0 %v1090
        %v4280 = vpop.f32.mrf.mxu0
        %v4281 = vadd.f32 %v4267, %v4280
        %v4282 = vpop.f32.mrf.mxu0
        %v4283 = vadd.f32 %v4269, %v4282
        %4284 = vdwg.mxu0
        %4285 = vmatpush.bf16.msra.mxu0 %v3546
        %4286 = vmatpush.bf16.msra.mxu0 %v3530
        %4287 = vmatpush.bf16.msra.mxu0 %v3514
        %4288 = vmatpush.bf16.msra.mxu0 %v3498
        %4289 = vmatpush.bf16.msra.mxu0 %v3482
        %4290 = vmatpush.bf16.msra.mxu0 %v3466
        %4291 = vmatpush.bf16.msra.mxu0 %v3450
        %4292 = vmatpush.bf16.msra.mxu0 %v3434
        %4293 = vmatmul.bf16.gmra.mxu0 %v1091
        %v4294 = vpop.f32.mrf.mxu0
        %v4295 = vadd.f32 %v4281, %v4294
        %v4296 = vpop.f32.mrf.mxu0
        %v4297 = vadd.f32 %v4283, %v4296
        %4298 = vdwg.mxu0
        %4299 = vmatpush.bf16.msra.mxu0 %v3674
        %4300 = vmatpush.bf16.msra.mxu0 %v3658
        %4301 = vmatpush.bf16.msra.mxu0 %v3642
        %4302 = vmatpush.bf16.msra.mxu0 %v3626
        %4303 = vmatpush.bf16.msra.mxu0 %v3610
        %4304 = vmatpush.bf16.msra.mxu0 %v3594
        %4305 = vmatpush.bf16.msra.mxu0 %v3578
        %4306 = vmatpush.bf16.msra.mxu0 %v3562
        %4307 = vmatmul.bf16.gmra.mxu0 %v1092
        %v4308 = vpop.f32.mrf.mxu0
        %v4309 = vadd.f32 %v4295, %v4308
        %v4310 = vpop.f32.mrf.mxu0
        %v4311 = vadd.f32 %v4297, %v4310
        %4312 = vdwg.mxu0
        %4313 = vmatpush.bf16.msra.mxu0 %v3291
        %4314 = vmatpush.bf16.msra.mxu0 %v3275
        %4315 = vmatpush.bf16.msra.mxu0 %v3259
        %4316 = vmatpush.bf16.msra.mxu0 %v3243
        %4317 = vmatpush.bf16.msra.mxu0 %v3227
        %4318 = vmatpush.bf16.msra.mxu0 %v3211
        %4319 = vmatpush.bf16.msra.mxu0 %v3195
        %4320 = vmatpush.bf16.msra.mxu0 %v3179
        %4321 = vmatmul.bf16.gmra.mxu0 %v1089
        %v4322 = vpop.f32.mrf.mxu0
        %v4323 = vadd.f32 %v1611, %v4322
        %v4324 = vpop.f32.mrf.mxu0
        %v4325 = vadd.f32 %v1611, %v4324
        %4326 = vdwg.mxu0
        %4327 = vmatpush.bf16.msra.mxu0 %v3419
        %4328 = vmatpush.bf16.msra.mxu0 %v3403
        %4329 = vmatpush.bf16.msra.mxu0 %v3387
        %4330 = vmatpush.bf16.msra.mxu0 %v3371
        %4331 = vmatpush.bf16.msra.mxu0 %v3355
        %4332 = vmatpush.bf16.msra.mxu0 %v3339
        %4333 = vmatpush.bf16.msra.mxu0 %v3323
        %4334 = vmatpush.bf16.msra.mxu0 %v3307
        %4335 = vmatmul.bf16.gmra.mxu0 %v1090
        %v4336 = vpop.f32.mrf.mxu0
        %v4337 = vadd.f32 %v4323, %v4336
        %v4338 = vpop.f32.mrf.mxu0
        %v4339 = vadd.f32 %v4325, %v4338
        %4340 = vdwg.mxu0
        %4341 = vmatpush.bf16.msra.mxu0 %v3547
        %4342 = vmatpush.bf16.msra.mxu0 %v3531
        %4343 = vmatpush.bf16.msra.mxu0 %v3515
        %4344 = vmatpush.bf16.msra.mxu0 %v3499
        %4345 = vmatpush.bf16.msra.mxu0 %v3483
        %4346 = vmatpush.bf16.msra.mxu0 %v3467
        %4347 = vmatpush.bf16.msra.mxu0 %v3451
        %4348 = vmatpush.bf16.msra.mxu0 %v3435
        %4349 = vmatmul.bf16.gmra.mxu0 %v1091
        %v4350 = vpop.f32.mrf.mxu0
        %v4351 = vadd.f32 %v4337, %v4350
        %v4352 = vpop.f32.mrf.mxu0
        %v4353 = vadd.f32 %v4339, %v4352
        %4354 = vdwg.mxu0
        %4355 = vmatpush.bf16.msra.mxu0 %v3675
        %4356 = vmatpush.bf16.msra.mxu0 %v3659
        %4357 = vmatpush.bf16.msra.mxu0 %v3643
        %4358 = vmatpush.bf16.msra.mxu0 %v3627
        %4359 = vmatpush.bf16.msra.mxu0 %v3611
        %4360 = vmatpush.bf16.msra.mxu0 %v3595
        %4361 = vmatpush.bf16.msra.mxu0 %v3579
        %4362 = vmatpush.bf16.msra.mxu0 %v3563
        %4363 = vmatmul.bf16.gmra.mxu0 %v1092
        %v4364 = vpop.f32.mrf.mxu0
        %v4365 = vadd.f32 %v4351, %v4364
        %v4366 = vpop.f32.mrf.mxu0
        %v4367 = vadd.f32 %v4353, %v4366
        %4368 = vdwg.mxu0
        %4369 = vmatpush.bf16.msra.mxu0 %v3292
        %4370 = vmatpush.bf16.msra.mxu0 %v3276
        %4371 = vmatpush.bf16.msra.mxu0 %v3260
        %4372 = vmatpush.bf16.msra.mxu0 %v3244
        %4373 = vmatpush.bf16.msra.mxu0 %v3228
        %4374 = vmatpush.bf16.msra.mxu0 %v3212
        %4375 = vmatpush.bf16.msra.mxu0 %v3196
        %4376 = vmatpush.bf16.msra.mxu0 %v3180
        %4377 = vmatmul.bf16.gmra.mxu0 %v1089
        %v4378 = vpop.f32.mrf.mxu0
        %v4379 = vadd.f32 %v1612, %v4378
        %v4380 = vpop.f32.mrf.mxu0
        %v4381 = vadd.f32 %v1612, %v4380
        %4382 = vdwg.mxu0
        %4383 = vmatpush.bf16.msra.mxu0 %v3420
        %4384 = vmatpush.bf16.msra.mxu0 %v3404
        %4385 = vmatpush.bf16.msra.mxu0 %v3388
        %4386 = vmatpush.bf16.msra.mxu0 %v3372
        %4387 = vmatpush.bf16.msra.mxu0 %v3356
        %4388 = vmatpush.bf16.msra.mxu0 %v3340
        %4389 = vmatpush.bf16.msra.mxu0 %v3324
        %4390 = vmatpush.bf16.msra.mxu0 %v3308
        %4391 = vmatmul.bf16.gmra.mxu0 %v1090
        %v4392 = vpop.f32.mrf.mxu0
        %v4393 = vadd.f32 %v4379, %v4392
        %v4394 = vpop.f32.mrf.mxu0
        %v4395 = vadd.f32 %v4381, %v4394
        %4396 = vdwg.mxu0
        %4397 = vmatpush.bf16.msra.mxu0 %v3548
        %4398 = vmatpush.bf16.msra.mxu0 %v3532
        %4399 = vmatpush.bf16.msra.mxu0 %v3516
        %4400 = vmatpush.bf16.msra.mxu0 %v3500
        %4401 = vmatpush.bf16.msra.mxu0 %v3484
        %4402 = vmatpush.bf16.msra.mxu0 %v3468
        %4403 = vmatpush.bf16.msra.mxu0 %v3452
        %4404 = vmatpush.bf16.msra.mxu0 %v3436
        %4405 = vmatmul.bf16.gmra.mxu0 %v1091
        %v4406 = vpop.f32.mrf.mxu0
        %v4407 = vadd.f32 %v4393, %v4406
        %v4408 = vpop.f32.mrf.mxu0
        %v4409 = vadd.f32 %v4395, %v4408
        %4410 = vdwg.mxu0
        %4411 = vmatpush.bf16.msra.mxu0 %v3676
        %4412 = vmatpush.bf16.msra.mxu0 %v3660
        %4413 = vmatpush.bf16.msra.mxu0 %v3644
        %4414 = vmatpush.bf16.msra.mxu0 %v3628
        %4415 = vmatpush.bf16.msra.mxu0 %v3612
        %4416 = vmatpush.bf16.msra.mxu0 %v3596
        %4417 = vmatpush.bf16.msra.mxu0 %v3580
        %4418 = vmatpush.bf16.msra.mxu0 %v3564
        %4419 = vmatmul.bf16.gmra.mxu0 %v1092
        %v4420 = vpop.f32.mrf.mxu0
        %v4421 = vadd.f32 %v4407, %v4420
        %v4422 = vpop.f32.mrf.mxu0
        %v4423 = vadd.f32 %v4409, %v4422
        %4424 = vdwg.mxu0
        %4425 = vmatpush.bf16.msra.mxu0 %v3293
        %4426 = vmatpush.bf16.msra.mxu0 %v3277
        %4427 = vmatpush.bf16.msra.mxu0 %v3261
        %4428 = vmatpush.bf16.msra.mxu0 %v3245
        %4429 = vmatpush.bf16.msra.mxu0 %v3229
        %4430 = vmatpush.bf16.msra.mxu0 %v3213
        %4431 = vmatpush.bf16.msra.mxu0 %v3197
        %4432 = vmatpush.bf16.msra.mxu0 %v3181
        %4433 = vmatmul.bf16.gmra.mxu0 %v1089
        %v4434 = vpop.f32.mrf.mxu0
        %v4435 = vadd.f32 %v1613, %v4434
        %v4436 = vpop.f32.mrf.mxu0
        %v4437 = vadd.f32 %v1613, %v4436
        %4438 = vdwg.mxu0
        %4439 = vmatpush.bf16.msra.mxu0 %v3421
        %4440 = vmatpush.bf16.msra.mxu0 %v3405
        %4441 = vmatpush.bf16.msra.mxu0 %v3389
        %4442 = vmatpush.bf16.msra.mxu0 %v3373
        %4443 = vmatpush.bf16.msra.mxu0 %v3357
        %4444 = vmatpush.bf16.msra.mxu0 %v3341
        %4445 = vmatpush.bf16.msra.mxu0 %v3325
        %4446 = vmatpush.bf16.msra.mxu0 %v3309
        %4447 = vmatmul.bf16.gmra.mxu0 %v1090
        %v4448 = vpop.f32.mrf.mxu0
        %v4449 = vadd.f32 %v4435, %v4448
        %v4450 = vpop.f32.mrf.mxu0
        %v4451 = vadd.f32 %v4437, %v4450
        %4452 = vdwg.mxu0
        %4453 = vmatpush.bf16.msra.mxu0 %v3549
        %4454 = vmatpush.bf16.msra.mxu0 %v3533
        %4455 = vmatpush.bf16.msra.mxu0 %v3517
        %4456 = vmatpush.bf16.msra.mxu0 %v3501
        %4457 = vmatpush.bf16.msra.mxu0 %v3485
        %4458 = vmatpush.bf16.msra.mxu0 %v3469
        %4459 = vmatpush.bf16.msra.mxu0 %v3453
        %4460 = vmatpush.bf16.msra.mxu0 %v3437
        %4461 = vmatmul.bf16.gmra.mxu0 %v1091
        %v4462 = vpop.f32.mrf.mxu0
        %v4463 = vadd.f32 %v4449, %v4462
        %v4464 = vpop.f32.mrf.mxu0
        %v4465 = vadd.f32 %v4451, %v4464
        %4466 = vdwg.mxu0
        %4467 = vmatpush.bf16.msra.mxu0 %v3677
        %4468 = vmatpush.bf16.msra.mxu0 %v3661
        %4469 = vmatpush.bf16.msra.mxu0 %v3645
        %4470 = vmatpush.bf16.msra.mxu0 %v3629
        %4471 = vmatpush.bf16.msra.mxu0 %v3613
        %4472 = vmatpush.bf16.msra.mxu0 %v3597
        %4473 = vmatpush.bf16.msra.mxu0 %v3581
        %4474 = vmatpush.bf16.msra.mxu0 %v3565
        %4475 = vmatmul.bf16.gmra.mxu0 %v1092
        %v4476 = vpop.f32.mrf.mxu0
        %v4477 = vadd.f32 %v4463, %v4476
        %v4478 = vpop.f32.mrf.mxu0
        %v4479 = vadd.f32 %v4465, %v4478
        %4480 = vdwg.mxu0
        %4481 = vmatpush.bf16.msra.mxu0 %v3294
        %4482 = vmatpush.bf16.msra.mxu0 %v3278
        %4483 = vmatpush.bf16.msra.mxu0 %v3262
        %4484 = vmatpush.bf16.msra.mxu0 %v3246
        %4485 = vmatpush.bf16.msra.mxu0 %v3230
        %4486 = vmatpush.bf16.msra.mxu0 %v3214
        %4487 = vmatpush.bf16.msra.mxu0 %v3198
        %4488 = vmatpush.bf16.msra.mxu0 %v3182
        %4489 = vmatmul.bf16.gmra.mxu0 %v1089
        %v4490 = vpop.f32.mrf.mxu0
        %v4491 = vadd.f32 %v1614, %v4490
        %v4492 = vpop.f32.mrf.mxu0
        %v4493 = vadd.f32 %v1614, %v4492
        %4494 = vdwg.mxu0
        %4495 = vmatpush.bf16.msra.mxu0 %v3422
        %4496 = vmatpush.bf16.msra.mxu0 %v3406
        %4497 = vmatpush.bf16.msra.mxu0 %v3390
        %4498 = vmatpush.bf16.msra.mxu0 %v3374
        %4499 = vmatpush.bf16.msra.mxu0 %v3358
        %4500 = vmatpush.bf16.msra.mxu0 %v3342
        %4501 = vmatpush.bf16.msra.mxu0 %v3326
        %4502 = vmatpush.bf16.msra.mxu0 %v3310
        %4503 = vmatmul.bf16.gmra.mxu0 %v1090
        %v4504 = vpop.f32.mrf.mxu0
        %v4505 = vadd.f32 %v4491, %v4504
        %v4506 = vpop.f32.mrf.mxu0
        %v4507 = vadd.f32 %v4493, %v4506
        %4508 = vdwg.mxu0
        %4509 = vmatpush.bf16.msra.mxu0 %v3550
        %4510 = vmatpush.bf16.msra.mxu0 %v3534
        %4511 = vmatpush.bf16.msra.mxu0 %v3518
        %4512 = vmatpush.bf16.msra.mxu0 %v3502
        %4513 = vmatpush.bf16.msra.mxu0 %v3486
        %4514 = vmatpush.bf16.msra.mxu0 %v3470
        %4515 = vmatpush.bf16.msra.mxu0 %v3454
        %4516 = vmatpush.bf16.msra.mxu0 %v3438
        %4517 = vmatmul.bf16.gmra.mxu0 %v1091
        %v4518 = vpop.f32.mrf.mxu0
        %v4519 = vadd.f32 %v4505, %v4518
        %v4520 = vpop.f32.mrf.mxu0
        %v4521 = vadd.f32 %v4507, %v4520
        %4522 = vdwg.mxu0
        %4523 = vmatpush.bf16.msra.mxu0 %v3678
        %4524 = vmatpush.bf16.msra.mxu0 %v3662
        %4525 = vmatpush.bf16.msra.mxu0 %v3646
        %4526 = vmatpush.bf16.msra.mxu0 %v3630
        %4527 = vmatpush.bf16.msra.mxu0 %v3614
        %4528 = vmatpush.bf16.msra.mxu0 %v3598
        %4529 = vmatpush.bf16.msra.mxu0 %v3582
        %4530 = vmatpush.bf16.msra.mxu0 %v3566
        %4531 = vmatmul.bf16.gmra.mxu0 %v1092
        %v4532 = vpop.f32.mrf.mxu0
        %v4533 = vadd.f32 %v4519, %v4532
        %v4534 = vpop.f32.mrf.mxu0
        %v4535 = vadd.f32 %v4521, %v4534
        %4536 = vdwg.mxu0
        %4537 = vmatpush.bf16.msra.mxu0 %v3295
        %4538 = vmatpush.bf16.msra.mxu0 %v3279
        %4539 = vmatpush.bf16.msra.mxu0 %v3263
        %4540 = vmatpush.bf16.msra.mxu0 %v3247
        %4541 = vmatpush.bf16.msra.mxu0 %v3231
        %4542 = vmatpush.bf16.msra.mxu0 %v3215
        %4543 = vmatpush.bf16.msra.mxu0 %v3199
        %4544 = vmatpush.bf16.msra.mxu0 %v3183
        %4545 = vmatmul.bf16.gmra.mxu0 %v1089
        %v4546 = vpop.f32.mrf.mxu0
        %v4547 = vadd.f32 %v1615, %v4546
        %v4548 = vpop.f32.mrf.mxu0
        %v4549 = vadd.f32 %v1615, %v4548
        %4550 = vdwg.mxu0
        %4551 = vmatpush.bf16.msra.mxu0 %v3423
        %4552 = vmatpush.bf16.msra.mxu0 %v3407
        %4553 = vmatpush.bf16.msra.mxu0 %v3391
        %4554 = vmatpush.bf16.msra.mxu0 %v3375
        %4555 = vmatpush.bf16.msra.mxu0 %v3359
        %4556 = vmatpush.bf16.msra.mxu0 %v3343
        %4557 = vmatpush.bf16.msra.mxu0 %v3327
        %4558 = vmatpush.bf16.msra.mxu0 %v3311
        %4559 = vmatmul.bf16.gmra.mxu0 %v1090
        %v4560 = vpop.f32.mrf.mxu0
        %v4561 = vadd.f32 %v4547, %v4560
        %v4562 = vpop.f32.mrf.mxu0
        %v4563 = vadd.f32 %v4549, %v4562
        %4564 = vdwg.mxu0
        %4565 = vmatpush.bf16.msra.mxu0 %v3551
        %4566 = vmatpush.bf16.msra.mxu0 %v3535
        %4567 = vmatpush.bf16.msra.mxu0 %v3519
        %4568 = vmatpush.bf16.msra.mxu0 %v3503
        %4569 = vmatpush.bf16.msra.mxu0 %v3487
        %4570 = vmatpush.bf16.msra.mxu0 %v3471
        %4571 = vmatpush.bf16.msra.mxu0 %v3455
        %4572 = vmatpush.bf16.msra.mxu0 %v3439
        %4573 = vmatmul.bf16.gmra.mxu0 %v1091
        %v4574 = vpop.f32.mrf.mxu0
        %v4575 = vadd.f32 %v4561, %v4574
        %v4576 = vpop.f32.mrf.mxu0
        %v4577 = vadd.f32 %v4563, %v4576
        %4578 = vdwg.mxu0
        %4579 = vmatpush.bf16.msra.mxu0 %v3679
        %4580 = vmatpush.bf16.msra.mxu0 %v3663
        %4581 = vmatpush.bf16.msra.mxu0 %v3647
        %4582 = vmatpush.bf16.msra.mxu0 %v3631
        %4583 = vmatpush.bf16.msra.mxu0 %v3615
        %4584 = vmatpush.bf16.msra.mxu0 %v3599
        %4585 = vmatpush.bf16.msra.mxu0 %v3583
        %4586 = vmatpush.bf16.msra.mxu0 %v3567
        %4587 = vmatmul.bf16.gmra.mxu0 %v1092
        %v4588 = vpop.f32.mrf.mxu0
        %v4589 = vadd.f32 %v4575, %v4588
        %v4590 = vpop.f32.mrf.mxu0
        %v4591 = vadd.f32 %v4577, %v4590
        %4592 = vdwg.mxu0
        %4593 = vmatpush.bf16.msra.mxu0 %v3296
        %4594 = vmatpush.bf16.msra.mxu0 %v3280
        %4595 = vmatpush.bf16.msra.mxu0 %v3264
        %4596 = vmatpush.bf16.msra.mxu0 %v3248
        %4597 = vmatpush.bf16.msra.mxu0 %v3232
        %4598 = vmatpush.bf16.msra.mxu0 %v3216
        %4599 = vmatpush.bf16.msra.mxu0 %v3200
        %4600 = vmatpush.bf16.msra.mxu0 %v3184
        %4601 = vmatmul.bf16.gmra.mxu0 %v1089
        %v4602 = vpop.f32.mrf.mxu0
        %v4603 = vadd.f32 %v1616, %v4602
        %v4604 = vpop.f32.mrf.mxu0
        %v4605 = vadd.f32 %v1616, %v4604
        %4606 = vdwg.mxu0
        %4607 = vmatpush.bf16.msra.mxu0 %v3424
        %4608 = vmatpush.bf16.msra.mxu0 %v3408
        %4609 = vmatpush.bf16.msra.mxu0 %v3392
        %4610 = vmatpush.bf16.msra.mxu0 %v3376
        %4611 = vmatpush.bf16.msra.mxu0 %v3360
        %4612 = vmatpush.bf16.msra.mxu0 %v3344
        %4613 = vmatpush.bf16.msra.mxu0 %v3328
        %4614 = vmatpush.bf16.msra.mxu0 %v3312
        %4615 = vmatmul.bf16.gmra.mxu0 %v1090
        %v4616 = vpop.f32.mrf.mxu0
        %v4617 = vadd.f32 %v4603, %v4616
        %v4618 = vpop.f32.mrf.mxu0
        %v4619 = vadd.f32 %v4605, %v4618
        %4620 = vdwg.mxu0
        %4621 = vmatpush.bf16.msra.mxu0 %v3552
        %4622 = vmatpush.bf16.msra.mxu0 %v3536
        %4623 = vmatpush.bf16.msra.mxu0 %v3520
        %4624 = vmatpush.bf16.msra.mxu0 %v3504
        %4625 = vmatpush.bf16.msra.mxu0 %v3488
        %4626 = vmatpush.bf16.msra.mxu0 %v3472
        %4627 = vmatpush.bf16.msra.mxu0 %v3456
        %4628 = vmatpush.bf16.msra.mxu0 %v3440
        %4629 = vmatmul.bf16.gmra.mxu0 %v1091
        %v4630 = vpop.f32.mrf.mxu0
        %v4631 = vadd.f32 %v4617, %v4630
        %v4632 = vpop.f32.mrf.mxu0
        %v4633 = vadd.f32 %v4619, %v4632
        %4634 = vdwg.mxu0
        %4635 = vmatpush.bf16.msra.mxu0 %v3680
        %4636 = vmatpush.bf16.msra.mxu0 %v3664
        %4637 = vmatpush.bf16.msra.mxu0 %v3648
        %4638 = vmatpush.bf16.msra.mxu0 %v3632
        %4639 = vmatpush.bf16.msra.mxu0 %v3616
        %4640 = vmatpush.bf16.msra.mxu0 %v3600
        %4641 = vmatpush.bf16.msra.mxu0 %v3584
        %4642 = vmatpush.bf16.msra.mxu0 %v3568
        %4643 = vmatmul.bf16.gmra.mxu0 %v1092
        %v4644 = vpop.f32.mrf.mxu0
        %v4645 = vadd.f32 %v4631, %v4644
        %v4646 = vpop.f32.mrf.mxu0
        %v4647 = vadd.f32 %v4633, %v4646
        %4648 = vdwg.mxu0
        %4649 = vmatpush.bf16.msra.mxu0 %v3297
        %4650 = vmatpush.bf16.msra.mxu0 %v3281
        %4651 = vmatpush.bf16.msra.mxu0 %v3265
        %4652 = vmatpush.bf16.msra.mxu0 %v3249
        %4653 = vmatpush.bf16.msra.mxu0 %v3233
        %4654 = vmatpush.bf16.msra.mxu0 %v3217
        %4655 = vmatpush.bf16.msra.mxu0 %v3201
        %4656 = vmatpush.bf16.msra.mxu0 %v3185
        %4657 = vmatmul.bf16.gmra.mxu0 %v1089
        %v4658 = vpop.f32.mrf.mxu0
        %v4659 = vadd.f32 %v1617, %v4658
        %v4660 = vpop.f32.mrf.mxu0
        %v4661 = vadd.f32 %v1617, %v4660
        %4662 = vdwg.mxu0
        %4663 = vmatpush.bf16.msra.mxu0 %v3425
        %4664 = vmatpush.bf16.msra.mxu0 %v3409
        %4665 = vmatpush.bf16.msra.mxu0 %v3393
        %4666 = vmatpush.bf16.msra.mxu0 %v3377
        %4667 = vmatpush.bf16.msra.mxu0 %v3361
        %4668 = vmatpush.bf16.msra.mxu0 %v3345
        %4669 = vmatpush.bf16.msra.mxu0 %v3329
        %4670 = vmatpush.bf16.msra.mxu0 %v3313
        %4671 = vmatmul.bf16.gmra.mxu0 %v1090
        %v4672 = vpop.f32.mrf.mxu0
        %v4673 = vadd.f32 %v4659, %v4672
        %v4674 = vpop.f32.mrf.mxu0
        %v4675 = vadd.f32 %v4661, %v4674
        %4676 = vdwg.mxu0
        %4677 = vmatpush.bf16.msra.mxu0 %v3553
        %4678 = vmatpush.bf16.msra.mxu0 %v3537
        %4679 = vmatpush.bf16.msra.mxu0 %v3521
        %4680 = vmatpush.bf16.msra.mxu0 %v3505
        %4681 = vmatpush.bf16.msra.mxu0 %v3489
        %4682 = vmatpush.bf16.msra.mxu0 %v3473
        %4683 = vmatpush.bf16.msra.mxu0 %v3457
        %4684 = vmatpush.bf16.msra.mxu0 %v3441
        %4685 = vmatmul.bf16.gmra.mxu0 %v1091
        %v4686 = vpop.f32.mrf.mxu0
        %v4687 = vadd.f32 %v4673, %v4686
        %v4688 = vpop.f32.mrf.mxu0
        %v4689 = vadd.f32 %v4675, %v4688
        %4690 = vdwg.mxu0
        %4691 = vmatpush.bf16.msra.mxu0 %v3681
        %4692 = vmatpush.bf16.msra.mxu0 %v3665
        %4693 = vmatpush.bf16.msra.mxu0 %v3649
        %4694 = vmatpush.bf16.msra.mxu0 %v3633
        %4695 = vmatpush.bf16.msra.mxu0 %v3617
        %4696 = vmatpush.bf16.msra.mxu0 %v3601
        %4697 = vmatpush.bf16.msra.mxu0 %v3585
        %4698 = vmatpush.bf16.msra.mxu0 %v3569
        %4699 = vmatmul.bf16.gmra.mxu0 %v1092
        %v4700 = vpop.f32.mrf.mxu0
        %v4701 = vadd.f32 %v4687, %v4700
        %v4702 = vpop.f32.mrf.mxu0
        %v4703 = vadd.f32 %v4689, %v4702
        %4704 = vdwg.mxu0
        %4705 = vmatpush.bf16.msra.mxu0 %v3298
        %4706 = vmatpush.bf16.msra.mxu0 %v3282
        %4707 = vmatpush.bf16.msra.mxu0 %v3266
        %4708 = vmatpush.bf16.msra.mxu0 %v3250
        %4709 = vmatpush.bf16.msra.mxu0 %v3234
        %4710 = vmatpush.bf16.msra.mxu0 %v3218
        %4711 = vmatpush.bf16.msra.mxu0 %v3202
        %4712 = vmatpush.bf16.msra.mxu0 %v3186
        %4713 = vmatmul.bf16.gmra.mxu0 %v1089
        %v4714 = vpop.f32.mrf.mxu0
        %v4715 = vadd.f32 %v1618, %v4714
        %v4716 = vpop.f32.mrf.mxu0
        %v4717 = vadd.f32 %v1618, %v4716
        %4718 = vdwg.mxu0
        %4719 = vmatpush.bf16.msra.mxu0 %v3426
        %4720 = vmatpush.bf16.msra.mxu0 %v3410
        %4721 = vmatpush.bf16.msra.mxu0 %v3394
        %4722 = vmatpush.bf16.msra.mxu0 %v3378
        %4723 = vmatpush.bf16.msra.mxu0 %v3362
        %4724 = vmatpush.bf16.msra.mxu0 %v3346
        %4725 = vmatpush.bf16.msra.mxu0 %v3330
        %4726 = vmatpush.bf16.msra.mxu0 %v3314
        %4727 = vmatmul.bf16.gmra.mxu0 %v1090
        %v4728 = vpop.f32.mrf.mxu0
        %v4729 = vadd.f32 %v4715, %v4728
        %v4730 = vpop.f32.mrf.mxu0
        %v4731 = vadd.f32 %v4717, %v4730
        %4732 = vdwg.mxu0
        %4733 = vmatpush.bf16.msra.mxu0 %v3554
        %4734 = vmatpush.bf16.msra.mxu0 %v3538
        %4735 = vmatpush.bf16.msra.mxu0 %v3522
        %4736 = vmatpush.bf16.msra.mxu0 %v3506
        %4737 = vmatpush.bf16.msra.mxu0 %v3490
        %4738 = vmatpush.bf16.msra.mxu0 %v3474
        %4739 = vmatpush.bf16.msra.mxu0 %v3458
        %4740 = vmatpush.bf16.msra.mxu0 %v3442
        %4741 = vmatmul.bf16.gmra.mxu0 %v1091
        %v4742 = vpop.f32.mrf.mxu0
        %v4743 = vadd.f32 %v4729, %v4742
        %v4744 = vpop.f32.mrf.mxu0
        %v4745 = vadd.f32 %v4731, %v4744
        %4746 = vdwg.mxu0
        %4747 = vmatpush.bf16.msra.mxu0 %v3682
        %4748 = vmatpush.bf16.msra.mxu0 %v3666
        %4749 = vmatpush.bf16.msra.mxu0 %v3650
        %4750 = vmatpush.bf16.msra.mxu0 %v3634
        %4751 = vmatpush.bf16.msra.mxu0 %v3618
        %4752 = vmatpush.bf16.msra.mxu0 %v3602
        %4753 = vmatpush.bf16.msra.mxu0 %v3586
        %4754 = vmatpush.bf16.msra.mxu0 %v3570
        %4755 = vmatmul.bf16.gmra.mxu0 %v1092
        %v4756 = vpop.f32.mrf.mxu0
        %v4757 = vadd.f32 %v4743, %v4756
        %v4758 = vpop.f32.mrf.mxu0
        %v4759 = vadd.f32 %v4745, %v4758
        %4760 = vdwg.mxu0
        %4761 = vmatpush.bf16.msra.mxu0 %v3299
        %4762 = vmatpush.bf16.msra.mxu0 %v3283
        %4763 = vmatpush.bf16.msra.mxu0 %v3267
        %4764 = vmatpush.bf16.msra.mxu0 %v3251
        %4765 = vmatpush.bf16.msra.mxu0 %v3235
        %4766 = vmatpush.bf16.msra.mxu0 %v3219
        %4767 = vmatpush.bf16.msra.mxu0 %v3203
        %4768 = vmatpush.bf16.msra.mxu0 %v3187
        %4769 = vmatmul.bf16.gmra.mxu0 %v1089
        %v4770 = vpop.f32.mrf.mxu0
        %v4771 = vadd.f32 %v1619, %v4770
        %v4772 = vpop.f32.mrf.mxu0
        %v4773 = vadd.f32 %v1619, %v4772
        %4774 = vdwg.mxu0
        %4775 = vmatpush.bf16.msra.mxu0 %v3427
        %4776 = vmatpush.bf16.msra.mxu0 %v3411
        %4777 = vmatpush.bf16.msra.mxu0 %v3395
        %4778 = vmatpush.bf16.msra.mxu0 %v3379
        %4779 = vmatpush.bf16.msra.mxu0 %v3363
        %4780 = vmatpush.bf16.msra.mxu0 %v3347
        %4781 = vmatpush.bf16.msra.mxu0 %v3331
        %4782 = vmatpush.bf16.msra.mxu0 %v3315
        %4783 = vmatmul.bf16.gmra.mxu0 %v1090
        %v4784 = vpop.f32.mrf.mxu0
        %v4785 = vadd.f32 %v4771, %v4784
        %v4786 = vpop.f32.mrf.mxu0
        %v4787 = vadd.f32 %v4773, %v4786
        %4788 = vdwg.mxu0
        %4789 = vmatpush.bf16.msra.mxu0 %v3555
        %4790 = vmatpush.bf16.msra.mxu0 %v3539
        %4791 = vmatpush.bf16.msra.mxu0 %v3523
        %4792 = vmatpush.bf16.msra.mxu0 %v3507
        %4793 = vmatpush.bf16.msra.mxu0 %v3491
        %4794 = vmatpush.bf16.msra.mxu0 %v3475
        %4795 = vmatpush.bf16.msra.mxu0 %v3459
        %4796 = vmatpush.bf16.msra.mxu0 %v3443
        %4797 = vmatmul.bf16.gmra.mxu0 %v1091
        %v4798 = vpop.f32.mrf.mxu0
        %v4799 = vadd.f32 %v4785, %v4798
        %v4800 = vpop.f32.mrf.mxu0
        %v4801 = vadd.f32 %v4787, %v4800
        %4802 = vdwg.mxu0
        %4803 = vmatpush.bf16.msra.mxu0 %v3683
        %4804 = vmatpush.bf16.msra.mxu0 %v3667
        %4805 = vmatpush.bf16.msra.mxu0 %v3651
        %4806 = vmatpush.bf16.msra.mxu0 %v3635
        %4807 = vmatpush.bf16.msra.mxu0 %v3619
        %4808 = vmatpush.bf16.msra.mxu0 %v3603
        %4809 = vmatpush.bf16.msra.mxu0 %v3587
        %4810 = vmatpush.bf16.msra.mxu0 %v3571
        %4811 = vmatmul.bf16.gmra.mxu0 %v1092
        %v4812 = vpop.f32.mrf.mxu0
        %v4813 = vadd.f32 %v4799, %v4812
        %v4814 = vpop.f32.mrf.mxu0
        %v4815 = vadd.f32 %v4801, %v4814
        %4816 = vdwg.mxu0
        %4817 = vmatpush.bf16.msra.mxu0 %v3300
        %4818 = vmatpush.bf16.msra.mxu0 %v3284
        %4819 = vmatpush.bf16.msra.mxu0 %v3268
        %4820 = vmatpush.bf16.msra.mxu0 %v3252
        %4821 = vmatpush.bf16.msra.mxu0 %v3236
        %4822 = vmatpush.bf16.msra.mxu0 %v3220
        %4823 = vmatpush.bf16.msra.mxu0 %v3204
        %4824 = vmatpush.bf16.msra.mxu0 %v3188
        %4825 = vmatmul.bf16.gmra.mxu0 %v1089
        %v4826 = vpop.f32.mrf.mxu0
        %v4827 = vadd.f32 %v1620, %v4826
        %v4828 = vpop.f32.mrf.mxu0
        %v4829 = vadd.f32 %v1620, %v4828
        %4830 = vdwg.mxu0
        %4831 = vmatpush.bf16.msra.mxu0 %v3428
        %4832 = vmatpush.bf16.msra.mxu0 %v3412
        %4833 = vmatpush.bf16.msra.mxu0 %v3396
        %4834 = vmatpush.bf16.msra.mxu0 %v3380
        %4835 = vmatpush.bf16.msra.mxu0 %v3364
        %4836 = vmatpush.bf16.msra.mxu0 %v3348
        %4837 = vmatpush.bf16.msra.mxu0 %v3332
        %4838 = vmatpush.bf16.msra.mxu0 %v3316
        %4839 = vmatmul.bf16.gmra.mxu0 %v1090
        %v4840 = vpop.f32.mrf.mxu0
        %v4841 = vadd.f32 %v4827, %v4840
        %v4842 = vpop.f32.mrf.mxu0
        %v4843 = vadd.f32 %v4829, %v4842
        %4844 = vdwg.mxu0
        %4845 = vmatpush.bf16.msra.mxu0 %v3556
        %4846 = vmatpush.bf16.msra.mxu0 %v3540
        %4847 = vmatpush.bf16.msra.mxu0 %v3524
        %4848 = vmatpush.bf16.msra.mxu0 %v3508
        %4849 = vmatpush.bf16.msra.mxu0 %v3492
        %4850 = vmatpush.bf16.msra.mxu0 %v3476
        %4851 = vmatpush.bf16.msra.mxu0 %v3460
        %4852 = vmatpush.bf16.msra.mxu0 %v3444
        %4853 = vmatmul.bf16.gmra.mxu0 %v1091
        %v4854 = vpop.f32.mrf.mxu0
        %v4855 = vadd.f32 %v4841, %v4854
        %v4856 = vpop.f32.mrf.mxu0
        %v4857 = vadd.f32 %v4843, %v4856
        %4858 = vdwg.mxu0
        %4859 = vmatpush.bf16.msra.mxu0 %v3684
        %4860 = vmatpush.bf16.msra.mxu0 %v3668
        %4861 = vmatpush.bf16.msra.mxu0 %v3652
        %4862 = vmatpush.bf16.msra.mxu0 %v3636
        %4863 = vmatpush.bf16.msra.mxu0 %v3620
        %4864 = vmatpush.bf16.msra.mxu0 %v3604
        %4865 = vmatpush.bf16.msra.mxu0 %v3588
        %4866 = vmatpush.bf16.msra.mxu0 %v3572
        %4867 = vmatmul.bf16.gmra.mxu0 %v1092
        %v4868 = vpop.f32.mrf.mxu0
        %v4869 = vadd.f32 %v4855, %v4868
        %v4870 = vpop.f32.mrf.mxu0
        %v4871 = vadd.f32 %v4857, %v4870
        %4872 = vdwg.mxu0
        %4873 = vmatpush.bf16.msra.mxu0 %v3301
        %4874 = vmatpush.bf16.msra.mxu0 %v3285
        %4875 = vmatpush.bf16.msra.mxu0 %v3269
        %4876 = vmatpush.bf16.msra.mxu0 %v3253
        %4877 = vmatpush.bf16.msra.mxu0 %v3237
        %4878 = vmatpush.bf16.msra.mxu0 %v3221
        %4879 = vmatpush.bf16.msra.mxu0 %v3205
        %4880 = vmatpush.bf16.msra.mxu0 %v3189
        %4881 = vmatmul.bf16.gmra.mxu0 %v1089
        %v4882 = vpop.f32.mrf.mxu0
        %v4883 = vadd.f32 %v1621, %v4882
        %v4884 = vpop.f32.mrf.mxu0
        %v4885 = vadd.f32 %v1621, %v4884
        %4886 = vdwg.mxu0
        %4887 = vmatpush.bf16.msra.mxu0 %v3429
        %4888 = vmatpush.bf16.msra.mxu0 %v3413
        %4889 = vmatpush.bf16.msra.mxu0 %v3397
        %4890 = vmatpush.bf16.msra.mxu0 %v3381
        %4891 = vmatpush.bf16.msra.mxu0 %v3365
        %4892 = vmatpush.bf16.msra.mxu0 %v3349
        %4893 = vmatpush.bf16.msra.mxu0 %v3333
        %4894 = vmatpush.bf16.msra.mxu0 %v3317
        %4895 = vmatmul.bf16.gmra.mxu0 %v1090
        %v4896 = vpop.f32.mrf.mxu0
        %v4897 = vadd.f32 %v4883, %v4896
        %v4898 = vpop.f32.mrf.mxu0
        %v4899 = vadd.f32 %v4885, %v4898
        %4900 = vdwg.mxu0
        %4901 = vmatpush.bf16.msra.mxu0 %v3557
        %4902 = vmatpush.bf16.msra.mxu0 %v3541
        %4903 = vmatpush.bf16.msra.mxu0 %v3525
        %4904 = vmatpush.bf16.msra.mxu0 %v3509
        %4905 = vmatpush.bf16.msra.mxu0 %v3493
        %4906 = vmatpush.bf16.msra.mxu0 %v3477
        %4907 = vmatpush.bf16.msra.mxu0 %v3461
        %4908 = vmatpush.bf16.msra.mxu0 %v3445
        %4909 = vmatmul.bf16.gmra.mxu0 %v1091
        %v4910 = vpop.f32.mrf.mxu0
        %v4911 = vadd.f32 %v4897, %v4910
        %v4912 = vpop.f32.mrf.mxu0
        %v4913 = vadd.f32 %v4899, %v4912
        %4914 = vdwg.mxu0
        %4915 = vmatpush.bf16.msra.mxu0 %v3685
        %4916 = vmatpush.bf16.msra.mxu0 %v3669
        %4917 = vmatpush.bf16.msra.mxu0 %v3653
        %4918 = vmatpush.bf16.msra.mxu0 %v3637
        %4919 = vmatpush.bf16.msra.mxu0 %v3621
        %4920 = vmatpush.bf16.msra.mxu0 %v3605
        %4921 = vmatpush.bf16.msra.mxu0 %v3589
        %4922 = vmatpush.bf16.msra.mxu0 %v3573
        %4923 = vmatmul.bf16.gmra.mxu0 %v1092
        %v4924 = vpop.f32.mrf.mxu0
        %v4925 = vadd.f32 %v4911, %v4924
        %v4926 = vpop.f32.mrf.mxu0
        %v4927 = vadd.f32 %v4913, %v4926
        %4928 = vdwg.mxu0
        %4929 = vmatpush.bf16.msra.mxu0 %v3302
        %4930 = vmatpush.bf16.msra.mxu0 %v3286
        %4931 = vmatpush.bf16.msra.mxu0 %v3270
        %4932 = vmatpush.bf16.msra.mxu0 %v3254
        %4933 = vmatpush.bf16.msra.mxu0 %v3238
        %4934 = vmatpush.bf16.msra.mxu0 %v3222
        %4935 = vmatpush.bf16.msra.mxu0 %v3206
        %4936 = vmatpush.bf16.msra.mxu0 %v3190
        %4937 = vmatmul.bf16.gmra.mxu0 %v1089
        %v4938 = vpop.f32.mrf.mxu0
        %v4939 = vadd.f32 %v1622, %v4938
        %v4940 = vpop.f32.mrf.mxu0
        %v4941 = vadd.f32 %v1622, %v4940
        %4942 = vdwg.mxu0
        %4943 = vmatpush.bf16.msra.mxu0 %v3430
        %4944 = vmatpush.bf16.msra.mxu0 %v3414
        %4945 = vmatpush.bf16.msra.mxu0 %v3398
        %4946 = vmatpush.bf16.msra.mxu0 %v3382
        %4947 = vmatpush.bf16.msra.mxu0 %v3366
        %4948 = vmatpush.bf16.msra.mxu0 %v3350
        %4949 = vmatpush.bf16.msra.mxu0 %v3334
        %4950 = vmatpush.bf16.msra.mxu0 %v3318
        %4951 = vmatmul.bf16.gmra.mxu0 %v1090
        %v4952 = vpop.f32.mrf.mxu0
        %v4953 = vadd.f32 %v4939, %v4952
        %v4954 = vpop.f32.mrf.mxu0
        %v4955 = vadd.f32 %v4941, %v4954
        %4956 = vdwg.mxu0
        %4957 = vmatpush.bf16.msra.mxu0 %v3558
        %4958 = vmatpush.bf16.msra.mxu0 %v3542
        %4959 = vmatpush.bf16.msra.mxu0 %v3526
        %4960 = vmatpush.bf16.msra.mxu0 %v3510
        %4961 = vmatpush.bf16.msra.mxu0 %v3494
        %4962 = vmatpush.bf16.msra.mxu0 %v3478
        %4963 = vmatpush.bf16.msra.mxu0 %v3462
        %4964 = vmatpush.bf16.msra.mxu0 %v3446
        %4965 = vmatmul.bf16.gmra.mxu0 %v1091
        %v4966 = vpop.f32.mrf.mxu0
        %v4967 = vadd.f32 %v4953, %v4966
        %v4968 = vpop.f32.mrf.mxu0
        %v4969 = vadd.f32 %v4955, %v4968
        %4970 = vdwg.mxu0
        %4971 = vmatpush.bf16.msra.mxu0 %v3686
        %4972 = vmatpush.bf16.msra.mxu0 %v3670
        %4973 = vmatpush.bf16.msra.mxu0 %v3654
        %4974 = vmatpush.bf16.msra.mxu0 %v3638
        %4975 = vmatpush.bf16.msra.mxu0 %v3622
        %4976 = vmatpush.bf16.msra.mxu0 %v3606
        %4977 = vmatpush.bf16.msra.mxu0 %v3590
        %4978 = vmatpush.bf16.msra.mxu0 %v3574
        %4979 = vmatmul.bf16.gmra.mxu0 %v1092
        %v4980 = vpop.f32.mrf.mxu0
        %v4981 = vadd.f32 %v4967, %v4980
        %v4982 = vpop.f32.mrf.mxu0
        %v4983 = vadd.f32 %v4969, %v4982
        %4984 = vdwg.mxu0
        %4985 = vmatpush.bf16.msra.mxu0 %v3303
        %4986 = vmatpush.bf16.msra.mxu0 %v3287
        %4987 = vmatpush.bf16.msra.mxu0 %v3271
        %4988 = vmatpush.bf16.msra.mxu0 %v3255
        %4989 = vmatpush.bf16.msra.mxu0 %v3239
        %4990 = vmatpush.bf16.msra.mxu0 %v3223
        %4991 = vmatpush.bf16.msra.mxu0 %v3207
        %4992 = vmatpush.bf16.msra.mxu0 %v3191
        %4993 = vmatmul.bf16.gmra.mxu0 %v1089
        %v4994 = vpop.f32.mrf.mxu0
        %v4995 = vadd.f32 %v1623, %v4994
        %v4996 = vpop.f32.mrf.mxu0
        %v4997 = vadd.f32 %v1623, %v4996
        %4998 = vdwg.mxu0
        %4999 = vmatpush.bf16.msra.mxu0 %v3431
        %5000 = vmatpush.bf16.msra.mxu0 %v3415
        %5001 = vmatpush.bf16.msra.mxu0 %v3399
        %5002 = vmatpush.bf16.msra.mxu0 %v3383
        %5003 = vmatpush.bf16.msra.mxu0 %v3367
        %5004 = vmatpush.bf16.msra.mxu0 %v3351
        %5005 = vmatpush.bf16.msra.mxu0 %v3335
        %5006 = vmatpush.bf16.msra.mxu0 %v3319
        %5007 = vmatmul.bf16.gmra.mxu0 %v1090
        %v5008 = vpop.f32.mrf.mxu0
        %v5009 = vadd.f32 %v4995, %v5008
        %v5010 = vpop.f32.mrf.mxu0
        %v5011 = vadd.f32 %v4997, %v5010
        %5012 = vdwg.mxu0
        %5013 = vmatpush.bf16.msra.mxu0 %v3559
        %5014 = vmatpush.bf16.msra.mxu0 %v3543
        %5015 = vmatpush.bf16.msra.mxu0 %v3527
        %5016 = vmatpush.bf16.msra.mxu0 %v3511
        %5017 = vmatpush.bf16.msra.mxu0 %v3495
        %5018 = vmatpush.bf16.msra.mxu0 %v3479
        %5019 = vmatpush.bf16.msra.mxu0 %v3463
        %5020 = vmatpush.bf16.msra.mxu0 %v3447
        %5021 = vmatmul.bf16.gmra.mxu0 %v1091
        %v5022 = vpop.f32.mrf.mxu0
        %v5023 = vadd.f32 %v5009, %v5022
        %v5024 = vpop.f32.mrf.mxu0
        %v5025 = vadd.f32 %v5011, %v5024
        %5026 = vdwg.mxu0
        %5027 = vmatpush.bf16.msra.mxu0 %v3687
        %5028 = vmatpush.bf16.msra.mxu0 %v3671
        %5029 = vmatpush.bf16.msra.mxu0 %v3655
        %5030 = vmatpush.bf16.msra.mxu0 %v3639
        %5031 = vmatpush.bf16.msra.mxu0 %v3623
        %5032 = vmatpush.bf16.msra.mxu0 %v3607
        %5033 = vmatpush.bf16.msra.mxu0 %v3591
        %5034 = vmatpush.bf16.msra.mxu0 %v3575
        %5035 = vmatmul.bf16.gmra.mxu0 %v1092
        %v5036 = vpop.f32.mrf.mxu0
        %v5037 = vadd.f32 %v5023, %v5036
        %v5038 = vpop.f32.mrf.mxu0
        %v5039 = vadd.f32 %v5025, %v5038
        %5040 = vdwg.mxu0
        %5041 = vmatpush.bf16.msra.mxu0 %v3304
        %5042 = vmatpush.bf16.msra.mxu0 %v3288
        %5043 = vmatpush.bf16.msra.mxu0 %v3272
        %5044 = vmatpush.bf16.msra.mxu0 %v3256
        %5045 = vmatpush.bf16.msra.mxu0 %v3240
        %5046 = vmatpush.bf16.msra.mxu0 %v3224
        %5047 = vmatpush.bf16.msra.mxu0 %v3208
        %5048 = vmatpush.bf16.msra.mxu0 %v3192
        %5049 = vmatmul.bf16.gmra.mxu0 %v1089
        %v5050 = vpop.f32.mrf.mxu0
        %v5051 = vadd.f32 %v1624, %v5050
        %v5052 = vpop.f32.mrf.mxu0
        %v5053 = vadd.f32 %v1624, %v5052
        %5054 = vdwg.mxu0
        %5055 = vmatpush.bf16.msra.mxu0 %v3432
        %5056 = vmatpush.bf16.msra.mxu0 %v3416
        %5057 = vmatpush.bf16.msra.mxu0 %v3400
        %5058 = vmatpush.bf16.msra.mxu0 %v3384
        %5059 = vmatpush.bf16.msra.mxu0 %v3368
        %5060 = vmatpush.bf16.msra.mxu0 %v3352
        %5061 = vmatpush.bf16.msra.mxu0 %v3336
        %5062 = vmatpush.bf16.msra.mxu0 %v3320
        %5063 = vmatmul.bf16.gmra.mxu0 %v1090
        %v5064 = vpop.f32.mrf.mxu0
        %v5065 = vadd.f32 %v5051, %v5064
        %v5066 = vpop.f32.mrf.mxu0
        %v5067 = vadd.f32 %v5053, %v5066
        %5068 = vdwg.mxu0
        %5069 = vmatpush.bf16.msra.mxu0 %v3560
        %5070 = vmatpush.bf16.msra.mxu0 %v3544
        %5071 = vmatpush.bf16.msra.mxu0 %v3528
        %5072 = vmatpush.bf16.msra.mxu0 %v3512
        %5073 = vmatpush.bf16.msra.mxu0 %v3496
        %5074 = vmatpush.bf16.msra.mxu0 %v3480
        %5075 = vmatpush.bf16.msra.mxu0 %v3464
        %5076 = vmatpush.bf16.msra.mxu0 %v3448
        %5077 = vmatmul.bf16.gmra.mxu0 %v1091
        %v5078 = vpop.f32.mrf.mxu0
        %v5079 = vadd.f32 %v5065, %v5078
        %v5080 = vpop.f32.mrf.mxu0
        %v5081 = vadd.f32 %v5067, %v5080
        %5082 = vdwg.mxu0
        %5083 = vmatpush.bf16.msra.mxu0 %v3688
        %5084 = vmatpush.bf16.msra.mxu0 %v3672
        %5085 = vmatpush.bf16.msra.mxu0 %v3656
        %5086 = vmatpush.bf16.msra.mxu0 %v3640
        %5087 = vmatpush.bf16.msra.mxu0 %v3624
        %5088 = vmatpush.bf16.msra.mxu0 %v3608
        %5089 = vmatpush.bf16.msra.mxu0 %v3592
        %5090 = vmatpush.bf16.msra.mxu0 %v3576
        %5091 = vmatmul.bf16.gmra.mxu0 %v1092
        %v5092 = vpop.f32.mrf.mxu0
        %v5093 = vadd.f32 %v5079, %v5092
        %v5094 = vpop.f32.mrf.mxu0
        %v5095 = vadd.f32 %v5081, %v5094
        %5096 = vdwg.mxu0
        %v5097 = vtanh.pop %v4253
        %v5098 = vtanh.pop %v4309
        %v5099 = vtanh.pop %v4365
        %v5100 = vtanh.pop %v4421
        %v5101 = vtanh.pop %v4477
        %v5102 = vtanh.pop %v4533
        %v5103 = vtanh.pop %v4589
        %v5104 = vtanh.pop %v4645
        %v5105 = vtanh.pop %v4701
        %v5106 = vtanh.pop %v4757
        %v5107 = vtanh.pop %v4813
        %v5108 = vtanh.pop %v4869
        %v5109 = vtanh.pop %v4925
        %v5110 = vtanh.pop %v4981
        %v5111 = vtanh.pop %v5037
        %v5112 = vtanh.pop %v5093
        %v5113 = vtanh.pop %v4255
        %v5114 = vtanh.pop %v4311
        %v5115 = vtanh.pop %v4367
        %v5116 = vtanh.pop %v4423
        %v5117 = vtanh.pop %v4479
        %v5118 = vtanh.pop %v4535
        %v5119 = vtanh.pop %v4591
        %v5120 = vtanh.pop %v4647
        %v5121 = vtanh.pop %v4703
        %v5122 = vtanh.pop %v4759
        %v5123 = vtanh.pop %v4815
        %v5124 = vtanh.pop %v4871
        %v5125 = vtanh.pop %v4927
        %v5126 = vtanh.pop %v4983
        %v5127 = vtanh.pop %v5039
        %v5128 = vtanh.pop %v5095
        %5129 = vst [vmem:[%s420] sm:$0xff] %v5097
        %5130 = vst [vmem:[%s420 + $0x8] sm:$0xff] %v5098
        %5131 = vst [vmem:[%s420 + $0x10] sm:$0xff] %v5099
        %5132 = vst [vmem:[%s420 + $0x18] sm:$0xff] %v5100
        %5133 = vst [vmem:[%s420 + $0x20] sm:$0xff] %v5101
        %5134 = vst [vmem:[%s420 + $0x28] sm:$0xff] %v5102
        %5135 = vst [vmem:[%s420 + $0x30] sm:$0xff] %v5103
        %5136 = vst [vmem:[%s420 + $0x38] sm:$0xff] %v5104
        %5137 = vst [vmem:[%s420 + $0x40] sm:$0xff] %v5105
        %5138 = vst [vmem:[%s420 + $0x48] sm:$0xff] %v5106
        %5139 = vst [vmem:[%s420 + $0x50] sm:$0xff] %v5107
        %5140 = vst [vmem:[%s420 + $0x58] sm:$0xff] %v5108
        %5141 = vst [vmem:[%s420 + $0x60] sm:$0xff] %v5109
        %5142 = vst [vmem:[%s420 + $0x68] sm:$0xff] %v5110
        %5143 = vst [vmem:[%s420 + $0x70] sm:$0xff] %v5111
        %5144 = vst [vmem:[%s420 + $0x78] sm:$0xff] %v5112
        %5145 = vst [vmem:[%s420 + $0x80] sm:$0xff] %v5113
        %5146 = vst [vmem:[%s420 + $0x88] sm:$0xff] %v5114
        %5147 = vst [vmem:[%s420 + $0x90] sm:$0xff] %v5115
        %5148 = vst [vmem:[%s420 + $0x98] sm:$0xff] %v5116
        %5149 = vst [vmem:[%s420 + $0xa0] sm:$0xff] %v5117
        %5150 = vst [vmem:[%s420 + $0xa8] sm:$0xff] %v5118
        %5151 = vst [vmem:[%s420 + $0xb0] sm:$0xff] %v5119
        %5152 = vst [vmem:[%s420 + $0xb8] sm:$0xff] %v5120
        %5153 = vst [vmem:[%s420 + $0xc0] sm:$0xff] %v5121
        %5154 = vst [vmem:[%s420 + $0xc8] sm:$0xff] %v5122
        %5155 = vst [vmem:[%s420 + $0xd0] sm:$0xff] %v5123
        %5156 = vst [vmem:[%s420 + $0xd8] sm:$0xff] %v5124
        %5157 = vst [vmem:[%s420 + $0xe0] sm:$0xff] %v5125
        %5158 = vst [vmem:[%s420 + $0xe8] sm:$0xff] %v5126
        %5159 = vst [vmem:[%s420 + $0xf0] sm:$0xff] %v5127
        %5160 = vst [vmem:[%s420 + $0xf8] sm:$0xff] %v5128
        %s5161 = sand.u32 %s205, 1
        %s5162 = sand.u32 %s205, 1
        %s5163 = smul.addr %s5162, 256
        %s5164 = scalar_lea.vmem [#allocation11], %s5163
        // Predicated region
        $region73: #{generator_forward.1} parent=47 // pred_check
          %p5165 = pneg %p215
        $region74: #{generator_forward.1} parent=47 // pred_check_branch
          %5167 = sbr.rel (%p5165) target = $region76
        $region75: #{generator_forward.1} parent=47 // pred_region
          %s5168 = smul.u32 2, %s26
          %s5169 = smul.u32 16, %s25
          %s5170 = smul.addr %s5168, 32
          %s5171 = sadd.s32 %s5169, %s5170
          %s5172 = smul.addr %s5171, 8
          %s5173 = scalar_lea.vmem %s7, %s5172
          // Predicated region
          $region77: #{generator_forward.1} parent=75 // pred_check
            _
          $region78: #{generator_forward.1} parent=75 // pred_check_branch
            %5175 = sbr.rel (0) target = $region80
          $region79: #{generator_forward.1} parent=75 // pred_region
            // Predicated region
            $region81: #{generator_forward.1} parent=79 // pred_check
              _
            $region82: #{generator_forward.1} parent=79 // pred_check_branch
              %5177 = sbr.rel (0) target = $region84
            $region83: #{generator_forward.1} parent=79 // pred_region
              loop: start=0, step=1, limit=1
              $region85: #{generator_forward.1} parent=83 // loop_pre_header
                _
              $region86: #{generator_forward.1} parent=83 // loop_header
                %s5179 = sphi 0, %s5183
                %p5180 = scmp.ge.s32.totalorder %s5179, 1
                %s5184 = sphi %s5164, %s5164
                %s5185 = sphi %s5173, %s5173
              $region87: #{generator_forward.1} parent=83 // loop_header_branch
                %5182 = sbr.rel (%p5180) target = $region91
              $region88: #{generator_forward.1} parent=83 // loop_body
                %v5186 = vld [vmem:[%s5184] sm:$0xff]
                %5187 = vst [vmem:[%s5185] sm:$0xff] %v5186
                %v5188 = vld [vmem:[%s5184 + $0x8] sm:$0xff]
                %5189 = vst [vmem:[%s5185 + $0x8] sm:$0xff] %v5188
                %v5190 = vld [vmem:[%s5184 + $0x10] sm:$0xff]
                %5191 = vst [vmem:[%s5185 + $0x10] sm:$0xff] %v5190
                %v5192 = vld [vmem:[%s5184 + $0x18] sm:$0xff]
                %5193 = vst [vmem:[%s5185 + $0x18] sm:$0xff] %v5192
                %v5194 = vld [vmem:[%s5184 + $0x20] sm:$0xff]
                %5195 = vst [vmem:[%s5185 + $0x20] sm:$0xff] %v5194
                %v5196 = vld [vmem:[%s5184 + $0x28] sm:$0xff]
                %5197 = vst [vmem:[%s5185 + $0x28] sm:$0xff] %v5196
                %v5198 = vld [vmem:[%s5184 + $0x30] sm:$0xff]
                %5199 = vst [vmem:[%s5185 + $0x30] sm:$0xff] %v5198
                %v5200 = vld [vmem:[%s5184 + $0x38] sm:$0xff]
                %5201 = vst [vmem:[%s5185 + $0x38] sm:$0xff] %v5200
                %v5202 = vld [vmem:[%s5184 + $0x40] sm:$0xff]
                %5203 = vst [vmem:[%s5185 + $0x40] sm:$0xff] %v5202
                %v5204 = vld [vmem:[%s5184 + $0x48] sm:$0xff]
                %5205 = vst [vmem:[%s5185 + $0x48] sm:$0xff] %v5204
                %v5206 = vld [vmem:[%s5184 + $0x50] sm:$0xff]
                %5207 = vst [vmem:[%s5185 + $0x50] sm:$0xff] %v5206
                %v5208 = vld [vmem:[%s5184 + $0x58] sm:$0xff]
                %5209 = vst [vmem:[%s5185 + $0x58] sm:$0xff] %v5208
                %v5210 = vld [vmem:[%s5184 + $0x60] sm:$0xff]
                %5211 = vst [vmem:[%s5185 + $0x60] sm:$0xff] %v5210
                %v5212 = vld [vmem:[%s5184 + $0x68] sm:$0xff]
                %5213 = vst [vmem:[%s5185 + $0x68] sm:$0xff] %v5212
                %v5214 = vld [vmem:[%s5184 + $0x70] sm:$0xff]
                %5215 = vst [vmem:[%s5185 + $0x70] sm:$0xff] %v5214
                %v5216 = vld [vmem:[%s5184 + $0x78] sm:$0xff]
                %5217 = vst [vmem:[%s5185 + $0x78] sm:$0xff] %v5216
                %v5218 = vld [vmem:[%s5184 + $0x80] sm:$0xff]
                %5219 = vst [vmem:[%s5185 + $0x100] sm:$0xff] %v5218
                %v5220 = vld [vmem:[%s5184 + $0x88] sm:$0xff]
                %5221 = vst [vmem:[%s5185 + $0x108] sm:$0xff] %v5220
                %v5222 = vld [vmem:[%s5184 + $0x90] sm:$0xff]
                %5223 = vst [vmem:[%s5185 + $0x110] sm:$0xff] %v5222
                %v5224 = vld [vmem:[%s5184 + $0x98] sm:$0xff]
                %5225 = vst [vmem:[%s5185 + $0x118] sm:$0xff] %v5224
                %v5226 = vld [vmem:[%s5184 + $0xa0] sm:$0xff]
                %5227 = vst [vmem:[%s5185 + $0x120] sm:$0xff] %v5226
                %v5228 = vld [vmem:[%s5184 + $0xa8] sm:$0xff]
                %5229 = vst [vmem:[%s5185 + $0x128] sm:$0xff] %v5228
                %v5230 = vld [vmem:[%s5184 + $0xb0] sm:$0xff]
                %5231 = vst [vmem:[%s5185 + $0x130] sm:$0xff] %v5230
                %v5232 = vld [vmem:[%s5184 + $0xb8] sm:$0xff]
                %5233 = vst [vmem:[%s5185 + $0x138] sm:$0xff] %v5232
                %v5234 = vld [vmem:[%s5184 + $0xc0] sm:$0xff]
                %5235 = vst [vmem:[%s5185 + $0x140] sm:$0xff] %v5234
                %v5236 = vld [vmem:[%s5184 + $0xc8] sm:$0xff]
                %5237 = vst [vmem:[%s5185 + $0x148] sm:$0xff] %v5236
                %v5238 = vld [vmem:[%s5184 + $0xd0] sm:$0xff]
                %5239 = vst [vmem:[%s5185 + $0x150] sm:$0xff] %v5238
                %v5240 = vld [vmem:[%s5184 + $0xd8] sm:$0xff]
                %5241 = vst [vmem:[%s5185 + $0x158] sm:$0xff] %v5240
                %v5242 = vld [vmem:[%s5184 + $0xe0] sm:$0xff]
                %5243 = vst [vmem:[%s5185 + $0x160] sm:$0xff] %v5242
                %v5244 = vld [vmem:[%s5184 + $0xe8] sm:$0xff]
                %5245 = vst [vmem:[%s5185 + $0x168] sm:$0xff] %v5244
                %v5246 = vld [vmem:[%s5184 + $0xf0] sm:$0xff]
                %5247 = vst [vmem:[%s5185 + $0x170] sm:$0xff] %v5246
                %v5248 = vld [vmem:[%s5184 + $0xf8] sm:$0xff]
                %5249 = vst [vmem:[%s5185 + $0x178] sm:$0xff] %v5248
              $region89: #{generator_forward.1} parent=83 // loop_footer
                %s5183 = sadd.s32 1, %s5179
              $region90: #{generator_forward.1} parent=83 // loop_footer_branch
                %5178 = sbr.rel target = $region86
              $region91: #{generator_forward.1} parent=83 // loop_exit
                _
            $region84: #{generator_forward.1} parent=79 // pred_fallthru
              _
            // Predicated region
            $region92: #{generator_forward.1} parent=79 // pred_check
              _
            $region93: #{generator_forward.1} parent=79 // pred_check_branch
              %5251 = sbr.rel target = $region95
            $region94: #{generator_forward.1} parent=79 // pred_region
              _
            $region95: #{generator_forward.1} parent=79 // pred_fallthru
              _
          $region80: #{generator_forward.1} parent=75 // pred_fallthru
            _
          %5252 = vnop
        $region76: #{generator_forward.1} parent=47 // pred_fallthru
          _
      $region48: #{generator_forward.1} parent=5 // pred_fallthru
        _
      %p5253 = scmp.le.s32.totalorder 2, %s16
      // Predicated region
      $region96: #{generator_forward.1} parent=5 // pred_check
        %p5254 = pneg %p5253
      $region97: #{generator_forward.1} parent=5 // pred_check_branch
        %5256 = sbr.rel (%p5254) target = $region99
      $region98: #{generator_forward.1} parent=5 // pred_region
        %s5257 = ssub.s32 %s16, 2
        // Predicated region
        $region100: #{generator_forward.1} parent=98 // pred_check
          %p5258 = pneg %p221
        $region101: #{generator_forward.1} parent=98 // pred_check_branch
          %5260 = sbr.rel (%p5258) target = $region103
        $region102: #{generator_forward.1} parent=98 // pred_region
          %s5261 = sand.u32 %s206, 1
          %s5262 = sand.u32 %s206, 1
          %s5263 = smul.addr %s5262, 256
          %s5264 = scalar_lea.vmem [#allocation11], %s5263
        $region103: #{generator_forward.1} parent=98 // pred_fallthru
          _
      $region99: #{generator_forward.1} parent=5 // pred_fallthru
        _
    $region6: #{generator_forward.1} parent=1 // loop_footer
      %s20 = sadd.s32 1, %s16
    $region7: #{generator_forward.1} parent=1 // loop_footer_branch
      %15 = sbr.rel target = $region3
    $region8: #{generator_forward.1} parent=1 // loop_exit
      _
    %5265 = vsyncpa [#allocation3], 1
    %s5266 = scalar_lea.sflag [#allocation3], 1
    %5267 = vsyncpa %s5266, 1
    %5268 = vsyncpa [#allocation5], 1
    %5269 = vsyncpa [#allocation8], 1

</llo_original>
